<compile_context>
chip_gen: v7x
topology: tpu7x:2x2x1
jax: 0.10.0
libtpu: 0.0.40
codegen_flags: <defaults>
</compile_context>

<pallas_src>
import math
import functools

import jax
import jax.numpy as jnp
from jax.experimental import pallas as pl
from jax.experimental.pallas import tpu as pltpu


def _softmax_last(v):
    m = jnp.max(v, axis=-1, keepdims=True)
    e = jnp.exp(v - m)
    return e / jnp.sum(e, axis=-1, keepdims=True)


def _dggc_kernel(x_ref, cw_ref, cb_ref, sup_ref, row_ref, pool_ref, poolt_ref,
                 fc_ref, gw_ref, gb_ref, emb_ref, o_ref, *,
                 nb, n_nodes, t_len, topk, dsteps, inv):
    nt = n_nodes * t_len
    cpb = gw_ref.shape[0]                                  # channels per batch

    # ---- self.conv : one block-diagonal (nb*C, nb*C) @ (nb*C, NT) matmul, bf16 -> f32 ----
    x_c = jnp.dot(cw_ref[...], x_ref[...].astype(jnp.bfloat16),
                  preferred_element_type=jnp.float32) + cb_ref[...]

    # ---- MHSG: supra-Laplacian row scale (1/sqrt(C) folded host-side), relu, softmax
    #      over the flat N*T lane axis -- done for all nb batches on the stacked tile ----
    xw = jnp.maximum(x_c * row_ref[...], 0.0)
    e = jnp.exp(xw - jnp.max(xw, axis=1, keepdims=True))
    adj = e / jnp.sum(e, axis=1, keepdims=True)

    # ---- per-node time pooling as standard (M,K)@(K,N) matmuls (no transposed operands) --
    pool = pool_ref[...]                                                   # (NT, N)
    xnode = jnp.dot(x_c, pool, preferred_element_type=jnp.float32)         # (nb*C, N)
    anode = jnp.dot(adj, pool, preferred_element_type=jnp.float32)         # (nb*C, N)

    # time-block mask of kron(A, I_T), generated in-kernel (replaces HBM dmask constant)
    rt = jax.lax.broadcasted_iota(jnp.int32, (nt, nt), 0) % t_len
    ct = jax.lax.broadcasted_iota(jnp.int32, (nt, nt), 1) % t_len
    tmask = (rt == ct).astype(jnp.bfloat16)                                # (NT, NT)

    for b in range(nb):           # independent batch chains -> scheduler interleaves (ILP)
        sl = slice(b * cpb, (b + 1) * cpb)

        # ---- A_p (AGSG): per-node total of x_c times the summed supports ----------------
        xs = jnp.transpose(jnp.sum(xnode[sl], axis=0, keepdims=True))      # (N, 1)
        a_p = _softmax_last(jnp.maximum(xs * sup_ref[...], 0.0))           # sup pre-scaled

        # ---- A_l (MHSG): gram over channels of the per-node softmax mass ----------------
        an_b = anode[sl]                                                   # (C, N)
        g = jnp.dot(jnp.transpose(an_b), an_b, preferred_element_type=jnp.float32)
        a_l = _softmax_last(jnp.maximum(g * inv, 0.0))

        # ---- fc (Conv2d(2,1,1)) blend + softmax ------------------------------------------
        a_f = _softmax_last(fc_ref[0] * a_p + fc_ref[1] * a_l + fc_ref[2])

        # ---- top-k mask via strict-greater rank; 4 independent partial accumulators ------
        parts = []
        for j0 in range(0, n_nodes, 4):
            acc = None
            for j in range(j0, min(j0 + 4, n_nodes)):
                cmp = (a_f[:, j:j + 1] > a_f).astype(jnp.float32)
                acc = cmp if acc is None else acc + cmp
            parts.append(acc)
        while len(parts) > 1:
            parts = [parts[i] + parts[i + 1] if i + 1 < len(parts) else parts[i]
                     for i in range(0, len(parts), 2)]
        # keeps entries with < k strictly-greater row-mates (== torch.topk unless ties)
        a_m = jnp.where(parts[0] < float(topk), a_f, 0.0)

        # ---- kron(A_m, I_T): lane-expand via P^T, sublane repeat, in-kernel time mask ----
        r1 = jnp.dot(a_m, poolt_ref[...], preferred_element_type=jnp.float32)   # (N, NT)
        kmat = (jnp.broadcast_to(r1[:, None, :], (n_nodes, t_len, nt))
                .reshape(nt, nt).astype(jnp.bfloat16) * tmask)                  # (NT, NT)

        # ---- diffusion + conv_gcn, accumulated per step (no (D*C, NT) concatenate) -------
        xb16 = x_c[sl].astype(jnp.bfloat16)
        y = None
        for d in range(dsteps):
            x_new = jnp.dot(xb16, kmat, preferred_element_type=jnp.float32)     # (C, NT)
            xb16 = x_new.astype(jnp.bfloat16)
            contrib = jnp.dot(gw_ref[:, d * cpb:(d + 1) * cpb], xb16,
                              preferred_element_type=jnp.float32)
            y = contrib if y is None else y + contrib

        # TODO(synk): nn.Dropout(0.1) implemented as eval-mode identity (no stochastic drop).
        o_ref[sl, :] = (y + gb_ref[...]) * emb_ref[...] + x_ref[sl, :]


def _single_tensorcore_chip():
    """True on chips where a 'parallel' grid axis cannot split across TensorCores."""
    try:
        kind = jax.devices()[0].device_kind.lower()
    except Exception:
        return True
    # v4 / v5p / v7x expose 2 TensorCores per chip to a single JAX device.
    return not (("v7" in kind) or ("v4" in kind) or ("v5p" in kind))


def dggc_forward(x, params, *, alph=0.0, gama=0.8, diffusion_step=1):
    B, C, N, T = x.shape
    NT = N * T
    k = int(N * gama)
    inv = 1.0 / math.sqrt(C)
    D = diffusion_step

    # ---- AGSG parameter-only precompute (tiny, plain-JAX glue) ----
    memory = params["memory"]                                     # (C, N)
    s0 = jnp.maximum(memory.T @ memory, 0.0)
    eye = jnp.eye(N, dtype=jnp.float32)
    s0 = jnp.where(eye == 1.0, 0.1, s0)
    s_w = jax.nn.softmax(s0, axis=1)

    def _power_body(_, carry):                                    # I + S_w + ... + S_w^N
        p, acc = carry
        p = s_w @ p
        return p, acc + p
    _, sup_sum = jax.lax.fori_loop(0, N - 1, _power_body, (s_w, eye + s_w))
    sup_scaled = sup_sum * inv                                    # fold 1/sqrt(C)

    # MHSG supra-Laplacian row sums in the reference's flat order (row r -> block r//N,
    # node r%N), applied to x's flat index r = n*T + t exactly as the PyTorch code does.
    # (Bootstrap_num only contributes its shape T; np.random.choice has no output effect.)
    sw_rowsum = jnp.sum(s_w, axis=1)                              # (N,), == 1 per row
    r = jnp.arange(NT)
    rowsum = sw_rowsum[r % N] + alph * (T - 1 - (r // N)).astype(jnp.float32)
    rowsum_scaled = (rowsum * inv).reshape(1, NT)                 # fold 1/sqrt(C)

    # Constant pooling matrices: per-node time sums and the kron lane expansion become
    # plain (M,K)@(K,N) matmuls inside the kernel (no in-kernel transposed operands).
    pool = (jnp.arange(NT)[:, None] // T == jnp.arange(N)[None, :]).astype(jnp.float32)
    poolt = pool.T

    # Batch fusion: fuse pairs of batches on single-TC chips, keep per-batch grid steps
    # (split across cores by "parallel" semantics) on megacore-style chips.
    nb = 2 if (B % 2 == 0 and B >= 2 and _single_tensorcore_chip()) else 1
    grid = (B // nb,)

    cw_blk = jnp.kron(jnp.eye(nb, dtype=jnp.float32),
                      params["conv_w"]).astype(jnp.bfloat16)      # block-diag conv weight
    cb_blk = jnp.tile(params["conv_b"].reshape(C, 1), (nb, 1))
    gw = params["gcn_w"].astype(jnp.bfloat16)
    gcn_b = params["gcn_b"].reshape(C, 1)
    emb2 = params["emb"].reshape(C, NT)
    fc_params = jnp.concatenate([params["fc_w"], params["fc_b"]]).astype(jnp.float32)

    x2 = x.reshape(B * C, NT)                                     # contiguous view, free

    kernel = functools.partial(_dggc_kernel, nb=nb, n_nodes=N, t_len=T,
                               topk=k, dsteps=D, inv=inv)

    flops = B * (2 * C * C * NT + 4 * C * NT * N + 2 * N * N * C + 2 * N * N * NT
                 + D * 2 * C * NT * NT + D * 2 * C * C * NT)
    transcendentals = B * (C * NT + 3 * N * N)
    bytes_accessed = 4 * (2 * B * C * NT + 2 * NT * N + C * NT + NT + N * N + 2 * C + 3) \
        + 2 * (nb * C * nb * C + C * D * C)

    out = pl.pallas_call(
        kernel,
        out_shape=jax.ShapeDtypeStruct((B * C, NT), jnp.float32),
        grid=grid,
        in_specs=[
            pl.BlockSpec((nb * C, NT), lambda i: (i, 0)),              # x (nb batches/step)
            pl.BlockSpec((nb * C, nb * C), lambda i: (0, 0)),          # conv_w block-diag
            pl.BlockSpec((nb * C, 1), lambda i: (0, 0)),               # conv_b
            pl.BlockSpec((N, N), lambda i: (0, 0)),                    # sum_k supports / sqrt(C)
            pl.BlockSpec((1, NT), lambda i: (0, 0)),                   # supra row sums / sqrt(C)
            pl.BlockSpec((NT, N), lambda i: (0, 0)),                   # pooling P
            pl.BlockSpec((N, NT), lambda i: (0, 0)),                   # P^T
            pl.BlockSpec(memory_space=pltpu.MemorySpace.SMEM),         # fc (w0, w1, bias)
            pl.BlockSpec((C, D * C), lambda i: (0, 0)),                # gcn_w
            pl.BlockSpec((C, 1), lambda i: (0, 0)),                    # gcn_b
            pl.BlockSpec((C, NT), lambda i: (0, 0)),                   # emb
        ],
        out_specs=pl.BlockSpec((nb * C, NT), lambda i: (i, 0)),
        compiler_params=pltpu.CompilerParams(dimension_semantics=("parallel",)),
        cost_estimate=pl.CostEstimate(flops=flops, transcendentals=transcendentals,
                                      bytes_accessed=int(bytes_accessed)),
    )(x2, cw_blk, cb_blk, sup_scaled, rowsum_scaled, pool, poolt,
      fc_params, gw, gcn_b, emb2)
    return out.reshape(B, C, N, T)


# ----------------------------------------------------------------------------
# Deterministic parameter init (synthetic, matches module __init__ shapes)
# ----------------------------------------------------------------------------
def init_params(key, C, N, T, diffusion_step):
    ks = jax.random.split(key, 8)
    scale = 1.0 / math.sqrt(C)
    return dict(
        conv_w=jax.random.normal(ks[0], (C, C), jnp.float32) * scale,            # Conv2d(C,C,1)
        conv_b=jax.random.normal(ks[1], (C,), jnp.float32) * 0.01,
        memory=jax.random.normal(ks[2], (C, N), jnp.float32)
        * math.sqrt(2.0 / (C + N)),                                              # xavier-like
        fc_w=jax.random.normal(ks[3], (2,), jnp.float32) * 0.5,                  # Conv2d(2,1,1)
        fc_b=jax.random.normal(ks[4], (1,), jnp.float32) * 0.01,
        gcn_w=jax.random.normal(ks[5], (C, diffusion_step * C), jnp.float32) * scale,
        gcn_b=jax.random.normal(ks[6], (C,), jnp.float32) * 0.01,
        emb=jax.random.normal(ks[7], (1, C, N, T), jnp.float32),                 # self.emb
    )


if __name__ == "__main__":
    B, C, N, T = 2, 32, 16, 8          # batch, channels, num_nodes, time steps
    key = jax.random.PRNGKey(0)
    kx, kp = jax.random.split(key)
    x = jax.random.normal(kx, (B, C, N, T), jnp.float32)
    params = init_params(kp, C, N, T, diffusion_step=1)

    fwd = jax.jit(functools.partial(dggc_forward, alph=0.0, gama=0.8, diffusion_step=1))
    out = fwd(x, params)
    jax.block_until_ready(out)
    assert out.shape == (B, C, N, T) and out.dtype == jnp.float32
    assert bool(jnp.isfinite(out).all())
    print("KERNEL_OK")
</pallas_src>

<mosaic_0001>
module attributes {stable_mosaic.version = 11 : i64} {
  func.func @_dggc_kernel(%arg0: i32, %arg1: memref<64x128xf32, #tpu.memory_space<vmem>>, %arg2: memref<64x64xbf16, #tpu.memory_space<vmem>>, %arg3: memref<64x1xf32, #tpu.memory_space<vmem>>, %arg4: memref<16x16xf32, #tpu.memory_space<vmem>>, %arg5: memref<1x128xf32, #tpu.memory_space<vmem>>, %arg6: memref<128x16xf32, #tpu.memory_space<vmem>>, %arg7: memref<16x128xf32, #tpu.memory_space<vmem>>, %arg8: memref<3xf32, #tpu.memory_space<smem>>, %arg9: memref<32x32xbf16, #tpu.memory_space<vmem>>, %arg10: memref<32x1xf32, #tpu.memory_space<vmem>>, %arg11: memref<32x128xf32, #tpu.memory_space<vmem>>, %arg12: memref<64x128xf32, #tpu.memory_space<vmem>>) attributes {dimension_semantics = [#tpu.dimension_semantics<parallel>], iteration_bounds = array<i64: 1>, scalar_prefetch = 0 : i64, scratch_operands = 0 : i64, tpu.core_type = #tpu.core_type<tc>, window_params = [{transform_indices = @transform_0, window_bounds = array<i64: 64, 128>}, {pipeline_mode = #tpu.pipeline_mode<synchronous>, transform_indices = @transform_1, window_bounds = array<i64: 64, 64>}, {pipeline_mode = #tpu.pipeline_mode<synchronous>, transform_indices = @transform_2, window_bounds = array<i64: 64, 1>}, {pipeline_mode = #tpu.pipeline_mode<synchronous>, transform_indices = @transform_3, window_bounds = array<i64: 16, 16>}, {pipeline_mode = #tpu.pipeline_mode<synchronous>, transform_indices = @transform_4, window_bounds = array<i64: 1, 128>}, {pipeline_mode = #tpu.pipeline_mode<synchronous>, transform_indices = @transform_5, window_bounds = array<i64: 128, 16>}, {pipeline_mode = #tpu.pipeline_mode<synchronous>, transform_indices = @transform_6, window_bounds = array<i64: 16, 128>}, {transform_indices = @transform_7, window_bounds = array<i64: 3>}, {pipeline_mode = #tpu.pipeline_mode<synchronous>, transform_indices = @transform_8, window_bounds = array<i64: 32, 32>}, {pipeline_mode = #tpu.pipeline_mode<synchronous>, transform_indices = @transform_9, window_bounds = array<i64: 32, 1>}, {pipeline_mode = #tpu.pipeline_mode<synchronous>, transform_indices = @transform_10, window_bounds = array<i64: 32, 128>}, {transform_indices = @transform_11, window_bounds = array<i64: 64, 128>}]} {
    %c0 = arith.constant 0 : index
    %c0_0 = arith.constant 0 : index
    %0 = vector.load %arg2[%c0, %c0_0] : memref<64x64xbf16, #tpu.memory_space<vmem>>, vector<64x64xbf16>
    %c0_1 = arith.constant 0 : index
    %c0_2 = arith.constant 0 : index
    %1 = vector.load %arg1[%c0_1, %c0_2] : memref<64x128xf32, #tpu.memory_space<vmem>>, vector<64x128xf32>
    %2 = arith.truncf %1 : vector<64x128xf32> to vector<64x128xbf16>
    %cst = arith.constant dense<0.000000e+00> : vector<64x128xf32>
    %3 = tpu.matmul %0, %2, %cst {dimension_numbers = #tpu.dot_dimension_numbers<[1], [0], [0], [1], [0, 0, 1, 1], [], []>} : vector<64x64xbf16>, vector<64x128xbf16>, vector<64x128xf32> -> vector<64x128xf32>
    %c0_3 = arith.constant 0 : index
    %c0_4 = arith.constant 0 : index
    %4 = vector.load %arg3[%c0_3, %c0_4] : memref<64x1xf32, #tpu.memory_space<vmem>>, vector<64x1xf32>
    %5 = vector.broadcast %4 : vector<64x1xf32> to vector<64x128xf32>
    %6 = arith.addf %3, %5 : vector<64x128xf32>
    %c0_5 = arith.constant 0 : index
    %c0_6 = arith.constant 0 : index
    %7 = vector.load %arg5[%c0_5, %c0_6] : memref<1x128xf32, #tpu.memory_space<vmem>>, vector<1x128xf32>
    %8 = vector.broadcast %7 : vector<1x128xf32> to vector<64x128xf32>
    %9 = arith.mulf %6, %8 : vector<64x128xf32>
    %cst_7 = arith.constant 0.000000e+00 : f32
    %10 = vector.broadcast %cst_7 : f32 to vector<64x128xf32>
    %11 = arith.maximumf %9, %10 : vector<64x128xf32>
    %cst_8 = arith.constant dense<0xFF800000> : vector<64xf32>
    %12 = vector.multi_reduction <maximumf>, %11, %cst_8 [1] : vector<64x128xf32> to vector<64xf32>
    %13 = vector.shape_cast %12 : vector<64xf32> to vector<64x1xf32>
    %14 = vector.broadcast %13 : vector<64x1xf32> to vector<64x128xf32>
    %15 = arith.subf %11, %14 : vector<64x128xf32>
    %16 = math.exp %15 : vector<64x128xf32>
    %cst_9 = arith.constant dense<0.000000e+00> : vector<64xf32>
    %17 = vector.multi_reduction <add>, %16, %cst_9 [1] : vector<64x128xf32> to vector<64xf32>
    %18 = vector.shape_cast %17 : vector<64xf32> to vector<64x1xf32>
    %19 = vector.broadcast %18 : vector<64x1xf32> to vector<64x128xf32>
    %20 = arith.divf %16, %19 : vector<64x128xf32>
    %c0_10 = arith.constant 0 : index
    %c0_11 = arith.constant 0 : index
    %21 = vector.load %arg6[%c0_10, %c0_11] : memref<128x16xf32, #tpu.memory_space<vmem>>, vector<128x16xf32>
    %cst_12 = arith.constant dense<0.000000e+00> : vector<64x16xf32>
    %22 = tpu.matmul %6, %21, %cst_12 {dimension_numbers = #tpu.dot_dimension_numbers<[1], [0], [0], [1], [0, 0, 1, 1], [], []>} : vector<64x128xf32>, vector<128x16xf32>, vector<64x16xf32> -> vector<64x16xf32>
    %cst_13 = arith.constant dense<0.000000e+00> : vector<64x16xf32>
    %23 = tpu.matmul %20, %21, %cst_13 {dimension_numbers = #tpu.dot_dimension_numbers<[1], [0], [0], [1], [0, 0, 1, 1], [], []>} : vector<64x128xf32>, vector<128x16xf32>, vector<64x16xf32> -> vector<64x16xf32>
    %24 = tpu.iota {dimensions = array<i32: 0>} : vector<128x128xi32>
    %c8_i32 = arith.constant 8 : i32
    %c0_i32 = arith.constant 0 : i32
    %25 = arith.cmpi eq, %c8_i32, %c0_i32 : i32
    %c1_i32 = arith.constant 1 : i32
    %26 = arith.select %25, %c1_i32, %c8_i32 : i32
    %27 = vector.broadcast %26 : i32 to vector<128x128xi32>
    %28 = arith.remsi %24, %27 : vector<128x128xi32>
    %c0_i32_14 = arith.constant 0 : i32
    %29 = vector.broadcast %c0_i32_14 : i32 to vector<128x128xi32>
    %30 = arith.cmpi ne, %28, %29 : vector<128x128xi32>
    %c0_i32_15 = arith.constant 0 : i32
    %31 = vector.broadcast %c0_i32_15 : i32 to vector<128x128xi32>
    %32 = arith.cmpi slt, %28, %31 : vector<128x128xi32>
    %c0_i32_16 = arith.constant 0 : i32
    %33 = arith.cmpi slt, %26, %c0_i32_16 : i32
    %34 = vector.broadcast %33 : i1 to vector<128x128xi1>
    %35 = vector.broadcast %34 : vector<128x128xi1> to vector<128x128xi1>
    %36 = arith.xori %32, %35 : vector<128x128xi1>
    %37 = arith.andi %36, %30 : vector<128x128xi1>
    %38 = vector.broadcast %26 : i32 to vector<128x128xi32>
    %39 = arith.addi %28, %38 : vector<128x128xi32>
    %40 = arith.select %37, %39, %28 : vector<128x128xi1>, vector<128x128xi32>
    %41 = tpu.iota {dimensions = array<i32: 1>} : vector<128x128xi32>
    %c8_i32_17 = arith.constant 8 : i32
    %c0_i32_18 = arith.constant 0 : i32
    %42 = arith.cmpi eq, %c8_i32_17, %c0_i32_18 : i32
    %c1_i32_19 = arith.constant 1 : i32
    %43 = arith.select %42, %c1_i32_19, %c8_i32_17 : i32
    %44 = vector.broadcast %43 : i32 to vector<128x128xi32>
    %45 = arith.remsi %41, %44 : vector<128x128xi32>
    %c0_i32_20 = arith.constant 0 : i32
    %46 = vector.broadcast %c0_i32_20 : i32 to vector<128x128xi32>
    %47 = arith.cmpi ne, %45, %46 : vector<128x128xi32>
    %c0_i32_21 = arith.constant 0 : i32
    %48 = vector.broadcast %c0_i32_21 : i32 to vector<128x128xi32>
    %49 = arith.cmpi slt, %45, %48 : vector<128x128xi32>
    %c0_i32_22 = arith.constant 0 : i32
    %50 = arith.cmpi slt, %43, %c0_i32_22 : i32
    %51 = vector.broadcast %50 : i1 to vector<128x128xi1>
    %52 = vector.broadcast %51 : vector<128x128xi1> to vector<128x128xi1>
    %53 = arith.xori %49, %52 : vector<128x128xi1>
    %54 = arith.andi %53, %47 : vector<128x128xi1>
    %55 = vector.broadcast %43 : i32 to vector<128x128xi32>
    %56 = arith.addi %45, %55 : vector<128x128xi32>
    %57 = arith.select %54, %56, %45 : vector<128x128xi1>, vector<128x128xi32>
    %58 = arith.cmpi eq, %40, %57 : vector<128x128xi32>
    %59 = arith.extui %58 : vector<128x128xi1> to vector<128x128xi32>
    %60 = arith.sitofp %59 : vector<128x128xi32> to vector<128x128xf32>
    %61 = arith.truncf %60 : vector<128x128xf32> to vector<128x128xbf16>
    %62 = vector.extract_strided_slice %22 {offsets = [0, 0], sizes = [32, 16], strides = [1, 1]} : vector<64x16xf32> to vector<32x16xf32>
    %cst_23 = arith.constant dense<0.000000e+00> : vector<16xf32>
    %63 = vector.multi_reduction <add>, %62, %cst_23 [0] : vector<32x16xf32> to vector<16xf32>
    %64 = vector.shape_cast %63 : vector<16xf32> to vector<1x16xf32>
    %65 = tpu.transpose %64, [1, 0] : vector<1x16xf32> -> vector<16x1xf32>
    %c0_24 = arith.constant 0 : index
    %c0_25 = arith.constant 0 : index
    %66 = vector.load %arg4[%c0_24, %c0_25] : memref<16x16xf32, #tpu.memory_space<vmem>>, vector<16x16xf32>
    %67 = vector.broadcast %65 : vector<16x1xf32> to vector<16x16xf32>
    %68 = arith.mulf %67, %66 : vector<16x16xf32>
    %cst_26 = arith.constant 0.000000e+00 : f32
    %69 = vector.broadcast %cst_26 : f32 to vector<16x16xf32>
    %70 = arith.maximumf %68, %69 : vector<16x16xf32>
    %cst_27 = arith.constant dense<0xFF800000> : vector<16xf32>
    %71 = vector.multi_reduction <maximumf>, %70, %cst_27 [1] : vector<16x16xf32> to vector<16xf32>
    %72 = vector.shape_cast %71 : vector<16xf32> to vector<16x1xf32>
    %73 = vector.broadcast %72 : vector<16x1xf32> to vector<16x16xf32>
    %74 = arith.subf %70, %73 : vector<16x16xf32>
    %75 = math.exp %74 : vector<16x16xf32>
    %cst_28 = arith.constant dense<0.000000e+00> : vector<16xf32>
    %76 = vector.multi_reduction <add>, %75, %cst_28 [1] : vector<16x16xf32> to vector<16xf32>
    %77 = vector.shape_cast %76 : vector<16xf32> to vector<16x1xf32>
    %78 = vector.broadcast %77 : vector<16x1xf32> to vector<16x16xf32>
    %79 = arith.divf %75, %78 : vector<16x16xf32>
    %80 = vector.extract_strided_slice %23 {offsets = [0, 0], sizes = [32, 16], strides = [1, 1]} : vector<64x16xf32> to vector<32x16xf32>
    %81 = tpu.transpose %80, [1, 0] : vector<32x16xf32> -> vector<16x32xf32>
    %cst_29 = arith.constant dense<0.000000e+00> : vector<16x16xf32>
    %82 = tpu.matmul %81, %80, %cst_29 {dimension_numbers = #tpu.dot_dimension_numbers<[1], [0], [0], [1], [0, 0, 1, 1], [], []>} : vector<16x32xf32>, vector<32x16xf32>, vector<16x16xf32> -> vector<16x16xf32>
    %cst_30 = arith.constant 0.176776692 : f32
    %83 = vector.broadcast %cst_30 : f32 to vector<16x16xf32>
    %84 = arith.mulf %82, %83 : vector<16x16xf32>
    %cst_31 = arith.constant 0.000000e+00 : f32
    %85 = vector.broadcast %cst_31 : f32 to vector<16x16xf32>
    %86 = arith.maximumf %84, %85 : vector<16x16xf32>
    %cst_32 = arith.constant dense<0xFF800000> : vector<16xf32>
    %87 = vector.multi_reduction <maximumf>, %86, %cst_32 [1] : vector<16x16xf32> to vector<16xf32>
    %88 = vector.shape_cast %87 : vector<16xf32> to vector<16x1xf32>
    %89 = vector.broadcast %88 : vector<16x1xf32> to vector<16x16xf32>
    %90 = arith.subf %86, %89 : vector<16x16xf32>
    %91 = math.exp %90 : vector<16x16xf32>
    %cst_33 = arith.constant dense<0.000000e+00> : vector<16xf32>
    %92 = vector.multi_reduction <add>, %91, %cst_33 [1] : vector<16x16xf32> to vector<16xf32>
    %93 = vector.shape_cast %92 : vector<16xf32> to vector<16x1xf32>
    %94 = vector.broadcast %93 : vector<16x1xf32> to vector<16x16xf32>
    %95 = arith.divf %91, %94 : vector<16x16xf32>
    %c0_34 = arith.constant 0 : index
    %96 = memref.load %arg8[%c0_34] : memref<3xf32, #tpu.memory_space<smem>>
    %97 = vector.broadcast %96 : f32 to vector<16x16xf32>
    %98 = arith.mulf %97, %79 : vector<16x16xf32>
    %c1 = arith.constant 1 : index
    %99 = memref.load %arg8[%c1] : memref<3xf32, #tpu.memory_space<smem>>
    %100 = vector.broadcast %99 : f32 to vector<16x16xf32>
    %101 = arith.mulf %100, %95 : vector<16x16xf32>
    %102 = arith.addf %98, %101 : vector<16x16xf32>
    %c2 = arith.constant 2 : index
    %103 = memref.load %arg8[%c2] : memref<3xf32, #tpu.memory_space<smem>>
    %104 = vector.broadcast %103 : f32 to vector<16x16xf32>
    %105 = arith.addf %102, %104 : vector<16x16xf32>
    %cst_35 = arith.constant dense<0xFF800000> : vector<16xf32>
    %106 = vector.multi_reduction <maximumf>, %105, %cst_35 [1] : vector<16x16xf32> to vector<16xf32>
    %107 = vector.shape_cast %106 : vector<16xf32> to vector<16x1xf32>
    %108 = vector.broadcast %107 : vector<16x1xf32> to vector<16x16xf32>
    %109 = arith.subf %105, %108 : vector<16x16xf32>
    %110 = math.exp %109 : vector<16x16xf32>
    %cst_36 = arith.constant dense<0.000000e+00> : vector<16xf32>
    %111 = vector.multi_reduction <add>, %110, %cst_36 [1] : vector<16x16xf32> to vector<16xf32>
    %112 = vector.shape_cast %111 : vector<16xf32> to vector<16x1xf32>
    %113 = vector.broadcast %112 : vector<16x1xf32> to vector<16x16xf32>
    %114 = arith.divf %110, %113 : vector<16x16xf32>
    %115 = vector.extract_strided_slice %114 {offsets = [0, 0], sizes = [16, 1], strides = [1, 1]} : vector<16x16xf32> to vector<16x1xf32>
    %116 = vector.broadcast %115 : vector<16x1xf32> to vector<16x16xf32>
    %117 = arith.cmpf ogt, %116, %114 : vector<16x16xf32>
    %118 = arith.extui %117 : vector<16x16xi1> to vector<16x16xi32>
    %119 = arith.sitofp %118 : vector<16x16xi32> to vector<16x16xf32>
    %120 = vector.extract_strided_slice %114 {offsets = [0, 1], sizes = [16, 1], strides = [1, 1]} : vector<16x16xf32> to vector<16x1xf32>
    %121 = vector.broadcast %120 : vector<16x1xf32> to vector<16x16xf32>
    %122 = arith.cmpf ogt, %121, %114 : vector<16x16xf32>
    %123 = arith.extui %122 : vector<16x16xi1> to vector<16x16xi32>
    %124 = arith.sitofp %123 : vector<16x16xi32> to vector<16x16xf32>
    %125 = arith.addf %119, %124 : vector<16x16xf32>
    %126 = vector.extract_strided_slice %114 {offsets = [0, 2], sizes = [16, 1], strides = [1, 1]} : vector<16x16xf32> to vector<16x1xf32>
    %127 = vector.broadcast %126 : vector<16x1xf32> to vector<16x16xf32>
    %128 = arith.cmpf ogt, %127, %114 : vector<16x16xf32>
    %129 = arith.extui %128 : vector<16x16xi1> to vector<16x16xi32>
    %130 = arith.sitofp %129 : vector<16x16xi32> to vector<16x16xf32>
    %131 = arith.addf %125, %130 : vector<16x16xf32>
    %132 = vector.extract_strided_slice %114 {offsets = [0, 3], sizes = [16, 1], strides = [1, 1]} : vector<16x16xf32> to vector<16x1xf32>
    %133 = vector.broadcast %132 : vector<16x1xf32> to vector<16x16xf32>
    %134 = arith.cmpf ogt, %133, %114 : vector<16x16xf32>
    %135 = arith.extui %134 : vector<16x16xi1> to vector<16x16xi32>
    %136 = arith.sitofp %135 : vector<16x16xi32> to vector<16x16xf32>
    %137 = arith.addf %131, %136 : vector<16x16xf32>
    %138 = vector.extract_strided_slice %114 {offsets = [0, 4], sizes = [16, 1], strides = [1, 1]} : vector<16x16xf32> to vector<16x1xf32>
    %139 = vector.broadcast %138 : vector<16x1xf32> to vector<16x16xf32>
    %140 = arith.cmpf ogt, %139, %114 : vector<16x16xf32>
    %141 = arith.extui %140 : vector<16x16xi1> to vector<16x16xi32>
    %142 = arith.sitofp %141 : vector<16x16xi32> to vector<16x16xf32>
    %143 = vector.extract_strided_slice %114 {offsets = [0, 5], sizes = [16, 1], strides = [1, 1]} : vector<16x16xf32> to vector<16x1xf32>
    %144 = vector.broadcast %143 : vector<16x1xf32> to vector<16x16xf32>
    %145 = arith.cmpf ogt, %144, %114 : vector<16x16xf32>
    %146 = arith.extui %145 : vector<16x16xi1> to vector<16x16xi32>
    %147 = arith.sitofp %146 : vector<16x16xi32> to vector<16x16xf32>
    %148 = arith.addf %142, %147 : vector<16x16xf32>
    %149 = vector.extract_strided_slice %114 {offsets = [0, 6], sizes = [16, 1], strides = [1, 1]} : vector<16x16xf32> to vector<16x1xf32>
    %150 = vector.broadcast %149 : vector<16x1xf32> to vector<16x16xf32>
    %151 = arith.cmpf ogt, %150, %114 : vector<16x16xf32>
    %152 = arith.extui %151 : vector<16x16xi1> to vector<16x16xi32>
    %153 = arith.sitofp %152 : vector<16x16xi32> to vector<16x16xf32>
    %154 = arith.addf %148, %153 : vector<16x16xf32>
    %155 = vector.extract_strided_slice %114 {offsets = [0, 7], sizes = [16, 1], strides = [1, 1]} : vector<16x16xf32> to vector<16x1xf32>
    %156 = vector.broadcast %155 : vector<16x1xf32> to vector<16x16xf32>
    %157 = arith.cmpf ogt, %156, %114 : vector<16x16xf32>
    %158 = arith.extui %157 : vector<16x16xi1> to vector<16x16xi32>
    %159 = arith.sitofp %158 : vector<16x16xi32> to vector<16x16xf32>
    %160 = arith.addf %154, %159 : vector<16x16xf32>
    %161 = vector.extract_strided_slice %114 {offsets = [0, 8], sizes = [16, 1], strides = [1, 1]} : vector<16x16xf32> to vector<16x1xf32>
    %162 = vector.broadcast %161 : vector<16x1xf32> to vector<16x16xf32>
    %163 = arith.cmpf ogt, %162, %114 : vector<16x16xf32>
    %164 = arith.extui %163 : vector<16x16xi1> to vector<16x16xi32>
    %165 = arith.sitofp %164 : vector<16x16xi32> to vector<16x16xf32>
    %166 = vector.extract_strided_slice %114 {offsets = [0, 9], sizes = [16, 1], strides = [1, 1]} : vector<16x16xf32> to vector<16x1xf32>
    %167 = vector.broadcast %166 : vector<16x1xf32> to vector<16x16xf32>
    %168 = arith.cmpf ogt, %167, %114 : vector<16x16xf32>
    %169 = arith.extui %168 : vector<16x16xi1> to vector<16x16xi32>
    %170 = arith.sitofp %169 : vector<16x16xi32> to vector<16x16xf32>
    %171 = arith.addf %165, %170 : vector<16x16xf32>
    %172 = vector.extract_strided_slice %114 {offsets = [0, 10], sizes = [16, 1], strides = [1, 1]} : vector<16x16xf32> to vector<16x1xf32>
    %173 = vector.broadcast %172 : vector<16x1xf32> to vector<16x16xf32>
    %174 = arith.cmpf ogt, %173, %114 : vector<16x16xf32>
    %175 = arith.extui %174 : vector<16x16xi1> to vector<16x16xi32>
    %176 = arith.sitofp %175 : vector<16x16xi32> to vector<16x16xf32>
    %177 = arith.addf %171, %176 : vector<16x16xf32>
    %178 = vector.extract_strided_slice %114 {offsets = [0, 11], sizes = [16, 1], strides = [1, 1]} : vector<16x16xf32> to vector<16x1xf32>
    %179 = vector.broadcast %178 : vector<16x1xf32> to vector<16x16xf32>
    %180 = arith.cmpf ogt, %179, %114 : vector<16x16xf32>
    %181 = arith.extui %180 : vector<16x16xi1> to vector<16x16xi32>
    %182 = arith.sitofp %181 : vector<16x16xi32> to vector<16x16xf32>
    %183 = arith.addf %177, %182 : vector<16x16xf32>
    %184 = vector.extract_strided_slice %114 {offsets = [0, 12], sizes = [16, 1], strides = [1, 1]} : vector<16x16xf32> to vector<16x1xf32>
    %185 = vector.broadcast %184 : vector<16x1xf32> to vector<16x16xf32>
    %186 = arith.cmpf ogt, %185, %114 : vector<16x16xf32>
    %187 = arith.extui %186 : vector<16x16xi1> to vector<16x16xi32>
    %188 = arith.sitofp %187 : vector<16x16xi32> to vector<16x16xf32>
    %189 = vector.extract_strided_slice %114 {offsets = [0, 13], sizes = [16, 1], strides = [1, 1]} : vector<16x16xf32> to vector<16x1xf32>
    %190 = vector.broadcast %189 : vector<16x1xf32> to vector<16x16xf32>
    %191 = arith.cmpf ogt, %190, %114 : vector<16x16xf32>
    %192 = arith.extui %191 : vector<16x16xi1> to vector<16x16xi32>
    %193 = arith.sitofp %192 : vector<16x16xi32> to vector<16x16xf32>
    %194 = arith.addf %188, %193 : vector<16x16xf32>
    %195 = vector.extract_strided_slice %114 {offsets = [0, 14], sizes = [16, 1], strides = [1, 1]} : vector<16x16xf32> to vector<16x1xf32>
    %196 = vector.broadcast %195 : vector<16x1xf32> to vector<16x16xf32>
    %197 = arith.cmpf ogt, %196, %114 : vector<16x16xf32>
    %198 = arith.extui %197 : vector<16x16xi1> to vector<16x16xi32>
    %199 = arith.sitofp %198 : vector<16x16xi32> to vector<16x16xf32>
    %200 = arith.addf %194, %199 : vector<16x16xf32>
    %201 = vector.extract_strided_slice %114 {offsets = [0, 15], sizes = [16, 1], strides = [1, 1]} : vector<16x16xf32> to vector<16x1xf32>
    %202 = vector.broadcast %201 : vector<16x1xf32> to vector<16x16xf32>
    %203 = arith.cmpf ogt, %202, %114 : vector<16x16xf32>
    %204 = arith.extui %203 : vector<16x16xi1> to vector<16x16xi32>
    %205 = arith.sitofp %204 : vector<16x16xi32> to vector<16x16xf32>
    %206 = arith.addf %200, %205 : vector<16x16xf32>
    %207 = arith.addf %137, %160 : vector<16x16xf32>
    %208 = arith.addf %183, %206 : vector<16x16xf32>
    %209 = arith.addf %207, %208 : vector<16x16xf32>
    %cst_37 = arith.constant 1.200000e+01 : f32
    %210 = vector.broadcast %cst_37 : f32 to vector<16x16xf32>
    %211 = arith.cmpf olt, %209, %210 : vector<16x16xf32>
    %cst_38 = arith.constant 0.000000e+00 : f32
    %212 = vector.broadcast %cst_38 : f32 to vector<16x16xf32>
    %213 = arith.select %211, %114, %212 : vector<16x16xi1>, vector<16x16xf32>
    %c0_39 = arith.constant 0 : index
    %c0_40 = arith.constant 0 : index
    %214 = vector.load %arg7[%c0_39, %c0_40] : memref<16x128xf32, #tpu.memory_space<vmem>>, vector<16x128xf32>
    %cst_41 = arith.constant dense<0.000000e+00> : vector<16x128xf32>
    %215 = tpu.matmul %213, %214, %cst_41 {dimension_numbers = #tpu.dot_dimension_numbers<[1], [0], [0], [1], [0, 0, 1, 1], [], []>} : vector<16x16xf32>, vector<16x128xf32>, vector<16x128xf32> -> vector<16x128xf32>
    %216 = vector.shape_cast %215 : vector<16x128xf32> to vector<16x1x128xf32>
    %217 = vector.shape_cast %216 : vector<16x1x128xf32> to vector<16x1x128xf32>
    %218 = vector.broadcast %217 : vector<16x1x128xf32> to vector<16x8x128xf32>
    %219 = vector.shape_cast %218 : vector<16x8x128xf32> to vector<128x128xf32>
    %220 = arith.truncf %219 : vector<128x128xf32> to vector<128x128xbf16>
    %221 = arith.mulf %220, %61 : vector<128x128xbf16>
    %222 = vector.extract_strided_slice %6 {offsets = [0, 0], sizes = [32, 128], strides = [1, 1]} : vector<64x128xf32> to vector<32x128xf32>
    %223 = arith.truncf %222 : vector<32x128xf32> to vector<32x128xbf16>
    %cst_42 = arith.constant dense<0.000000e+00> : vector<32x128xf32>
    %224 = tpu.matmul %223, %221, %cst_42 {dimension_numbers = #tpu.dot_dimension_numbers<[1], [0], [0], [1], [0, 0, 1, 1], [], []>} : vector<32x128xbf16>, vector<128x128xbf16>, vector<32x128xf32> -> vector<32x128xf32>
    %225 = arith.truncf %224 : vector<32x128xf32> to vector<32x128xbf16>
    %c0_43 = arith.constant 0 : index
    %c0_44 = arith.constant 0 : index
    %226 = vector.load %arg9[%c0_43, %c0_44] : memref<32x32xbf16, #tpu.memory_space<vmem>>, vector<32x32xbf16>
    %cst_45 = arith.constant dense<0.000000e+00> : vector<32x128xf32>
    %227 = tpu.matmul %226, %225, %cst_45 {dimension_numbers = #tpu.dot_dimension_numbers<[1], [0], [0], [1], [0, 0, 1, 1], [], []>} : vector<32x32xbf16>, vector<32x128xbf16>, vector<32x128xf32> -> vector<32x128xf32>
    %c0_46 = arith.constant 0 : index
    %c0_47 = arith.constant 0 : index
    %228 = vector.load %arg10[%c0_46, %c0_47] : memref<32x1xf32, #tpu.memory_space<vmem>>, vector<32x1xf32>
    %229 = vector.broadcast %228 : vector<32x1xf32> to vector<32x128xf32>
    %230 = arith.addf %227, %229 : vector<32x128xf32>
    %c0_48 = arith.constant 0 : index
    %c0_49 = arith.constant 0 : index
    %231 = vector.load %arg11[%c0_48, %c0_49] : memref<32x128xf32, #tpu.memory_space<vmem>>, vector<32x128xf32>
    %232 = arith.mulf %230, %231 : vector<32x128xf32>
    %c0_50 = arith.constant 0 : index
    %c0_51 = arith.constant 0 : index
    %233 = vector.load %arg1[%c0_50, %c0_51] : memref<64x128xf32, #tpu.memory_space<vmem>>, vector<32x128xf32>
    %234 = arith.addf %232, %233 : vector<32x128xf32>
    %c0_52 = arith.constant 0 : index
    %c0_53 = arith.constant 0 : index
    %235 = vector.load %arg12[%c0_52, %c0_53] : memref<64x128xf32, #tpu.memory_space<vmem>>, vector<32x128xf32>
    tpu.vector_store %arg12[%c0_52, %c0_53], %234 {strides = array<i32>} : memref<64x128xf32, #tpu.memory_space<vmem>>, vector<32x128xf32>,
    %236 = vector.extract_strided_slice %22 {offsets = [32, 0], sizes = [32, 16], strides = [1, 1]} : vector<64x16xf32> to vector<32x16xf32>
    %cst_54 = arith.constant dense<0.000000e+00> : vector<16xf32>
    %237 = vector.multi_reduction <add>, %236, %cst_54 [0] : vector<32x16xf32> to vector<16xf32>
    %238 = vector.shape_cast %237 : vector<16xf32> to vector<1x16xf32>
    %239 = tpu.transpose %238, [1, 0] : vector<1x16xf32> -> vector<16x1xf32>
    %c0_55 = arith.constant 0 : index
    %c0_56 = arith.constant 0 : index
    %240 = vector.load %arg4[%c0_55, %c0_56] : memref<16x16xf32, #tpu.memory_space<vmem>>, vector<16x16xf32>
    %241 = vector.broadcast %239 : vector<16x1xf32> to vector<16x16xf32>
    %242 = arith.mulf %241, %240 : vector<16x16xf32>
    %cst_57 = arith.constant 0.000000e+00 : f32
    %243 = vector.broadcast %cst_57 : f32 to vector<16x16xf32>
    %244 = arith.maximumf %242, %243 : vector<16x16xf32>
    %cst_58 = arith.constant dense<0xFF800000> : vector<16xf32>
    %245 = vector.multi_reduction <maximumf>, %244, %cst_58 [1] : vector<16x16xf32> to vector<16xf32>
    %246 = vector.shape_cast %245 : vector<16xf32> to vector<16x1xf32>
    %247 = vector.broadcast %246 : vector<16x1xf32> to vector<16x16xf32>
    %248 = arith.subf %244, %247 : vector<16x16xf32>
    %249 = math.exp %248 : vector<16x16xf32>
    %cst_59 = arith.constant dense<0.000000e+00> : vector<16xf32>
    %250 = vector.multi_reduction <add>, %249, %cst_59 [1] : vector<16x16xf32> to vector<16xf32>
    %251 = vector.shape_cast %250 : vector<16xf32> to vector<16x1xf32>
    %252 = vector.broadcast %251 : vector<16x1xf32> to vector<16x16xf32>
    %253 = arith.divf %249, %252 : vector<16x16xf32>
    %254 = vector.extract_strided_slice %23 {offsets = [32, 0], sizes = [32, 16], strides = [1, 1]} : vector<64x16xf32> to vector<32x16xf32>
    %255 = tpu.transpose %254, [1, 0] : vector<32x16xf32> -> vector<16x32xf32>
    %cst_60 = arith.constant dense<0.000000e+00> : vector<16x16xf32>
    %256 = tpu.matmul %255, %254, %cst_60 {dimension_numbers = #tpu.dot_dimension_numbers<[1], [0], [0], [1], [0, 0, 1, 1], [], []>} : vector<16x32xf32>, vector<32x16xf32>, vector<16x16xf32> -> vector<16x16xf32>
    %cst_61 = arith.constant 0.176776692 : f32
    %257 = vector.broadcast %cst_61 : f32 to vector<16x16xf32>
    %258 = arith.mulf %256, %257 : vector<16x16xf32>
    %cst_62 = arith.constant 0.000000e+00 : f32
    %259 = vector.broadcast %cst_62 : f32 to vector<16x16xf32>
    %260 = arith.maximumf %258, %259 : vector<16x16xf32>
    %cst_63 = arith.constant dense<0xFF800000> : vector<16xf32>
    %261 = vector.multi_reduction <maximumf>, %260, %cst_63 [1] : vector<16x16xf32> to vector<16xf32>
    %262 = vector.shape_cast %261 : vector<16xf32> to vector<16x1xf32>
    %263 = vector.broadcast %262 : vector<16x1xf32> to vector<16x16xf32>
    %264 = arith.subf %260, %263 : vector<16x16xf32>
    %265 = math.exp %264 : vector<16x16xf32>
    %cst_64 = arith.constant dense<0.000000e+00> : vector<16xf32>
    %266 = vector.multi_reduction <add>, %265, %cst_64 [1] : vector<16x16xf32> to vector<16xf32>
    %267 = vector.shape_cast %266 : vector<16xf32> to vector<16x1xf32>
    %268 = vector.broadcast %267 : vector<16x1xf32> to vector<16x16xf32>
    %269 = arith.divf %265, %268 : vector<16x16xf32>
    %c0_65 = arith.constant 0 : index
    %270 = memref.load %arg8[%c0_65] : memref<3xf32, #tpu.memory_space<smem>>
    %271 = vector.broadcast %270 : f32 to vector<16x16xf32>
    %272 = arith.mulf %271, %253 : vector<16x16xf32>
    %c1_66 = arith.constant 1 : index
    %273 = memref.load %arg8[%c1_66] : memref<3xf32, #tpu.memory_space<smem>>
    %274 = vector.broadcast %273 : f32 to vector<16x16xf32>
    %275 = arith.mulf %274, %269 : vector<16x16xf32>
    %276 = arith.addf %272, %275 : vector<16x16xf32>
    %c2_67 = arith.constant 2 : index
    %277 = memref.load %arg8[%c2_67] : memref<3xf32, #tpu.memory_space<smem>>
    %278 = vector.broadcast %277 : f32 to vector<16x16xf32>
    %279 = arith.addf %276, %278 : vector<16x16xf32>
    %cst_68 = arith.constant dense<0xFF800000> : vector<16xf32>
    %280 = vector.multi_reduction <maximumf>, %279, %cst_68 [1] : vector<16x16xf32> to vector<16xf32>
    %281 = vector.shape_cast %280 : vector<16xf32> to vector<16x1xf32>
    %282 = vector.broadcast %281 : vector<16x1xf32> to vector<16x16xf32>
    %283 = arith.subf %279, %282 : vector<16x16xf32>
    %284 = math.exp %283 : vector<16x16xf32>
    %cst_69 = arith.constant dense<0.000000e+00> : vector<16xf32>
    %285 = vector.multi_reduction <add>, %284, %cst_69 [1] : vector<16x16xf32> to vector<16xf32>
    %286 = vector.shape_cast %285 : vector<16xf32> to vector<16x1xf32>
    %287 = vector.broadcast %286 : vector<16x1xf32> to vector<16x16xf32>
    %288 = arith.divf %284, %287 : vector<16x16xf32>
    %289 = vector.extract_strided_slice %288 {offsets = [0, 0], sizes = [16, 1], strides = [1, 1]} : vector<16x16xf32> to vector<16x1xf32>
    %290 = vector.broadcast %289 : vector<16x1xf32> to vector<16x16xf32>
    %291 = arith.cmpf ogt, %290, %288 : vector<16x16xf32>
    %292 = arith.extui %291 : vector<16x16xi1> to vector<16x16xi32>
    %293 = arith.sitofp %292 : vector<16x16xi32> to vector<16x16xf32>
    %294 = vector.extract_strided_slice %288 {offsets = [0, 1], sizes = [16, 1], strides = [1, 1]} : vector<16x16xf32> to vector<16x1xf32>
    %295 = vector.broadcast %294 : vector<16x1xf32> to vector<16x16xf32>
    %296 = arith.cmpf ogt, %295, %288 : vector<16x16xf32>
    %297 = arith.extui %296 : vector<16x16xi1> to vector<16x16xi32>
    %298 = arith.sitofp %297 : vector<16x16xi32> to vector<16x16xf32>
    %299 = arith.addf %293, %298 : vector<16x16xf32>
    %300 = vector.extract_strided_slice %288 {offsets = [0, 2], sizes = [16, 1], strides = [1, 1]} : vector<16x16xf32> to vector<16x1xf32>
    %301 = vector.broadcast %300 : vector<16x1xf32> to vector<16x16xf32>
    %302 = arith.cmpf ogt, %301, %288 : vector<16x16xf32>
    %303 = arith.extui %302 : vector<16x16xi1> to vector<16x16xi32>
    %304 = arith.sitofp %303 : vector<16x16xi32> to vector<16x16xf32>
    %305 = arith.addf %299, %304 : vector<16x16xf32>
    %306 = vector.extract_strided_slice %288 {offsets = [0, 3], sizes = [16, 1], strides = [1, 1]} : vector<16x16xf32> to vector<16x1xf32>
    %307 = vector.broadcast %306 : vector<16x1xf32> to vector<16x16xf32>
    %308 = arith.cmpf ogt, %307, %288 : vector<16x16xf32>
    %309 = arith.extui %308 : vector<16x16xi1> to vector<16x16xi32>
    %310 = arith.sitofp %309 : vector<16x16xi32> to vector<16x16xf32>
    %311 = arith.addf %305, %310 : vector<16x16xf32>
    %312 = vector.extract_strided_slice %288 {offsets = [0, 4], sizes = [16, 1], strides = [1, 1]} : vector<16x16xf32> to vector<16x1xf32>
    %313 = vector.broadcast %312 : vector<16x1xf32> to vector<16x16xf32>
    %314 = arith.cmpf ogt, %313, %288 : vector<16x16xf32>
    %315 = arith.extui %314 : vector<16x16xi1> to vector<16x16xi32>
    %316 = arith.sitofp %315 : vector<16x16xi32> to vector<16x16xf32>
    %317 = vector.extract_strided_slice %288 {offsets = [0, 5], sizes = [16, 1], strides = [1, 1]} : vector<16x16xf32> to vector<16x1xf32>
    %318 = vector.broadcast %317 : vector<16x1xf32> to vector<16x16xf32>
    %319 = arith.cmpf ogt, %318, %288 : vector<16x16xf32>
    %320 = arith.extui %319 : vector<16x16xi1> to vector<16x16xi32>
    %321 = arith.sitofp %320 : vector<16x16xi32> to vector<16x16xf32>
    %322 = arith.addf %316, %321 : vector<16x16xf32>
    %323 = vector.extract_strided_slice %288 {offsets = [0, 6], sizes = [16, 1], strides = [1, 1]} : vector<16x16xf32> to vector<16x1xf32>
    %324 = vector.broadcast %323 : vector<16x1xf32> to vector<16x16xf32>
    %325 = arith.cmpf ogt, %324, %288 : vector<16x16xf32>
    %326 = arith.extui %325 : vector<16x16xi1> to vector<16x16xi32>
    %327 = arith.sitofp %326 : vector<16x16xi32> to vector<16x16xf32>
    %328 = arith.addf %322, %327 : vector<16x16xf32>
    %329 = vector.extract_strided_slice %288 {offsets = [0, 7], sizes = [16, 1], strides = [1, 1]} : vector<16x16xf32> to vector<16x1xf32>
    %330 = vector.broadcast %329 : vector<16x1xf32> to vector<16x16xf32>
    %331 = arith.cmpf ogt, %330, %288 : vector<16x16xf32>
    %332 = arith.extui %331 : vector<16x16xi1> to vector<16x16xi32>
    %333 = arith.sitofp %332 : vector<16x16xi32> to vector<16x16xf32>
    %334 = arith.addf %328, %333 : vector<16x16xf32>
    %335 = vector.extract_strided_slice %288 {offsets = [0, 8], sizes = [16, 1], strides = [1, 1]} : vector<16x16xf32> to vector<16x1xf32>
    %336 = vector.broadcast %335 : vector<16x1xf32> to vector<16x16xf32>
    %337 = arith.cmpf ogt, %336, %288 : vector<16x16xf32>
    %338 = arith.extui %337 : vector<16x16xi1> to vector<16x16xi32>
    %339 = arith.sitofp %338 : vector<16x16xi32> to vector<16x16xf32>
    %340 = vector.extract_strided_slice %288 {offsets = [0, 9], sizes = [16, 1], strides = [1, 1]} : vector<16x16xf32> to vector<16x1xf32>
    %341 = vector.broadcast %340 : vector<16x1xf32> to vector<16x16xf32>
    %342 = arith.cmpf ogt, %341, %288 : vector<16x16xf32>
    %343 = arith.extui %342 : vector<16x16xi1> to vector<16x16xi32>
    %344 = arith.sitofp %343 : vector<16x16xi32> to vector<16x16xf32>
    %345 = arith.addf %339, %344 : vector<16x16xf32>
    %346 = vector.extract_strided_slice %288 {offsets = [0, 10], sizes = [16, 1], strides = [1, 1]} : vector<16x16xf32> to vector<16x1xf32>
    %347 = vector.broadcast %346 : vector<16x1xf32> to vector<16x16xf32>
    %348 = arith.cmpf ogt, %347, %288 : vector<16x16xf32>
    %349 = arith.extui %348 : vector<16x16xi1> to vector<16x16xi32>
    %350 = arith.sitofp %349 : vector<16x16xi32> to vector<16x16xf32>
    %351 = arith.addf %345, %350 : vector<16x16xf32>
    %352 = vector.extract_strided_slice %288 {offsets = [0, 11], sizes = [16, 1], strides = [1, 1]} : vector<16x16xf32> to vector<16x1xf32>
    %353 = vector.broadcast %352 : vector<16x1xf32> to vector<16x16xf32>
    %354 = arith.cmpf ogt, %353, %288 : vector<16x16xf32>
    %355 = arith.extui %354 : vector<16x16xi1> to vector<16x16xi32>
    %356 = arith.sitofp %355 : vector<16x16xi32> to vector<16x16xf32>
    %357 = arith.addf %351, %356 : vector<16x16xf32>
    %358 = vector.extract_strided_slice %288 {offsets = [0, 12], sizes = [16, 1], strides = [1, 1]} : vector<16x16xf32> to vector<16x1xf32>
    %359 = vector.broadcast %358 : vector<16x1xf32> to vector<16x16xf32>
    %360 = arith.cmpf ogt, %359, %288 : vector<16x16xf32>
    %361 = arith.extui %360 : vector<16x16xi1> to vector<16x16xi32>
    %362 = arith.sitofp %361 : vector<16x16xi32> to vector<16x16xf32>
    %363 = vector.extract_strided_slice %288 {offsets = [0, 13], sizes = [16, 1], strides = [1, 1]} : vector<16x16xf32> to vector<16x1xf32>
    %364 = vector.broadcast %363 : vector<16x1xf32> to vector<16x16xf32>
    %365 = arith.cmpf ogt, %364, %288 : vector<16x16xf32>
    %366 = arith.extui %365 : vector<16x16xi1> to vector<16x16xi32>
    %367 = arith.sitofp %366 : vector<16x16xi32> to vector<16x16xf32>
    %368 = arith.addf %362, %367 : vector<16x16xf32>
    %369 = vector.extract_strided_slice %288 {offsets = [0, 14], sizes = [16, 1], strides = [1, 1]} : vector<16x16xf32> to vector<16x1xf32>
    %370 = vector.broadcast %369 : vector<16x1xf32> to vector<16x16xf32>
    %371 = arith.cmpf ogt, %370, %288 : vector<16x16xf32>
    %372 = arith.extui %371 : vector<16x16xi1> to vector<16x16xi32>
    %373 = arith.sitofp %372 : vector<16x16xi32> to vector<16x16xf32>
    %374 = arith.addf %368, %373 : vector<16x16xf32>
    %375 = vector.extract_strided_slice %288 {offsets = [0, 15], sizes = [16, 1], strides = [1, 1]} : vector<16x16xf32> to vector<16x1xf32>
    %376 = vector.broadcast %375 : vector<16x1xf32> to vector<16x16xf32>
    %377 = arith.cmpf ogt, %376, %288 : vector<16x16xf32>
    %378 = arith.extui %377 : vector<16x16xi1> to vector<16x16xi32>
    %379 = arith.sitofp %378 : vector<16x16xi32> to vector<16x16xf32>
    %380 = arith.addf %374, %379 : vector<16x16xf32>
    %381 = arith.addf %311, %334 : vector<16x16xf32>
    %382 = arith.addf %357, %380 : vector<16x16xf32>
    %383 = arith.addf %381, %382 : vector<16x16xf32>
    %cst_70 = arith.constant 1.200000e+01 : f32
    %384 = vector.broadcast %cst_70 : f32 to vector<16x16xf32>
    %385 = arith.cmpf olt, %383, %384 : vector<16x16xf32>
    %cst_71 = arith.constant 0.000000e+00 : f32
    %386 = vector.broadcast %cst_71 : f32 to vector<16x16xf32>
    %387 = arith.select %385, %288, %386 : vector<16x16xi1>, vector<16x16xf32>
    %c0_72 = arith.constant 0 : index
    %c0_73 = arith.constant 0 : index
    %388 = vector.load %arg7[%c0_72, %c0_73] : memref<16x128xf32, #tpu.memory_space<vmem>>, vector<16x128xf32>
    %cst_74 = arith.constant dense<0.000000e+00> : vector<16x128xf32>
    %389 = tpu.matmul %387, %388, %cst_74 {dimension_numbers = #tpu.dot_dimension_numbers<[1], [0], [0], [1], [0, 0, 1, 1], [], []>} : vector<16x16xf32>, vector<16x128xf32>, vector<16x128xf32> -> vector<16x128xf32>
    %390 = vector.shape_cast %389 : vector<16x128xf32> to vector<16x1x128xf32>
    %391 = vector.shape_cast %390 : vector<16x1x128xf32> to vector<16x1x128xf32>
    %392 = vector.broadcast %391 : vector<16x1x128xf32> to vector<16x8x128xf32>
    %393 = vector.shape_cast %392 : vector<16x8x128xf32> to vector<128x128xf32>
    %394 = arith.truncf %393 : vector<128x128xf32> to vector<128x128xbf16>
    %395 = arith.mulf %394, %61 : vector<128x128xbf16>
    %396 = vector.extract_strided_slice %6 {offsets = [32, 0], sizes = [32, 128], strides = [1, 1]} : vector<64x128xf32> to vector<32x128xf32>
    %397 = arith.truncf %396 : vector<32x128xf32> to vector<32x128xbf16>
    %cst_75 = arith.constant dense<0.000000e+00> : vector<32x128xf32>
    %398 = tpu.matmul %397, %395, %cst_75 {dimension_numbers = #tpu.dot_dimension_numbers<[1], [0], [0], [1], [0, 0, 1, 1], [], []>} : vector<32x128xbf16>, vector<128x128xbf16>, vector<32x128xf32> -> vector<32x128xf32>
    %399 = arith.truncf %398 : vector<32x128xf32> to vector<32x128xbf16>
    %c0_76 = arith.constant 0 : index
    %c0_77 = arith.constant 0 : index
    %400 = vector.load %arg9[%c0_76, %c0_77] : memref<32x32xbf16, #tpu.memory_space<vmem>>, vector<32x32xbf16>
    %cst_78 = arith.constant dense<0.000000e+00> : vector<32x128xf32>
    %401 = tpu.matmul %400, %399, %cst_78 {dimension_numbers = #tpu.dot_dimension_numbers<[1], [0], [0], [1], [0, 0, 1, 1], [], []>} : vector<32x32xbf16>, vector<32x128xbf16>, vector<32x128xf32> -> vector<32x128xf32>
    %c0_79 = arith.constant 0 : index
    %c0_80 = arith.constant 0 : index
    %402 = vector.load %arg10[%c0_79, %c0_80] : memref<32x1xf32, #tpu.memory_space<vmem>>, vector<32x1xf32>
    %403 = vector.broadcast %402 : vector<32x1xf32> to vector<32x128xf32>
    %404 = arith.addf %401, %403 : vector<32x128xf32>
    %c0_81 = arith.constant 0 : index
    %c0_82 = arith.constant 0 : index
    %405 = vector.load %arg11[%c0_81, %c0_82] : memref<32x128xf32, #tpu.memory_space<vmem>>, vector<32x128xf32>
    %406 = arith.mulf %404, %405 : vector<32x128xf32>
    %c32 = arith.constant 32 : index
    %c0_83 = arith.constant 0 : index
    %407 = vector.load %arg1[%c32, %c0_83] : memref<64x128xf32, #tpu.memory_space<vmem>>, vector<32x128xf32>
    %408 = arith.addf %406, %407 : vector<32x128xf32>
    %c32_84 = arith.constant 32 : index
    %c0_85 = arith.constant 0 : index
    %409 = vector.load %arg12[%c32_84, %c0_85] : memref<64x128xf32, #tpu.memory_space<vmem>>, vector<32x128xf32>
    tpu.vector_store %arg12[%c32_84, %c0_85], %408 {strides = array<i32>} : memref<64x128xf32, #tpu.memory_space<vmem>>, vector<32x128xf32>,
    return
  }
  func.func @transform_0(%arg0: i32) -> (i32, i32) {
    %c0_i32 = arith.constant 0 : i32
    %c0_i32_0 = arith.constant 0 : i32
    return %arg0, %c0_i32 : i32, i32
  }
  func.func @transform_1(%arg0: i32) -> (i32, i32) {
    %c0_i32 = arith.constant 0 : i32
    %c0_i32_0 = arith.constant 0 : i32
    %c0_i32_1 = arith.constant 0 : i32
    return %c0_i32, %c0_i32_0 : i32, i32
  }
  func.func @transform_2(%arg0: i32) -> (i32, i32) {
    %c0_i32 = arith.constant 0 : i32
    %c0_i32_0 = arith.constant 0 : i32
    %c0_i32_1 = arith.constant 0 : i32
    return %c0_i32, %c0_i32_0 : i32, i32
  }
  func.func @transform_3(%arg0: i32) -> (i32, i32) {
    %c0_i32 = arith.constant 0 : i32
    %c0_i32_0 = arith.constant 0 : i32
    %c0_i32_1 = arith.constant 0 : i32
    return %c0_i32, %c0_i32_0 : i32, i32
  }
  func.func @transform_4(%arg0: i32) -> (i32, i32) {
    %c0_i32 = arith.constant 0 : i32
    %c0_i32_0 = arith.constant 0 : i32
    %c0_i32_1 = arith.constant 0 : i32
    return %c0_i32, %c0_i32_0 : i32, i32
  }
  func.func @transform_5(%arg0: i32) -> (i32, i32) {
    %c0_i32 = arith.constant 0 : i32
    %c0_i32_0 = arith.constant 0 : i32
    %c0_i32_1 = arith.constant 0 : i32
    return %c0_i32, %c0_i32_0 : i32, i32
  }
  func.func @transform_6(%arg0: i32) -> (i32, i32) {
    %c0_i32 = arith.constant 0 : i32
    %c0_i32_0 = arith.constant 0 : i32
    %c0_i32_1 = arith.constant 0 : i32
    return %c0_i32, %c0_i32_0 : i32, i32
  }
  func.func @transform_7(%arg0: i32) -> i32 {
    %c0_i32 = arith.constant 0 : i32
    %c0_i32_0 = arith.constant 0 : i32
    return %c0_i32 : i32
  }
  func.func @transform_8(%arg0: i32) -> (i32, i32) {
    %c0_i32 = arith.constant 0 : i32
    %c0_i32_0 = arith.constant 0 : i32
    %c0_i32_1 = arith.constant 0 : i32
    return %c0_i32, %c0_i32_0 : i32, i32
  }
  func.func @transform_9(%arg0: i32) -> (i32, i32) {
    %c0_i32 = arith.constant 0 : i32
    %c0_i32_0 = arith.constant 0 : i32
    %c0_i32_1 = arith.constant 0 : i32
    return %c0_i32, %c0_i32_0 : i32, i32
  }
  func.func @transform_10(%arg0: i32) -> (i32, i32) {
    %c0_i32 = arith.constant 0 : i32
    %c0_i32_0 = arith.constant 0 : i32
    %c0_i32_1 = arith.constant 0 : i32
    return %c0_i32, %c0_i32_0 : i32, i32
  }
  func.func @transform_11(%arg0: i32) -> (i32, i32) {
    %c0_i32 = arith.constant 0 : i32
    %c0_i32_0 = arith.constant 0 : i32
    return %arg0, %c0_i32 : i32, i32
  }
}

</mosaic_0001>

<llo_original>
// kernel: dggc_forward.1
$region0: #{dggc_forward.1}
  #allocation0 [shape = 'u32[]', space=smem, size = 0x4, offset = 0x4, fixed_abs, tag = 'smem constant byte address 0x4 - core index']
  #allocation1 [shape = 'u32[144,128]{1,0:T(1,128)}', space=vmem, size = 0x12000, scoped, tag = 'internal scratch']
  %s0 = inlined_call_operand.vmem [shape: f32[64,128], index: 0, kind: input, shape index: {}]
  %s1 = inlined_call_operand.vmem [shape: bf16[64,64], index: 1, kind: input, shape index: {}]
  %s2 = inlined_call_operand.vmem [shape: f32[64,1], index: 2, kind: input, shape index: {}]
  %s3 = inlined_call_operand.vmem [shape: f32[16,16], index: 3, kind: input, shape index: {}]
  %s4 = inlined_call_operand.vmem [shape: f32[1,128], index: 4, kind: input, shape index: {}]
  %s5 = inlined_call_operand.vmem [shape: f32[128,16], index: 5, kind: input, shape index: {}]
  %s6 = inlined_call_operand.vmem [shape: f32[16,128], index: 6, kind: input, shape index: {}]
  %s7 = inlined_call_operand.vmem [shape: f32[3], index: 7, kind: input, shape index: {}]
  %s8 = inlined_call_operand.vmem [shape: bf16[32,32], index: 8, kind: input, shape index: {}]
  %s9 = inlined_call_operand.vmem [shape: f32[32,1], index: 9, kind: input, shape index: {}]
  %s10 = inlined_call_operand.vmem [shape: f32[32,128], index: 10, kind: input, shape index: {}]
  %s11 = inlined_call_operand.vmem [shape: f32[64,128], index: 11, kind: output, shape index: {}]
  %s12 = sld [smem:[#allocation0]]
  $region58: #{dggc_forward.1} parent=0
    _
  %s14 = ssub.s32 1, %s12
  %s15 = scalar_select 0, %s14, %s12
  $region1: #{dggc_forward.1} parent=0
    #allocation2 [shape = 'u8[512]{0}', space=smem, size = 0x200, scoped, tag = 'input window, operand 7, single buffered']
    #allocation3 [shape = 's32[1]{0}', space=sflag, size = 0x4, scoped, tag = 'scoped memory for dggc_forward.1']
    %16 = vsyncpa [#allocation3], 0
    // Predicated region
    $region2: #{dggc_forward.1} parent=1 // pred_check
      _
    $region3: #{dggc_forward.1} parent=1 // pred_check_branch
      %18 = sbr.rel (0) target = $region5
    $region4: #{dggc_forward.1} parent=1 // pred_region
      _
    $region5: #{dggc_forward.1} parent=1 // pred_fallthru
      _
    // Predicated region
    $region6: #{dggc_forward.1} parent=1 // pred_check
      _
    $region7: #{dggc_forward.1} parent=1 // pred_check_branch
      %20 = sbr.rel (0) target = $region9
    $region8: #{dggc_forward.1} parent=1 // pred_region
      _
    $region9: #{dggc_forward.1} parent=1 // pred_fallthru
      _
    // Predicated region
    $region10: #{dggc_forward.1} parent=1 // pred_check
      _
    $region11: #{dggc_forward.1} parent=1 // pred_check_branch
      %22 = sbr.rel (0) target = $region13
    $region12: #{dggc_forward.1} parent=1 // pred_region
      _
    $region13: #{dggc_forward.1} parent=1 // pred_fallthru
      _
    // Predicated region
    $region14: #{dggc_forward.1} parent=1 // pred_check
      _
    $region15: #{dggc_forward.1} parent=1 // pred_check_branch
      %24 = sbr.rel (0) target = $region17
    $region16: #{dggc_forward.1} parent=1 // pred_region
      _
    $region17: #{dggc_forward.1} parent=1 // pred_fallthru
      _
    // Predicated region
    $region18: #{dggc_forward.1} parent=1 // pred_check
      _
    $region19: #{dggc_forward.1} parent=1 // pred_check_branch
      %26 = sbr.rel (0) target = $region21
    $region20: #{dggc_forward.1} parent=1 // pred_region
      _
    $region21: #{dggc_forward.1} parent=1 // pred_fallthru
      _
    // Predicated region
    $region22: #{dggc_forward.1} parent=1 // pred_check
      _
    $region23: #{dggc_forward.1} parent=1 // pred_check_branch
      %28 = sbr.rel (0) target = $region25
    $region24: #{dggc_forward.1} parent=1 // pred_region
      _
    $region25: #{dggc_forward.1} parent=1 // pred_fallthru
      _
    // Predicated region
    $region26: #{dggc_forward.1} parent=1 // pred_check
      _
    $region27: #{dggc_forward.1} parent=1 // pred_check_branch
      %30 = sbr.rel (0) target = $region29
    $region28: #{dggc_forward.1} parent=1 // pred_region
      _
    $region29: #{dggc_forward.1} parent=1 // pred_fallthru
      _
    // Predicated region
    $region30: #{dggc_forward.1} parent=1 // pred_check
      _
    $region31: #{dggc_forward.1} parent=1 // pred_check_branch
      %32 = sbr.rel (0) target = $region33
    $region32: #{dggc_forward.1} parent=1 // pred_region
      %s34 = ssub.s32 16, 16
      %35 = vsyncadd [#allocation3], %s34
      %s37 = sshll.u32 %s7, 4
      %s38 = int_to_ptr.vmem [resolvable:$true] %s37
      %40 = dma.vmem_to_smem %s38, 16, [#allocation2], [#allocation3]
    $region33: #{dggc_forward.1} parent=1 // pred_fallthru
      _
    // Predicated region
    $region34: #{dggc_forward.1} parent=1 // pred_check
      _
    $region35: #{dggc_forward.1} parent=1 // pred_check_branch
      %42 = sbr.rel (0) target = $region37
    $region36: #{dggc_forward.1} parent=1 // pred_region
      _
    $region37: #{dggc_forward.1} parent=1 // pred_fallthru
      _
    // Predicated region
    $region38: #{dggc_forward.1} parent=1 // pred_check
      _
    $region39: #{dggc_forward.1} parent=1 // pred_check_branch
      %44 = sbr.rel (0) target = $region41
    $region40: #{dggc_forward.1} parent=1 // pred_region
      _
    $region41: #{dggc_forward.1} parent=1 // pred_fallthru
      _
    // Predicated region
    $region42: #{dggc_forward.1} parent=1 // pred_check
      _
    $region43: #{dggc_forward.1} parent=1 // pred_check_branch
      %46 = sbr.rel (0) target = $region45
    $region44: #{dggc_forward.1} parent=1 // pred_region
      _
    $region45: #{dggc_forward.1} parent=1 // pred_fallthru
      _
    // Predicated region
    $region46: #{dggc_forward.1} parent=1 // pred_check
      _
    $region47: #{dggc_forward.1} parent=1 // pred_check_branch
      %48 = sbr.rel (0) target = $region49
    $region48: #{dggc_forward.1} parent=1 // pred_region
      %49 = dma.done [#allocation3], 16
    $region49: #{dggc_forward.1} parent=1 // pred_fallthru
      _
    %50 = sfence
    %v52 = vld [vmem:[%s1] sm:$0xf]
    %v53 = vld [vmem:[%s1 + $0x4] sm:$0xf]
    %v54 = vld [vmem:[%s1 + $0x8] sm:$0xf]
    %v55 = vld [vmem:[%s1 + $0xc] sm:$0xf]
    %v56 = vld [vmem:[%s1 + $0x10] sm:$0xf]
    %v57 = vld [vmem:[%s1 + $0x14] sm:$0xf]
    %v58 = vld [vmem:[%s1 + $0x18] sm:$0xf]
    %v59 = vld [vmem:[%s1 + $0x1c] sm:$0xf]
    %v60 = vld [vmem:[%s0] sm:$0xff]
    %v61 = vld [vmem:[%s0 + $0x8] sm:$0xff]
    %v62 = vld [vmem:[%s0 + $0x10] sm:$0xff]
    %v63 = vld [vmem:[%s0 + $0x18] sm:$0xff]
    %v64 = vld [vmem:[%s0 + $0x20] sm:$0xff]
    %v65 = vld [vmem:[%s0 + $0x28] sm:$0xff]
    %v66 = vld [vmem:[%s0 + $0x30] sm:$0xff]
    %v67 = vld [vmem:[%s0 + $0x38] sm:$0xff]
    %v68 = vpack.c.bf16 %v61, %v60
    %v69 = vpack.c.bf16 %v63, %v62
    %v70 = vpack.c.bf16 %v65, %v64
    %v71 = vpack.c.bf16 %v67, %v66
    %v72 = vld [vmem:[%s2] sm:$0xff]
    %v73 = vld [vmem:[%s2 + $0x8] sm:$0xff]
    %v74 = vld [vmem:[%s2 + $0x10] sm:$0xff]
    %v75 = vld [vmem:[%s2 + $0x18] sm:$0xff]
    %v76 = vld [vmem:[%s2 + $0x20] sm:$0xff]
    %v77 = vld [vmem:[%s2 + $0x28] sm:$0xff]
    %v78 = vld [vmem:[%s2 + $0x30] sm:$0xff]
    %v79 = vld [vmem:[%s2 + $0x38] sm:$0xff]
    %81 = vset.pattern.permute.xlu0 0
    %82 = vperm.xlu0 %81, %v72
    %v83 = vpop.permute.xlu0 %82
    %86 = vset.pattern.permute.xlu0 0
    %87 = vperm.xlu0 %86, %v73
    %v88 = vpop.permute.xlu0 %87
    %91 = vset.pattern.permute.xlu0 0
    %92 = vperm.xlu0 %91, %v74
    %v93 = vpop.permute.xlu0 %92
    %96 = vset.pattern.permute.xlu0 0
    %97 = vperm.xlu0 %96, %v75
    %v98 = vpop.permute.xlu0 %97
    %101 = vset.pattern.permute.xlu0 0
    %102 = vperm.xlu0 %101, %v76
    %v103 = vpop.permute.xlu0 %102
    %106 = vset.pattern.permute.xlu0 0
    %107 = vperm.xlu0 %106, %v77
    %v108 = vpop.permute.xlu0 %107
    %111 = vset.pattern.permute.xlu0 0
    %112 = vperm.xlu0 %111, %v78
    %v113 = vpop.permute.xlu0 %112
    %116 = vset.pattern.permute.xlu0 0
    %117 = vperm.xlu0 %116, %v79
    %v118 = vpop.permute.xlu0 %117
    %v128 = vunpack.c.l.b16 %v52
    %v129 = vunpack.c.l.b16 %v53
    %v130 = vunpack.c.l.b16 %v54
    %v131 = vunpack.c.l.b16 %v55
    %v132 = vunpack.c.l.b16 %v56
    %v133 = vunpack.c.l.b16 %v57
    %v134 = vunpack.c.l.b16 %v58
    %v135 = vunpack.c.l.b16 %v59
    %v136 = vpack.c.b16 %v129, %v128
    %v137 = vpack.c.b16 %v131, %v130
    %v138 = vpack.c.b16 %v133, %v132
    %v139 = vpack.c.b16 %v135, %v134
    %vm140 = vcmask 523264
    %v142 = vsel %vm140, %v136, 0
    %v145 = vsel %vm140, %v137, 0
    %v148 = vsel %vm140, %v138, 0
    %v151 = vsel %vm140, %v139, 0
    %153 = vmatprep.subr.bf16.mxu0 0
    %154 = vmatpush1.bf16.msra.mxu0 %v68
    %155 = vmatprep.subr.bf16.mxu0 0
    %156 = vmatpush1.bf16.msra.mxu0 %v69
    %157 = vmatprep.subr.bf16.mxu0 0
    %158 = vmatpush1.bf16.msra.mxu0 %v70
    %159 = vmatprep.subr.bf16.mxu0 0
    %160 = vmatpush1.bf16.msra.mxu0 %v71
    %161 = vmatprep.subr.bf16.mxu0 0
    %162 = vmatpush1.bf16.msra.mxu0 0
    %163 = vmatprep.subr.bf16.mxu0 0
    %164 = vmatpush1.bf16.msra.mxu0 0
    %165 = vmatprep.subr.bf16.mxu0 0
    %166 = vmatpush1.bf16.msra.mxu0 0
    %167 = vmatprep.subr.bf16.mxu0 0
    %168 = vmatpush1.bf16.msra.mxu0 0
    %169 = vmatprep.subr.bf16.mxu0 0
    %170 = vmatpush1.bf16.msra.mxu0 0
    %171 = vmatprep.subr.bf16.mxu0 0
    %172 = vmatpush1.bf16.msra.mxu0 0
    %173 = vmatprep.subr.bf16.mxu0 0
    %174 = vmatpush1.bf16.msra.mxu0 0
    %175 = vmatprep.subr.bf16.mxu0 0
    %176 = vmatpush1.bf16.msra.mxu0 0
    %177 = vmatprep.subr.bf16.mxu0 0
    %178 = vmatpush1.bf16.msra.mxu0 0
    %179 = vmatprep.subr.bf16.mxu0 0
    %180 = vmatpush1.bf16.msra.mxu0 0
    %181 = vmatprep.subr.bf16.mxu0 0
    %182 = vmatpush1.bf16.msra.mxu0 0
    %183 = vmatprep.subr.bf16.mxu0 0
    %184 = vmatpush1.bf16.msra.mxu0 0
    %185 = vmatprep.mubr.bf16.mxu0 0
    %186 = vmatmul.mubr.bf16.gmra.mrb[0].mxu0 %v142
    %v187 = vpop.f32.mrb[0].mxu0
    %v188 = vadd.f32 %v83, %v187
    %v189 = vpop.f32.mrb[0].mxu0
    %v190 = vpop.f32.mrb[0].mxu0
    %v191 = vadd.f32 %v88, %v190
    %v192 = vpop.f32.mrb[0].mxu0
    %193 = vmatprep.mubr.bf16.mxu0 0
    %194 = vmatmul.mubr.bf16.gmra.mrb[0].mxu0 %v145
    %v195 = vpop.f32.mrb[0].mxu0
    %v196 = vadd.f32 %v93, %v195
    %v197 = vpop.f32.mrb[0].mxu0
    %v198 = vpop.f32.mrb[0].mxu0
    %v199 = vadd.f32 %v98, %v198
    %v200 = vpop.f32.mrb[0].mxu0
    %201 = vmatprep.mubr.bf16.mxu0 0
    %202 = vmatmul.mubr.bf16.gmra.mrb[0].mxu0 %v148
    %v203 = vpop.f32.mrb[0].mxu0
    %v204 = vadd.f32 %v103, %v203
    %v205 = vpop.f32.mrb[0].mxu0
    %v206 = vpop.f32.mrb[0].mxu0
    %v207 = vadd.f32 %v108, %v206
    %v208 = vpop.f32.mrb[0].mxu0
    %209 = vmatprep.mubr.bf16.mxu0 0
    %210 = vmatmul.mubr.bf16.gmra.mrb[0].mxu0 %v151
    %v211 = vpop.f32.mrb[0].mxu0
    %v212 = vadd.f32 %v113, %v211
    %v213 = vpop.f32.mrb[0].mxu0
    %v214 = vpop.f32.mrb[0].mxu0
    %v215 = vadd.f32 %v118, %v214
    %v216 = vpop.f32.mrb[0].mxu0
    %217 = vdwg.mxu0
    %v218 = vld [vmem:[%s4] sm:$0x1]
    %v220 = vlaneseq
    %v221 = vshrl.u32 %v220, 7
    %v222 = vsub.s32 0, %v221
    %v223 = vrot.slane %v218, %v222
    %v225 = vmul.f32 %v188, %v223
    %v226 = vmul.f32 %v191, %v223
    %v227 = vmul.f32 %v196, %v223
    %v228 = vmul.f32 %v199, %v223
    %v229 = vmul.f32 %v204, %v223
    %v230 = vmul.f32 %v207, %v223
    %v231 = vmul.f32 %v212, %v223
    %v232 = vmul.f32 %v215, %v223
    %v233 = vmax.f32 %v225, 0.0
    %v234 = vmax.f32 %v226, 0.0
    %v235 = vmax.f32 %v227, 0.0
    %v236 = vmax.f32 %v228, 0.0
    %v237 = vmax.f32 %v229, 0.0
    %v238 = vmax.f32 %v230, 0.0
    %v239 = vmax.f32 %v231, 0.0
    %v240 = vmax.f32 %v232, 0.0
    %241 = vmax.xlane.f32.xlu0 %v233
    %v242 = vpop.xlane.xlu0 %241
    %243 = vmax.xlane.f32.xlu0 %v234
    %v244 = vpop.xlane.xlu0 %243
    %245 = vmax.xlane.f32.xlu0 %v235
    %v246 = vpop.xlane.xlu0 %245
    %247 = vmax.xlane.f32.xlu0 %v236
    %v248 = vpop.xlane.xlu0 %247
    %249 = vmax.xlane.f32.xlu0 %v237
    %v250 = vpop.xlane.xlu0 %249
    %251 = vmax.xlane.f32.xlu0 %v238
    %v252 = vpop.xlane.xlu0 %251
    %253 = vmax.xlane.f32.xlu0 %v239
    %v254 = vpop.xlane.xlu0 %253
    %255 = vmax.xlane.f32.xlu0 %v240
    %v256 = vpop.xlane.xlu0 %255
    %v257 = vsub.f32 %v233, %v242
    %v258 = vsub.f32 %v234, %v244
    %v259 = vsub.f32 %v235, %v246
    %v260 = vsub.f32 %v236, %v248
    %v261 = vsub.f32 %v237, %v250
    %v262 = vsub.f32 %v238, %v252
    %v263 = vsub.f32 %v239, %v254
    %v264 = vsub.f32 %v240, %v256
    %v265 = vmul.f32 %v257, 1.442695
    %v266 = vpow.pop %v265
    %v267 = vmul.f32 %v258, 1.442695
    %v268 = vpow.pop %v267
    %v269 = vmul.f32 %v259, 1.442695
    %v270 = vpow.pop %v269
    %v271 = vmul.f32 %v260, 1.442695
    %v272 = vpow.pop %v271
    %v273 = vmul.f32 %v261, 1.442695
    %v274 = vpow.pop %v273
    %v275 = vmul.f32 %v262, 1.442695
    %v276 = vpow.pop %v275
    %v277 = vmul.f32 %v263, 1.442695
    %v278 = vpow.pop %v277
    %v279 = vmul.f32 %v264, 1.442695
    %v280 = vpow.pop %v279
    %281 = vadd.xlane.f32.xlu0 %v266
    %v282 = vpop.xlane.xlu0 %281
    %283 = vadd.xlane.f32.xlu0 %v268
    %v284 = vpop.xlane.xlu0 %283
    %285 = vadd.xlane.f32.xlu0 %v270
    %v286 = vpop.xlane.xlu0 %285
    %287 = vadd.xlane.f32.xlu0 %v272
    %v288 = vpop.xlane.xlu0 %287
    %289 = vadd.xlane.f32.xlu0 %v274
    %v290 = vpop.xlane.xlu0 %289
    %291 = vadd.xlane.f32.xlu0 %v276
    %v292 = vpop.xlane.xlu0 %291
    %293 = vadd.xlane.f32.xlu0 %v278
    %v294 = vpop.xlane.xlu0 %293
    %295 = vadd.xlane.f32.xlu0 %v280
    %v296 = vpop.xlane.xlu0 %295
    %v297 = vrcp.pop %v282
    %v298 = vmul.f32 %v266, %v297
    %v299 = vrcp.pop %v284
    %v300 = vmul.f32 %v268, %v299
    %v301 = vrcp.pop %v286
    %v302 = vmul.f32 %v270, %v301
    %v303 = vrcp.pop %v288
    %v304 = vmul.f32 %v272, %v303
    %v305 = vrcp.pop %v290
    %v306 = vmul.f32 %v274, %v305
    %v307 = vrcp.pop %v292
    %v308 = vmul.f32 %v276, %v307
    %v309 = vrcp.pop %v294
    %v310 = vmul.f32 %v278, %v309
    %v311 = vrcp.pop %v296
    %v312 = vmul.f32 %v280, %v311
    %v313 = vld [vmem:[%s5] sm:$0xff]
    %v314 = vld [vmem:[%s5 + $0x8] sm:$0xff]
    %v315 = vld [vmem:[%s5 + $0x10] sm:$0xff]
    %v316 = vld [vmem:[%s5 + $0x18] sm:$0xff]
    %v317 = vld [vmem:[%s5 + $0x20] sm:$0xff]
    %v318 = vld [vmem:[%s5 + $0x28] sm:$0xff]
    %v319 = vld [vmem:[%s5 + $0x30] sm:$0xff]
    %v320 = vld [vmem:[%s5 + $0x38] sm:$0xff]
    %v321 = vld [vmem:[%s5 + $0x40] sm:$0xff]
    %v322 = vld [vmem:[%s5 + $0x48] sm:$0xff]
    %v323 = vld [vmem:[%s5 + $0x50] sm:$0xff]
    %v324 = vld [vmem:[%s5 + $0x58] sm:$0xff]
    %v325 = vld [vmem:[%s5 + $0x60] sm:$0xff]
    %v326 = vld [vmem:[%s5 + $0x68] sm:$0xff]
    %v327 = vld [vmem:[%s5 + $0x70] sm:$0xff]
    %v328 = vld [vmem:[%s5 + $0x78] sm:$0xff]
    %329 = vmatprep.subr.mxu0 0.0
    %330 = vmatpush1.msra.mxu0 %v313
    %331 = vmatprep.subr.mxu0 0.0
    %332 = vmatpush1.msra.mxu0 %v314
    %333 = vmatprep.subr.mxu0 0.0
    %334 = vmatpush1.msra.mxu0 %v315
    %335 = vmatprep.subr.mxu0 0.0
    %336 = vmatpush1.msra.mxu0 %v316
    %337 = vmatprep.subr.mxu0 0.0
    %338 = vmatpush1.msra.mxu0 %v317
    %339 = vmatprep.subr.mxu0 0.0
    %340 = vmatpush1.msra.mxu0 %v318
    %341 = vmatprep.subr.mxu0 0.0
    %342 = vmatpush1.msra.mxu0 %v319
    %343 = vmatprep.subr.mxu0 0.0
    %344 = vmatpush1.msra.mxu0 %v320
    %345 = vmatprep.subr.mxu0 0.0
    %346 = vmatpush1.msra.mxu0 %v321
    %347 = vmatprep.subr.mxu0 0.0
    %348 = vmatpush1.msra.mxu0 %v322
    %349 = vmatprep.subr.mxu0 0.0
    %350 = vmatpush1.msra.mxu0 %v323
    %351 = vmatprep.subr.mxu0 0.0
    %352 = vmatpush1.msra.mxu0 %v324
    %353 = vmatprep.subr.mxu0 0.0
    %354 = vmatpush1.msra.mxu0 %v325
    %355 = vmatprep.subr.mxu0 0.0
    %356 = vmatpush1.msra.mxu0 %v326
    %357 = vmatprep.subr.mxu0 0.0
    %358 = vmatpush1.msra.mxu0 %v327
    %359 = vmatprep.subr.mxu0 0.0
    %360 = vmatpush1.msra.mxu0 %v328
    %361 = vmatprep.subr.mxu0 0.0
    %362 = vmatpush1.msra.mxu0 0.0
    %363 = vmatprep.subr.mxu0 0.0
    %364 = vmatpush1.msra.mxu0 0.0
    %365 = vmatprep.subr.mxu0 0.0
    %366 = vmatpush1.msra.mxu0 0.0
    %367 = vmatprep.subr.mxu0 0.0
    %368 = vmatpush1.msra.mxu0 0.0
    %369 = vmatprep.subr.mxu0 0.0
    %370 = vmatpush1.msra.mxu0 0.0
    %371 = vmatprep.subr.mxu0 0.0
    %372 = vmatpush1.msra.mxu0 0.0
    %373 = vmatprep.subr.mxu0 0.0
    %374 = vmatpush1.msra.mxu0 0.0
    %375 = vmatprep.subr.mxu0 0.0
    %376 = vmatpush1.msra.mxu0 0.0
    %377 = vmatprep.subr.mxu0 0.0
    %378 = vmatpush1.msra.mxu0 0.0
    %379 = vmatprep.subr.mxu0 0.0
    %380 = vmatpush1.msra.mxu0 0.0
    %381 = vmatprep.subr.mxu0 0.0
    %382 = vmatpush1.msra.mxu0 0.0
    %383 = vmatprep.subr.mxu0 0.0
    %384 = vmatpush1.msra.mxu0 0.0
    %385 = vmatprep.subr.mxu0 0.0
    %386 = vmatpush1.msra.mxu0 0.0
    %387 = vmatprep.subr.mxu0 0.0
    %388 = vmatpush1.msra.mxu0 0.0
    %389 = vmatprep.subr.mxu0 0.0
    %390 = vmatpush1.msra.mxu0 0.0
    %391 = vmatprep.subr.mxu0 0.0
    %392 = vmatpush1.msra.mxu0 0.0
    %393 = vmatprep.mubr.f32.mxu0 0.0
    %394 = vmatmul.mubr.f32.gmra.mrb[0].mxu0 %v188
    %v395 = vpop.f32.mrb[0].mxu0
    %v396 = vadd.f32 0.0, %v395
    %v397 = vpop.f32.mrb[0].mxu0
    %398 = vmatprep.mubr.f32.mxu0 0.0
    %399 = vmatmul.mubr.f32.gmra.mrb[0].mxu0 %v191
    %v400 = vpop.f32.mrb[0].mxu0
    %v401 = vadd.f32 0.0, %v400
    %v402 = vpop.f32.mrb[0].mxu0
    %403 = vmatprep.mubr.f32.mxu0 0.0
    %404 = vmatmul.mubr.f32.gmra.mrb[0].mxu0 %v196
    %v405 = vpop.f32.mrb[0].mxu0
    %v406 = vadd.f32 0.0, %v405
    %v407 = vpop.f32.mrb[0].mxu0
    %408 = vmatprep.mubr.f32.mxu0 0.0
    %409 = vmatmul.mubr.f32.gmra.mrb[0].mxu0 %v199
    %v410 = vpop.f32.mrb[0].mxu0
    %v411 = vadd.f32 0.0, %v410
    %v412 = vpop.f32.mrb[0].mxu0
    %413 = vmatprep.mubr.f32.mxu0 0.0
    %414 = vmatmul.mubr.f32.gmra.mrb[0].mxu0 %v204
    %v415 = vpop.f32.mrb[0].mxu0
    %v416 = vadd.f32 0.0, %v415
    %v417 = vpop.f32.mrb[0].mxu0
    %418 = vmatprep.mubr.f32.mxu0 0.0
    %419 = vmatmul.mubr.f32.gmra.mrb[0].mxu0 %v207
    %v420 = vpop.f32.mrb[0].mxu0
    %v421 = vadd.f32 0.0, %v420
    %v422 = vpop.f32.mrb[0].mxu0
    %423 = vmatprep.mubr.f32.mxu0 0.0
    %424 = vmatmul.mubr.f32.gmra.mrb[0].mxu0 %v212
    %v425 = vpop.f32.mrb[0].mxu0
    %v426 = vadd.f32 0.0, %v425
    %v427 = vpop.f32.mrb[0].mxu0
    %428 = vmatprep.mubr.f32.mxu0 0.0
    %429 = vmatmul.mubr.f32.gmra.mrb[0].mxu0 %v215
    %v430 = vpop.f32.mrb[0].mxu0
    %v431 = vadd.f32 0.0, %v430
    %v432 = vpop.f32.mrb[0].mxu0
    %433 = vdwg.mxu0
    %434 = vmatprep.subr.mxu0 0.0
    %435 = vmatpush1.msra.mxu0 %v313
    %436 = vmatprep.subr.mxu0 0.0
    %437 = vmatpush1.msra.mxu0 %v314
    %438 = vmatprep.subr.mxu0 0.0
    %439 = vmatpush1.msra.mxu0 %v315
    %440 = vmatprep.subr.mxu0 0.0
    %441 = vmatpush1.msra.mxu0 %v316
    %442 = vmatprep.subr.mxu0 0.0
    %443 = vmatpush1.msra.mxu0 %v317
    %444 = vmatprep.subr.mxu0 0.0
    %445 = vmatpush1.msra.mxu0 %v318
    %446 = vmatprep.subr.mxu0 0.0
    %447 = vmatpush1.msra.mxu0 %v319
    %448 = vmatprep.subr.mxu0 0.0
    %449 = vmatpush1.msra.mxu0 %v320
    %450 = vmatprep.subr.mxu0 0.0
    %451 = vmatpush1.msra.mxu0 %v321
    %452 = vmatprep.subr.mxu0 0.0
    %453 = vmatpush1.msra.mxu0 %v322
    %454 = vmatprep.subr.mxu0 0.0
    %455 = vmatpush1.msra.mxu0 %v323
    %456 = vmatprep.subr.mxu0 0.0
    %457 = vmatpush1.msra.mxu0 %v324
    %458 = vmatprep.subr.mxu0 0.0
    %459 = vmatpush1.msra.mxu0 %v325
    %460 = vmatprep.subr.mxu0 0.0
    %461 = vmatpush1.msra.mxu0 %v326
    %462 = vmatprep.subr.mxu0 0.0
    %463 = vmatpush1.msra.mxu0 %v327
    %464 = vmatprep.subr.mxu0 0.0
    %465 = vmatpush1.msra.mxu0 %v328
    %466 = vmatprep.subr.mxu0 0.0
    %467 = vmatpush1.msra.mxu0 0.0
    %468 = vmatprep.subr.mxu0 0.0
    %469 = vmatpush1.msra.mxu0 0.0
    %470 = vmatprep.subr.mxu0 0.0
    %471 = vmatpush1.msra.mxu0 0.0
    %472 = vmatprep.subr.mxu0 0.0
    %473 = vmatpush1.msra.mxu0 0.0
    %474 = vmatprep.subr.mxu0 0.0
    %475 = vmatpush1.msra.mxu0 0.0
    %476 = vmatprep.subr.mxu0 0.0
    %477 = vmatpush1.msra.mxu0 0.0
    %478 = vmatprep.subr.mxu0 0.0
    %479 = vmatpush1.msra.mxu0 0.0
    %480 = vmatprep.subr.mxu0 0.0
    %481 = vmatpush1.msra.mxu0 0.0
    %482 = vmatprep.subr.mxu0 0.0
    %483 = vmatpush1.msra.mxu0 0.0
    %484 = vmatprep.subr.mxu0 0.0
    %485 = vmatpush1.msra.mxu0 0.0
    %486 = vmatprep.subr.mxu0 0.0
    %487 = vmatpush1.msra.mxu0 0.0
    %488 = vmatprep.subr.mxu0 0.0
    %489 = vmatpush1.msra.mxu0 0.0
    %490 = vmatprep.subr.mxu0 0.0
    %491 = vmatpush1.msra.mxu0 0.0
    %492 = vmatprep.subr.mxu0 0.0
    %493 = vmatpush1.msra.mxu0 0.0
    %494 = vmatprep.subr.mxu0 0.0
    %495 = vmatpush1.msra.mxu0 0.0
    %496 = vmatprep.subr.mxu0 0.0
    %497 = vmatpush1.msra.mxu0 0.0
    %498 = vmatprep.mubr.f32.mxu0 0.0
    %499 = vmatmul.mubr.f32.gmra.mrb[0].mxu0 %v298
    %v500 = vpop.f32.mrb[0].mxu0
    %v501 = vadd.f32 0.0, %v500
    %v502 = vpop.f32.mrb[0].mxu0
    %503 = vmatprep.mubr.f32.mxu0 0.0
    %504 = vmatmul.mubr.f32.gmra.mrb[0].mxu0 %v300
    %v505 = vpop.f32.mrb[0].mxu0
    %v506 = vadd.f32 0.0, %v505
    %v507 = vpop.f32.mrb[0].mxu0
    %508 = vmatprep.mubr.f32.mxu0 0.0
    %509 = vmatmul.mubr.f32.gmra.mrb[0].mxu0 %v302
    %v510 = vpop.f32.mrb[0].mxu0
    %v511 = vadd.f32 0.0, %v510
    %v512 = vpop.f32.mrb[0].mxu0
    %513 = vmatprep.mubr.f32.mxu0 0.0
    %514 = vmatmul.mubr.f32.gmra.mrb[0].mxu0 %v304
    %v515 = vpop.f32.mrb[0].mxu0
    %v516 = vadd.f32 0.0, %v515
    %v517 = vpop.f32.mrb[0].mxu0
    %518 = vmatprep.mubr.f32.mxu0 0.0
    %519 = vmatmul.mubr.f32.gmra.mrb[0].mxu0 %v306
    %v520 = vpop.f32.mrb[0].mxu0
    %v521 = vadd.f32 0.0, %v520
    %v522 = vpop.f32.mrb[0].mxu0
    %523 = vmatprep.mubr.f32.mxu0 0.0
    %524 = vmatmul.mubr.f32.gmra.mrb[0].mxu0 %v308
    %v525 = vpop.f32.mrb[0].mxu0
    %v526 = vadd.f32 0.0, %v525
    %v527 = vpop.f32.mrb[0].mxu0
    %528 = vmatprep.mubr.f32.mxu0 0.0
    %529 = vmatmul.mubr.f32.gmra.mrb[0].mxu0 %v310
    %v530 = vpop.f32.mrb[0].mxu0
    %v531 = vadd.f32 0.0, %v530
    %v532 = vpop.f32.mrb[0].mxu0
    %533 = vmatprep.mubr.f32.mxu0 0.0
    %534 = vmatmul.mubr.f32.gmra.mrb[0].mxu0 %v312
    %v535 = vpop.f32.mrb[0].mxu0
    %v536 = vadd.f32 0.0, %v535
    %v537 = vpop.f32.mrb[0].mxu0
    %538 = vdwg.mxu0
    %v539 = vlaneseq
    %v540 = vshrl.u32 %v539, 7
    %v541 = vadd.s32 %v540, 8
    %v542 = vadd.s32 %v540, 16
    %v543 = vadd.s32 %v540, 24
    %v544 = vadd.s32 %v540, 32
    %v545 = vadd.s32 %v540, 40
    %v546 = vadd.s32 %v540, 48
    %v547 = vadd.s32 %v540, 56
    %v548 = vadd.s32 %v540, 64
    %v549 = vadd.s32 %v540, 72
    %v550 = vadd.s32 %v540, 80
    %v551 = vadd.s32 %v540, 88
    %v552 = vadd.s32 %v540, 96
    %v553 = vadd.s32 %v540, 104
    %v554 = vadd.s32 %v540, 112
    %v555 = vadd.s32 %v540, 120
    %vm556 = vcmp.lt.s32.totalorder %v540, 0
    %v557 = vsub.s32 0, %v540
    %v558 = vsel %vm556, %v557, %v540
    %v559 = vshrl.u32 %v558, 3
    %v560 = vand.u32 %v558, 7
    %v561 = vsub.s32 0, %v560
    %v562 = vsel %vm556, %v561, %v560
    %vm563 = vcmp.lt.s32.totalorder %v541, 0
    %v564 = vsub.s32 0, %v541
    %v565 = vsel %vm563, %v564, %v541
    %v566 = vshrl.u32 %v565, 3
    %v567 = vand.u32 %v565, 7
    %v568 = vsub.s32 0, %v567
    %v569 = vsel %vm563, %v568, %v567
    %vm570 = vcmp.lt.s32.totalorder %v542, 0
    %v571 = vsub.s32 0, %v542
    %v572 = vsel %vm570, %v571, %v542
    %v573 = vshrl.u32 %v572, 3
    %v574 = vand.u32 %v572, 7
    %v575 = vsub.s32 0, %v574
    %v576 = vsel %vm570, %v575, %v574
    %vm577 = vcmp.lt.s32.totalorder %v543, 0
    %v578 = vsub.s32 0, %v543
    %v579 = vsel %vm577, %v578, %v543
    %v580 = vshrl.u32 %v579, 3
    %v581 = vand.u32 %v579, 7
    %v582 = vsub.s32 0, %v581
    %v583 = vsel %vm577, %v582, %v581
    %vm584 = vcmp.lt.s32.totalorder %v544, 0
    %v585 = vsub.s32 0, %v544
    %v586 = vsel %vm584, %v585, %v544
    %v587 = vshrl.u32 %v586, 3
    %v588 = vand.u32 %v586, 7
    %v589 = vsub.s32 0, %v588
    %v590 = vsel %vm584, %v589, %v588
    %vm591 = vcmp.lt.s32.totalorder %v545, 0
    %v592 = vsub.s32 0, %v545
    %v593 = vsel %vm591, %v592, %v545
    %v594 = vshrl.u32 %v593, 3
    %v595 = vand.u32 %v593, 7
    %v596 = vsub.s32 0, %v595
    %v597 = vsel %vm591, %v596, %v595
    %vm598 = vcmp.lt.s32.totalorder %v546, 0
    %v599 = vsub.s32 0, %v546
    %v600 = vsel %vm598, %v599, %v546
    %v601 = vshrl.u32 %v600, 3
    %v602 = vand.u32 %v600, 7
    %v603 = vsub.s32 0, %v602
    %v604 = vsel %vm598, %v603, %v602
    %vm605 = vcmp.lt.s32.totalorder %v547, 0
    %v606 = vsub.s32 0, %v547
    %v607 = vsel %vm605, %v606, %v547
    %v608 = vshrl.u32 %v607, 3
    %v609 = vand.u32 %v607, 7
    %v610 = vsub.s32 0, %v609
    %v611 = vsel %vm605, %v610, %v609
    %vm612 = vcmp.lt.s32.totalorder %v548, 0
    %v613 = vsub.s32 0, %v548
    %v614 = vsel %vm612, %v613, %v548
    %v615 = vshrl.u32 %v614, 3
    %v616 = vand.u32 %v614, 7
    %v617 = vsub.s32 0, %v616
    %v618 = vsel %vm612, %v617, %v616
    %vm619 = vcmp.lt.s32.totalorder %v549, 0
    %v620 = vsub.s32 0, %v549
    %v621 = vsel %vm619, %v620, %v549
    %v622 = vshrl.u32 %v621, 3
    %v623 = vand.u32 %v621, 7
    %v624 = vsub.s32 0, %v623
    %v625 = vsel %vm619, %v624, %v623
    %vm626 = vcmp.lt.s32.totalorder %v550, 0
    %v627 = vsub.s32 0, %v550
    %v628 = vsel %vm626, %v627, %v550
    %v629 = vshrl.u32 %v628, 3
    %v630 = vand.u32 %v628, 7
    %v631 = vsub.s32 0, %v630
    %v632 = vsel %vm626, %v631, %v630
    %vm633 = vcmp.lt.s32.totalorder %v551, 0
    %v634 = vsub.s32 0, %v551
    %v635 = vsel %vm633, %v634, %v551
    %v636 = vshrl.u32 %v635, 3
    %v637 = vand.u32 %v635, 7
    %v638 = vsub.s32 0, %v637
    %v639 = vsel %vm633, %v638, %v637
    %vm640 = vcmp.lt.s32.totalorder %v552, 0
    %v641 = vsub.s32 0, %v552
    %v642 = vsel %vm640, %v641, %v552
    %v643 = vshrl.u32 %v642, 3
    %v644 = vand.u32 %v642, 7
    %v645 = vsub.s32 0, %v644
    %v646 = vsel %vm640, %v645, %v644
    %vm647 = vcmp.lt.s32.totalorder %v553, 0
    %v648 = vsub.s32 0, %v553
    %v649 = vsel %vm647, %v648, %v553
    %v650 = vshrl.u32 %v649, 3
    %v651 = vand.u32 %v649, 7
    %v652 = vsub.s32 0, %v651
    %v653 = vsel %vm647, %v652, %v651
    %vm654 = vcmp.lt.s32.totalorder %v554, 0
    %v655 = vsub.s32 0, %v554
    %v656 = vsel %vm654, %v655, %v554
    %v657 = vshrl.u32 %v656, 3
    %v658 = vand.u32 %v656, 7
    %v659 = vsub.s32 0, %v658
    %v660 = vsel %vm654, %v659, %v658
    %vm661 = vcmp.lt.s32.totalorder %v555, 0
    %v662 = vsub.s32 0, %v555
    %v663 = vsel %vm661, %v662, %v555
    %v664 = vshrl.u32 %v663, 3
    %v665 = vand.u32 %v663, 7
    %v666 = vsub.s32 0, %v665
    %v667 = vsel %vm661, %v666, %v665
    %vm668 = vcmp.ne.s32.totalorder %v562, 0
    %vm669 = vcmp.ne.s32.totalorder %v569, 0
    %vm670 = vcmp.ne.s32.totalorder %v576, 0
    %vm671 = vcmp.ne.s32.totalorder %v583, 0
    %vm672 = vcmp.ne.s32.totalorder %v590, 0
    %vm673 = vcmp.ne.s32.totalorder %v597, 0
    %vm674 = vcmp.ne.s32.totalorder %v604, 0
    %vm675 = vcmp.ne.s32.totalorder %v611, 0
    %vm676 = vcmp.ne.s32.totalorder %v618, 0
    %vm677 = vcmp.ne.s32.totalorder %v625, 0
    %vm678 = vcmp.ne.s32.totalorder %v632, 0
    %vm679 = vcmp.ne.s32.totalorder %v639, 0
    %vm680 = vcmp.ne.s32.totalorder %v646, 0
    %vm681 = vcmp.ne.s32.totalorder %v653, 0
    %vm682 = vcmp.ne.s32.totalorder %v660, 0
    %vm683 = vcmp.ne.s32.totalorder %v667, 0
    %vm684 = vcmp.lt.s32.totalorder %v562, 0
    %vm685 = vcmp.lt.s32.totalorder %v569, 0
    %vm686 = vcmp.lt.s32.totalorder %v576, 0
    %vm687 = vcmp.lt.s32.totalorder %v583, 0
    %vm688 = vcmp.lt.s32.totalorder %v590, 0
    %vm689 = vcmp.lt.s32.totalorder %v597, 0
    %vm690 = vcmp.lt.s32.totalorder %v604, 0
    %vm691 = vcmp.lt.s32.totalorder %v611, 0
    %vm692 = vcmp.lt.s32.totalorder %v618, 0
    %vm693 = vcmp.lt.s32.totalorder %v625, 0
    %vm694 = vcmp.lt.s32.totalorder %v632, 0
    %vm695 = vcmp.lt.s32.totalorder %v639, 0
    %vm696 = vcmp.lt.s32.totalorder %v646, 0
    %vm697 = vcmp.lt.s32.totalorder %v653, 0
    %vm698 = vcmp.lt.s32.totalorder %v660, 0
    %vm699 = vcmp.lt.s32.totalorder %v667, 0
    %vm700 = vmand %vm684, %vm668
    %vm701 = vmand %vm685, %vm669
    %vm702 = vmand %vm686, %vm670
    %vm703 = vmand %vm687, %vm671
    %vm704 = vmand %vm688, %vm672
    %vm705 = vmand %vm689, %vm673
    %vm706 = vmand %vm690, %vm674
    %vm707 = vmand %vm691, %vm675
    %vm708 = vmand %vm692, %vm676
    %vm709 = vmand %vm693, %vm677
    %vm710 = vmand %vm694, %vm678
    %vm711 = vmand %vm695, %vm679
    %vm712 = vmand %vm696, %vm680
    %vm713 = vmand %vm697, %vm681
    %vm714 = vmand %vm698, %vm682
    %vm715 = vmand %vm699, %vm683
    %v716 = vadd.s32 %v562, 8
    %v717 = vadd.s32 %v569, 8
    %v718 = vadd.s32 %v576, 8
    %v719 = vadd.s32 %v583, 8
    %v720 = vadd.s32 %v590, 8
    %v721 = vadd.s32 %v597, 8
    %v722 = vadd.s32 %v604, 8
    %v723 = vadd.s32 %v611, 8
    %v724 = vadd.s32 %v618, 8
    %v725 = vadd.s32 %v625, 8
    %v726 = vadd.s32 %v632, 8
    %v727 = vadd.s32 %v639, 8
    %v728 = vadd.s32 %v646, 8
    %v729 = vadd.s32 %v653, 8
    %v730 = vadd.s32 %v660, 8
    %v731 = vadd.s32 %v667, 8
    %v732 = vsel %vm700, %v716, %v562
    %v733 = vsel %vm701, %v717, %v569
    %v734 = vsel %vm702, %v718, %v576
    %v735 = vsel %vm703, %v719, %v583
    %v736 = vsel %vm704, %v720, %v590
    %v737 = vsel %vm705, %v721, %v597
    %v738 = vsel %vm706, %v722, %v604
    %v739 = vsel %vm707, %v723, %v611
    %v740 = vsel %vm708, %v724, %v618
    %v741 = vsel %vm709, %v725, %v625
    %v742 = vsel %vm710, %v726, %v632
    %v743 = vsel %vm711, %v727, %v639
    %v744 = vsel %vm712, %v728, %v646
    %v745 = vsel %vm713, %v729, %v653
    %v746 = vsel %vm714, %v730, %v660
    %v747 = vsel %vm715, %v731, %v667
    %v748 = vlaneseq
    %v749 = vand.u32 %v748, 127
    %vm750 = vcmp.lt.s32.totalorder %v749, 0
    %v751 = vsub.s32 0, %v749
    %v752 = vsel %vm750, %v751, %v749
    %v753 = vshrl.u32 %v752, 3
    %v754 = vand.u32 %v752, 7
    %v755 = vsub.s32 0, %v754
    %v756 = vsel %vm750, %v755, %v754
    %vm757 = vcmp.ne.s32.totalorder %v756, 0
    %vm758 = vcmp.lt.s32.totalorder %v756, 0
    %vm759 = vmand %vm758, %vm757
    %v760 = vadd.s32 %v756, 8
    %v761 = vsel %vm759, %v760, %v756
    %vm762 = vcmp.eq.s32.totalorder %v732, %v761
    %vm763 = vcmp.eq.s32.totalorder %v733, %v761
    %vm764 = vcmp.eq.s32.totalorder %v734, %v761
    %vm765 = vcmp.eq.s32.totalorder %v735, %v761
    %vm766 = vcmp.eq.s32.totalorder %v736, %v761
    %vm767 = vcmp.eq.s32.totalorder %v737, %v761
    %vm768 = vcmp.eq.s32.totalorder %v738, %v761
    %vm769 = vcmp.eq.s32.totalorder %v739, %v761
    %vm770 = vcmp.eq.s32.totalorder %v740, %v761
    %vm771 = vcmp.eq.s32.totalorder %v741, %v761
    %vm772 = vcmp.eq.s32.totalorder %v742, %v761
    %vm773 = vcmp.eq.s32.totalorder %v743, %v761
    %vm774 = vcmp.eq.s32.totalorder %v744, %v761
    %vm775 = vcmp.eq.s32.totalorder %v745, %v761
    %vm776 = vcmp.eq.s32.totalorder %v746, %v761
    %vm777 = vcmp.eq.s32.totalorder %v747, %v761
    %v778 = vsel %vm762, 1, 0
    %v779 = vsel %vm763, 1, 0
    %v780 = vsel %vm764, 1, 0
    %v781 = vsel %vm765, 1, 0
    %v782 = vsel %vm766, 1, 0
    %v783 = vsel %vm767, 1, 0
    %v784 = vsel %vm768, 1, 0
    %v785 = vsel %vm769, 1, 0
    %v786 = vsel %vm770, 1, 0
    %v787 = vsel %vm771, 1, 0
    %v788 = vsel %vm772, 1, 0
    %v789 = vsel %vm773, 1, 0
    %v790 = vsel %vm774, 1, 0
    %v791 = vsel %vm775, 1, 0
    %v792 = vsel %vm776, 1, 0
    %v793 = vsel %vm777, 1, 0
    %v794 = vcvt.s32.f32 %v778
    %v795 = vcvt.s32.f32 %v779
    %v796 = vcvt.s32.f32 %v780
    %v797 = vcvt.s32.f32 %v781
    %v798 = vcvt.s32.f32 %v782
    %v799 = vcvt.s32.f32 %v783
    %v800 = vcvt.s32.f32 %v784
    %v801 = vcvt.s32.f32 %v785
    %v802 = vcvt.s32.f32 %v786
    %v803 = vcvt.s32.f32 %v787
    %v804 = vcvt.s32.f32 %v788
    %v805 = vcvt.s32.f32 %v789
    %v806 = vcvt.s32.f32 %v790
    %v807 = vcvt.s32.f32 %v791
    %v808 = vcvt.s32.f32 %v792
    %v809 = vcvt.s32.f32 %v793
    %v810 = vpack.c.bf16 %v795, %v794
    %v811 = vpack.c.bf16 %v797, %v796
    %v812 = vpack.c.bf16 %v799, %v798
    %v813 = vpack.c.bf16 %v801, %v800
    %v814 = vpack.c.bf16 %v803, %v802
    %v815 = vpack.c.bf16 %v805, %v804
    %v816 = vpack.c.bf16 %v807, %v806
    %v817 = vpack.c.bf16 %v809, %v808
    %vm818 = vcmask 130048
    %v819 = vsel %vm818, %v396, 0.0
    %v820 = vsel %vm818, %v401, 0.0
    %v821 = vadd.f32 %v819, %v820
    %v822 = vsel %vm818, %v406, 0.0
    %v823 = vadd.f32 %v821, %v822
    %v824 = vsel %vm818, %v411, 0.0
    %v825 = vadd.f32 %v823, %v824
    %v826 = vrot.slane %v825, 4
    %v827 = vadd.f32 %v825, %v826
    %v828 = vrot.slane %v827, 2
    %v829 = vadd.f32 %v827, %v828
    %v830 = vrot.slane %v829, 1
    %v831 = vadd.f32 %v829, %v830
    %832 = vxpose.xlu0.b32.start [1/16] %v831, 128
    %833 = vxpose.xlu0.b32.cont [2/16] 0.0, 128
    %834 = vxpose.xlu0.b32.cont [3/16] 0.0, 128
    %835 = vxpose.xlu0.b32.cont [4/16] 0.0, 128
    %836 = vxpose.xlu0.b32.cont [5/16] 0.0, 128
    %837 = vxpose.xlu0.b32.cont [6/16] 0.0, 128
    %838 = vxpose.xlu0.b32.cont [7/16] 0.0, 128
    %839 = vxpose.xlu0.b32.cont [8/16] 0.0, 128
    %840 = vxpose.xlu0.b32.cont [9/16] 0.0, 128
    %841 = vxpose.xlu0.b32.cont [10/16] 0.0, 128
    %842 = vxpose.xlu0.b32.cont [11/16] 0.0, 128
    %843 = vxpose.xlu0.b32.cont [12/16] 0.0, 128
    %844 = vxpose.xlu0.b32.cont [13/16] 0.0, 128
    %845 = vxpose.xlu0.b32.cont [14/16] 0.0, 128
    %846 = vxpose.xlu0.b32.cont [15/16] 0.0, 128
    %847 = vxpose.xlu0.b32.end [16/16] 0.0, 128
    %v848 = vpop.trf.xlu0
    %v849 = vpop.trf.xlu0
    %v850 = vpop.trf.xlu0
    %v851 = vpop.trf.xlu0
    %v852 = vpop.trf.xlu0
    %v853 = vpop.trf.xlu0
    %v854 = vpop.trf.xlu0
    %v855 = vpop.trf.xlu0
    %v856 = vpop.trf.xlu0
    %v857 = vpop.trf.xlu0
    %v858 = vpop.trf.xlu0
    %v859 = vpop.trf.xlu0
    %v860 = vpop.trf.xlu0
    %v861 = vpop.trf.xlu0
    %v862 = vpop.trf.xlu0
    %v863 = vpop.trf.xlu0
    %v864 = vld [vmem:[%s3] sm:$0xff]
    %v865 = vld [vmem:[%s3 + $0x8] sm:$0xff]
    %867 = vset.pattern.permute.xlu0 0
    %868 = vperm.xlu0 %867, %v848
    %v869 = vpop.permute.xlu0 %868
    %872 = vset.pattern.permute.xlu0 0
    %873 = vperm.xlu0 %872, %v849
    %v874 = vpop.permute.xlu0 %873
    %v876 = vmul.f32 %v869, %v864
    %v877 = vmul.f32 %v874, %v865
    %v878 = vmax.f32 %v876, 0.0
    %v879 = vmax.f32 %v877, 0.0
    %v880 = vsel %vm818, %v878, -inf
    %881 = vmax.xlane.f32.xlu0 %v880
    %v882 = vpop.xlane.xlu0 %881
    %v883 = vsel %vm818, %v879, -inf
    %884 = vmax.xlane.f32.xlu0 %v883
    %v885 = vpop.xlane.xlu0 %884
    %v886 = vsub.f32 %v878, %v882
    %v887 = vsub.f32 %v879, %v885
    %v888 = vmul.f32 %v886, 1.442695
    %v889 = vpow.pop %v888
    %v890 = vmul.f32 %v887, 1.442695
    %v891 = vpow.pop %v890
    %v892 = vsel %vm818, %v889, 0.0
    %893 = vadd.xlane.f32.xlu0 %v892
    %v894 = vpop.xlane.xlu0 %893
    %v895 = vsel %vm818, %v891, 0.0
    %896 = vadd.xlane.f32.xlu0 %v895
    %v897 = vpop.xlane.xlu0 %896
    %v898 = vrcp.pop %v894
    %v899 = vmul.f32 %v889, %v898
    %v900 = vrcp.pop %v897
    %v901 = vmul.f32 %v891, %v900
    %902 = vxpose.xlu0.b32.start [1/16] %v501, 128
    %903 = vxpose.xlu0.b32.cont [2/16] %v506, 128
    %904 = vxpose.xlu0.b32.cont [3/16] %v511, 128
    %905 = vxpose.xlu0.b32.cont [4/16] %v516, 128
    %906 = vxpose.xlu0.b32.cont [5/16] 0.0, 128
    %907 = vxpose.xlu0.b32.cont [6/16] 0.0, 128
    %908 = vxpose.xlu0.b32.cont [7/16] 0.0, 128
    %909 = vxpose.xlu0.b32.cont [8/16] 0.0, 128
    %910 = vxpose.xlu0.b32.cont [9/16] 0.0, 128
    %911 = vxpose.xlu0.b32.cont [10/16] 0.0, 128
    %912 = vxpose.xlu0.b32.cont [11/16] 0.0, 128
    %913 = vxpose.xlu0.b32.cont [12/16] 0.0, 128
    %914 = vxpose.xlu0.b32.cont [13/16] 0.0, 128
    %915 = vxpose.xlu0.b32.cont [14/16] 0.0, 128
    %916 = vxpose.xlu0.b32.cont [15/16] 0.0, 128
    %917 = vxpose.xlu0.b32.end [16/16] 0.0, 128
    %v918 = vpop.trf.xlu0
    %v919 = vpop.trf.xlu0
    %v920 = vpop.trf.xlu0
    %v921 = vpop.trf.xlu0
    %v922 = vpop.trf.xlu0
    %v923 = vpop.trf.xlu0
    %v924 = vpop.trf.xlu0
    %v925 = vpop.trf.xlu0
    %v926 = vpop.trf.xlu0
    %v927 = vpop.trf.xlu0
    %v928 = vpop.trf.xlu0
    %v929 = vpop.trf.xlu0
    %v930 = vpop.trf.xlu0
    %v931 = vpop.trf.xlu0
    %v932 = vpop.trf.xlu0
    %v933 = vpop.trf.xlu0
    %vm934 = vcmask 261120
    %v936 = vsel %vm934, %v918, 0
    %v939 = vsel %vm934, %v919, 0
    %941 = vmatprep.subr.mxu0 0.0
    %942 = vmatpush1.msra.mxu0 %v501
    %943 = vmatprep.subr.mxu0 0.0
    %944 = vmatpush1.msra.mxu0 %v506
    %945 = vmatprep.subr.mxu0 0.0
    %946 = vmatpush1.msra.mxu0 %v511
    %947 = vmatprep.subr.mxu0 0.0
    %948 = vmatpush1.msra.mxu0 %v516
    %949 = vmatprep.subr.mxu0 0.0
    %950 = vmatpush1.msra.mxu0 0.0
    %951 = vmatprep.subr.mxu0 0.0
    %952 = vmatpush1.msra.mxu0 0.0
    %953 = vmatprep.subr.mxu0 0.0
    %954 = vmatpush1.msra.mxu0 0.0
    %955 = vmatprep.subr.mxu0 0.0
    %956 = vmatpush1.msra.mxu0 0.0
    %957 = vmatprep.subr.mxu0 0.0
    %958 = vmatpush1.msra.mxu0 0.0
    %959 = vmatprep.subr.mxu0 0.0
    %960 = vmatpush1.msra.mxu0 0.0
    %961 = vmatprep.subr.mxu0 0.0
    %962 = vmatpush1.msra.mxu0 0.0
    %963 = vmatprep.subr.mxu0 0.0
    %964 = vmatpush1.msra.mxu0 0.0
    %965 = vmatprep.subr.mxu0 0.0
    %966 = vmatpush1.msra.mxu0 0.0
    %967 = vmatprep.subr.mxu0 0.0
    %968 = vmatpush1.msra.mxu0 0.0
    %969 = vmatprep.subr.mxu0 0.0
    %970 = vmatpush1.msra.mxu0 0.0
    %971 = vmatprep.subr.mxu0 0.0
    %972 = vmatpush1.msra.mxu0 0.0
    %973 = vmatprep.subr.mxu0 0.0
    %974 = vmatpush1.msra.mxu0 0.0
    %975 = vmatprep.subr.mxu0 0.0
    %976 = vmatpush1.msra.mxu0 0.0
    %977 = vmatprep.subr.mxu0 0.0
    %978 = vmatpush1.msra.mxu0 0.0
    %979 = vmatprep.subr.mxu0 0.0
    %980 = vmatpush1.msra.mxu0 0.0
    %981 = vmatprep.subr.mxu0 0.0
    %982 = vmatpush1.msra.mxu0 0.0
    %983 = vmatprep.subr.mxu0 0.0
    %984 = vmatpush1.msra.mxu0 0.0
    %985 = vmatprep.subr.mxu0 0.0
    %986 = vmatpush1.msra.mxu0 0.0
    %987 = vmatprep.subr.mxu0 0.0
    %988 = vmatpush1.msra.mxu0 0.0
    %989 = vmatprep.subr.mxu0 0.0
    %990 = vmatpush1.msra.mxu0 0.0
    %991 = vmatprep.subr.mxu0 0.0
    %992 = vmatpush1.msra.mxu0 0.0
    %993 = vmatprep.subr.mxu0 0.0
    %994 = vmatpush1.msra.mxu0 0.0
    %995 = vmatprep.subr.mxu0 0.0
    %996 = vmatpush1.msra.mxu0 0.0
    %997 = vmatprep.subr.mxu0 0.0
    %998 = vmatpush1.msra.mxu0 0.0
    %999 = vmatprep.subr.mxu0 0.0
    %1000 = vmatpush1.msra.mxu0 0.0
    %1001 = vmatprep.subr.mxu0 0.0
    %1002 = vmatpush1.msra.mxu0 0.0
    %1003 = vmatprep.subr.mxu0 0.0
    %1004 = vmatpush1.msra.mxu0 0.0
    %1005 = vmatprep.mubr.f32.mxu0 0.0
    %1006 = vmatmul.mubr.f32.gmra.mrb[0].mxu0 %v936
    %v1007 = vpop.f32.mrb[0].mxu0
    %v1008 = vadd.f32 0.0, %v1007
    %v1009 = vpop.f32.mrb[0].mxu0
    %1010 = vmatprep.mubr.f32.mxu0 0.0
    %1011 = vmatmul.mubr.f32.gmra.mrb[0].mxu0 %v939
    %v1012 = vpop.f32.mrb[0].mxu0
    %v1013 = vadd.f32 0.0, %v1012
    %v1014 = vpop.f32.mrb[0].mxu0
    %1015 = vdwg.mxu0
    %v1016 = vmul.f32 %v1008, 0.17677669
    %v1017 = vmul.f32 %v1013, 0.17677669
    %v1018 = vmax.f32 %v1016, 0.0
    %v1019 = vmax.f32 %v1017, 0.0
    %v1020 = vsel %vm818, %v1018, -inf
    %1021 = vmax.xlane.f32.xlu0 %v1020
    %v1022 = vpop.xlane.xlu0 %1021
    %v1023 = vsel %vm818, %v1019, -inf
    %1024 = vmax.xlane.f32.xlu0 %v1023
    %v1025 = vpop.xlane.xlu0 %1024
    %v1026 = vsub.f32 %v1018, %v1022
    %v1027 = vsub.f32 %v1019, %v1025
    %v1028 = vmul.f32 %v1026, 1.442695
    %v1029 = vpow.pop %v1028
    %v1030 = vmul.f32 %v1027, 1.442695
    %v1031 = vpow.pop %v1030
    %v1032 = vsel %vm818, %v1029, 0.0
    %1033 = vadd.xlane.f32.xlu0 %v1032
    %v1034 = vpop.xlane.xlu0 %1033
    %v1035 = vsel %vm818, %v1031, 0.0
    %1036 = vadd.xlane.f32.xlu0 %v1035
    %v1037 = vpop.xlane.xlu0 %1036
    %v1038 = vrcp.pop %v1034
    %v1039 = vmul.f32 %v1029, %v1038
    %v1040 = vrcp.pop %v1037
    %v1041 = vmul.f32 %v1031, %v1040
    %s1042 = sld [smem:[#allocation2]]
    %v1043 = vstv %s1042
    %v1044 = vmul.f32 %v1043, %v899
    %v1045 = vmul.f32 %v1043, %v901
    %s1046 = sld [smem:[#allocation2 + $0x1]]
    %v1047 = vstv %s1046
    %v1048 = vmul.f32 %v1047, %v1039
    %v1049 = vmul.f32 %v1047, %v1041
    %v1050 = vadd.f32 %v1044, %v1048
    %v1051 = vadd.f32 %v1045, %v1049
    %s1052 = sld [smem:[#allocation2 + $0x2]]
    %v1053 = vstv %s1052
    %v1054 = vadd.f32 %v1050, %v1053
    %v1055 = vadd.f32 %v1051, %v1053
    %v1056 = vsel %vm818, %v1054, -inf
    %1057 = vmax.xlane.f32.xlu0 %v1056
    %v1058 = vpop.xlane.xlu0 %1057
    %v1059 = vsel %vm818, %v1055, -inf
    %1060 = vmax.xlane.f32.xlu0 %v1059
    %v1061 = vpop.xlane.xlu0 %1060
    %v1062 = vsub.f32 %v1054, %v1058
    %v1063 = vsub.f32 %v1055, %v1061
    %v1064 = vmul.f32 %v1062, 1.442695
    %v1065 = vpow.pop %v1064
    %v1066 = vmul.f32 %v1063, 1.442695
    %v1067 = vpow.pop %v1066
    %v1068 = vsel %vm818, %v1065, 0.0
    %1069 = vadd.xlane.f32.xlu0 %v1068
    %v1070 = vpop.xlane.xlu0 %1069
    %v1071 = vsel %vm818, %v1067, 0.0
    %1072 = vadd.xlane.f32.xlu0 %v1071
    %v1073 = vpop.xlane.xlu0 %1072
    %v1074 = vrcp.pop %v1070
    %v1075 = vmul.f32 %v1065, %v1074
    %v1076 = vrcp.pop %v1073
    %v1077 = vmul.f32 %v1067, %v1076
    %1079 = vset.pattern.permute.xlu0 0
    %1080 = vperm.xlu0 %1079, %v1075
    %v1081 = vpop.permute.xlu0 %1080
    %1084 = vset.pattern.permute.xlu0 0
    %1085 = vperm.xlu0 %1084, %v1077
    %v1086 = vpop.permute.xlu0 %1085
    %vm1088 = vcmp.gt.f32.partialorder %v1081, %v1075
    %vm1089 = vcmp.gt.f32.partialorder %v1086, %v1077
    %v1090 = vsel %vm1088, 1, 0
    %v1091 = vsel %vm1089, 1, 0
    %v1092 = vcvt.s32.f32 %v1090
    %v1093 = vcvt.s32.f32 %v1091
    %1094 = vset.pattern.permute.xlu0 1
    %1095 = vperm.xlu0 %1094, %v1075
    %v1096 = vpop.permute.xlu0 %1095
    %1098 = vset.pattern.permute.xlu0 1
    %1099 = vperm.xlu0 %1098, %v1077
    %v1100 = vpop.permute.xlu0 %1099
    %vm1102 = vcmp.gt.f32.partialorder %v1096, %v1075
    %vm1103 = vcmp.gt.f32.partialorder %v1100, %v1077
    %v1104 = vsel %vm1102, 1, 0
    %v1105 = vsel %vm1103, 1, 0
    %v1106 = vcvt.s32.f32 %v1104
    %v1107 = vcvt.s32.f32 %v1105
    %v1108 = vadd.f32 %v1092, %v1106
    %v1109 = vadd.f32 %v1093, %v1107
    %1110 = vset.pattern.permute.xlu0 2
    %1111 = vperm.xlu0 %1110, %v1075
    %v1112 = vpop.permute.xlu0 %1111
    %1114 = vset.pattern.permute.xlu0 2
    %1115 = vperm.xlu0 %1114, %v1077
    %v1116 = vpop.permute.xlu0 %1115
    %vm1118 = vcmp.gt.f32.partialorder %v1112, %v1075
    %vm1119 = vcmp.gt.f32.partialorder %v1116, %v1077
    %v1120 = vsel %vm1118, 1, 0
    %v1121 = vsel %vm1119, 1, 0
    %v1122 = vcvt.s32.f32 %v1120
    %v1123 = vcvt.s32.f32 %v1121
    %v1124 = vadd.f32 %v1108, %v1122
    %v1125 = vadd.f32 %v1109, %v1123
    %1126 = vset.pattern.permute.xlu0 3
    %1127 = vperm.xlu0 %1126, %v1075
    %v1128 = vpop.permute.xlu0 %1127
    %1130 = vset.pattern.permute.xlu0 3
    %1131 = vperm.xlu0 %1130, %v1077
    %v1132 = vpop.permute.xlu0 %1131
    %vm1134 = vcmp.gt.f32.partialorder %v1128, %v1075
    %vm1135 = vcmp.gt.f32.partialorder %v1132, %v1077
    %v1136 = vsel %vm1134, 1, 0
    %v1137 = vsel %vm1135, 1, 0
    %v1138 = vcvt.s32.f32 %v1136
    %v1139 = vcvt.s32.f32 %v1137
    %v1140 = vadd.f32 %v1124, %v1138
    %v1141 = vadd.f32 %v1125, %v1139
    %1142 = vset.pattern.permute.xlu0 4
    %1143 = vperm.xlu0 %1142, %v1075
    %v1144 = vpop.permute.xlu0 %1143
    %1146 = vset.pattern.permute.xlu0 4
    %1147 = vperm.xlu0 %1146, %v1077
    %v1148 = vpop.permute.xlu0 %1147
    %vm1150 = vcmp.gt.f32.partialorder %v1144, %v1075
    %vm1151 = vcmp.gt.f32.partialorder %v1148, %v1077
    %v1152 = vsel %vm1150, 1, 0
    %v1153 = vsel %vm1151, 1, 0
    %v1154 = vcvt.s32.f32 %v1152
    %v1155 = vcvt.s32.f32 %v1153
    %1156 = vset.pattern.permute.xlu0 5
    %1157 = vperm.xlu0 %1156, %v1075
    %v1158 = vpop.permute.xlu0 %1157
    %1160 = vset.pattern.permute.xlu0 5
    %1161 = vperm.xlu0 %1160, %v1077
    %v1162 = vpop.permute.xlu0 %1161
    %vm1164 = vcmp.gt.f32.partialorder %v1158, %v1075
    %vm1165 = vcmp.gt.f32.partialorder %v1162, %v1077
    %v1166 = vsel %vm1164, 1, 0
    %v1167 = vsel %vm1165, 1, 0
    %v1168 = vcvt.s32.f32 %v1166
    %v1169 = vcvt.s32.f32 %v1167
    %v1170 = vadd.f32 %v1154, %v1168
    %v1171 = vadd.f32 %v1155, %v1169
    %1172 = vset.pattern.permute.xlu0 6
    %1173 = vperm.xlu0 %1172, %v1075
    %v1174 = vpop.permute.xlu0 %1173
    %1176 = vset.pattern.permute.xlu0 6
    %1177 = vperm.xlu0 %1176, %v1077
    %v1178 = vpop.permute.xlu0 %1177
    %vm1180 = vcmp.gt.f32.partialorder %v1174, %v1075
    %vm1181 = vcmp.gt.f32.partialorder %v1178, %v1077
    %v1182 = vsel %vm1180, 1, 0
    %v1183 = vsel %vm1181, 1, 0
    %v1184 = vcvt.s32.f32 %v1182
    %v1185 = vcvt.s32.f32 %v1183
    %v1186 = vadd.f32 %v1170, %v1184
    %v1187 = vadd.f32 %v1171, %v1185
    %1188 = vset.pattern.permute.xlu0 7
    %1189 = vperm.xlu0 %1188, %v1075
    %v1190 = vpop.permute.xlu0 %1189
    %1192 = vset.pattern.permute.xlu0 7
    %1193 = vperm.xlu0 %1192, %v1077
    %v1194 = vpop.permute.xlu0 %1193
    %vm1196 = vcmp.gt.f32.partialorder %v1190, %v1075
    %vm1197 = vcmp.gt.f32.partialorder %v1194, %v1077
    %v1198 = vsel %vm1196, 1, 0
    %v1199 = vsel %vm1197, 1, 0
    %v1200 = vcvt.s32.f32 %v1198
    %v1201 = vcvt.s32.f32 %v1199
    %v1202 = vadd.f32 %v1186, %v1200
    %v1203 = vadd.f32 %v1187, %v1201
    %1204 = vset.pattern.permute.xlu0 8
    %1205 = vperm.xlu0 %1204, %v1075
    %v1206 = vpop.permute.xlu0 %1205
    %1208 = vset.pattern.permute.xlu0 8
    %1209 = vperm.xlu0 %1208, %v1077
    %v1210 = vpop.permute.xlu0 %1209
    %vm1212 = vcmp.gt.f32.partialorder %v1206, %v1075
    %vm1213 = vcmp.gt.f32.partialorder %v1210, %v1077
    %v1214 = vsel %vm1212, 1, 0
    %v1215 = vsel %vm1213, 1, 0
    %v1216 = vcvt.s32.f32 %v1214
    %v1217 = vcvt.s32.f32 %v1215
    %1218 = vset.pattern.permute.xlu0 9
    %1219 = vperm.xlu0 %1218, %v1075
    %v1220 = vpop.permute.xlu0 %1219
    %1222 = vset.pattern.permute.xlu0 9
    %1223 = vperm.xlu0 %1222, %v1077
    %v1224 = vpop.permute.xlu0 %1223
    %vm1226 = vcmp.gt.f32.partialorder %v1220, %v1075
    %vm1227 = vcmp.gt.f32.partialorder %v1224, %v1077
    %v1228 = vsel %vm1226, 1, 0
    %v1229 = vsel %vm1227, 1, 0
    %v1230 = vcvt.s32.f32 %v1228
    %v1231 = vcvt.s32.f32 %v1229
    %v1232 = vadd.f32 %v1216, %v1230
    %v1233 = vadd.f32 %v1217, %v1231
    %1234 = vset.pattern.permute.xlu0 10
    %1235 = vperm.xlu0 %1234, %v1075
    %v1236 = vpop.permute.xlu0 %1235
    %1238 = vset.pattern.permute.xlu0 10
    %1239 = vperm.xlu0 %1238, %v1077
    %v1240 = vpop.permute.xlu0 %1239
    %vm1242 = vcmp.gt.f32.partialorder %v1236, %v1075
    %vm1243 = vcmp.gt.f32.partialorder %v1240, %v1077
    %v1244 = vsel %vm1242, 1, 0
    %v1245 = vsel %vm1243, 1, 0
    %v1246 = vcvt.s32.f32 %v1244
    %v1247 = vcvt.s32.f32 %v1245
    %v1248 = vadd.f32 %v1232, %v1246
    %v1249 = vadd.f32 %v1233, %v1247
    %1250 = vset.pattern.permute.xlu0 11
    %1251 = vperm.xlu0 %1250, %v1075
    %v1252 = vpop.permute.xlu0 %1251
    %1254 = vset.pattern.permute.xlu0 11
    %1255 = vperm.xlu0 %1254, %v1077
    %v1256 = vpop.permute.xlu0 %1255
    %vm1258 = vcmp.gt.f32.partialorder %v1252, %v1075
    %vm1259 = vcmp.gt.f32.partialorder %v1256, %v1077
    %v1260 = vsel %vm1258, 1, 0
    %v1261 = vsel %vm1259, 1, 0
    %v1262 = vcvt.s32.f32 %v1260
    %v1263 = vcvt.s32.f32 %v1261
    %v1264 = vadd.f32 %v1248, %v1262
    %v1265 = vadd.f32 %v1249, %v1263
    %1266 = vset.pattern.permute.xlu0 12
    %1267 = vperm.xlu0 %1266, %v1075
    %v1268 = vpop.permute.xlu0 %1267
    %1270 = vset.pattern.permute.xlu0 12
    %1271 = vperm.xlu0 %1270, %v1077
    %v1272 = vpop.permute.xlu0 %1271
    %vm1274 = vcmp.gt.f32.partialorder %v1268, %v1075
    %vm1275 = vcmp.gt.f32.partialorder %v1272, %v1077
    %v1276 = vsel %vm1274, 1, 0
    %v1277 = vsel %vm1275, 1, 0
    %v1278 = vcvt.s32.f32 %v1276
    %v1279 = vcvt.s32.f32 %v1277
    %1280 = vset.pattern.permute.xlu0 13
    %1281 = vperm.xlu0 %1280, %v1075
    %v1282 = vpop.permute.xlu0 %1281
    %1284 = vset.pattern.permute.xlu0 13
    %1285 = vperm.xlu0 %1284, %v1077
    %v1286 = vpop.permute.xlu0 %1285
    %vm1288 = vcmp.gt.f32.partialorder %v1282, %v1075
    %vm1289 = vcmp.gt.f32.partialorder %v1286, %v1077
    %v1290 = vsel %vm1288, 1, 0
    %v1291 = vsel %vm1289, 1, 0
    %v1292 = vcvt.s32.f32 %v1290
    %v1293 = vcvt.s32.f32 %v1291
    %v1294 = vadd.f32 %v1278, %v1292
    %v1295 = vadd.f32 %v1279, %v1293
    %1296 = vset.pattern.permute.xlu0 14
    %1297 = vperm.xlu0 %1296, %v1075
    %v1298 = vpop.permute.xlu0 %1297
    %1300 = vset.pattern.permute.xlu0 14
    %1301 = vperm.xlu0 %1300, %v1077
    %v1302 = vpop.permute.xlu0 %1301
    %vm1304 = vcmp.gt.f32.partialorder %v1298, %v1075
    %vm1305 = vcmp.gt.f32.partialorder %v1302, %v1077
    %v1306 = vsel %vm1304, 1, 0
    %v1307 = vsel %vm1305, 1, 0
    %v1308 = vcvt.s32.f32 %v1306
    %v1309 = vcvt.s32.f32 %v1307
    %v1310 = vadd.f32 %v1294, %v1308
    %v1311 = vadd.f32 %v1295, %v1309
    %1312 = vset.pattern.permute.xlu0 15
    %1313 = vperm.xlu0 %1312, %v1075
    %v1314 = vpop.permute.xlu0 %1313
    %1316 = vset.pattern.permute.xlu0 15
    %1317 = vperm.xlu0 %1316, %v1077
    %v1318 = vpop.permute.xlu0 %1317
    %vm1320 = vcmp.gt.f32.partialorder %v1314, %v1075
    %vm1321 = vcmp.gt.f32.partialorder %v1318, %v1077
    %v1322 = vsel %vm1320, 1, 0
    %v1323 = vsel %vm1321, 1, 0
    %v1324 = vcvt.s32.f32 %v1322
    %v1325 = vcvt.s32.f32 %v1323
    %v1326 = vadd.f32 %v1310, %v1324
    %v1327 = vadd.f32 %v1311, %v1325
    %v1328 = vadd.f32 %v1140, %v1202
    %v1329 = vadd.f32 %v1141, %v1203
    %v1330 = vadd.f32 %v1264, %v1326
    %v1331 = vadd.f32 %v1265, %v1327
    %v1332 = vadd.f32 %v1328, %v1330
    %v1333 = vadd.f32 %v1329, %v1331
    %vm1334 = vcmp.lt.f32.partialorder %v1332, 12.0
    %vm1335 = vcmp.lt.f32.partialorder %v1333, 12.0
    %v1336 = vsel %vm1334, %v1075, 0.0
    %v1337 = vsel %vm1335, %v1077, 0.0
    %v1338 = vld [vmem:[%s6] sm:$0xff]
    %v1339 = vld [vmem:[%s6 + $0x8] sm:$0xff]
    %v1341 = vsel %vm818, %v1336, 0
    %v1344 = vsel %vm818, %v1337, 0
    %1346 = vmatprep.subr.mxu0 0.0
    %1347 = vmatpush1.msra.mxu0 %v1338
    %1348 = vmatprep.subr.mxu0 0.0
    %1349 = vmatpush1.msra.mxu0 %v1339
    %1350 = vmatprep.subr.mxu0 0.0
    %1351 = vmatpush1.msra.mxu0 0.0
    %1352 = vmatprep.subr.mxu0 0.0
    %1353 = vmatpush1.msra.mxu0 0.0
    %1354 = vmatprep.subr.mxu0 0.0
    %1355 = vmatpush1.msra.mxu0 0.0
    %1356 = vmatprep.subr.mxu0 0.0
    %1357 = vmatpush1.msra.mxu0 0.0
    %1358 = vmatprep.subr.mxu0 0.0
    %1359 = vmatpush1.msra.mxu0 0.0
    %1360 = vmatprep.subr.mxu0 0.0
    %1361 = vmatpush1.msra.mxu0 0.0
    %1362 = vmatprep.subr.mxu0 0.0
    %1363 = vmatpush1.msra.mxu0 0.0
    %1364 = vmatprep.subr.mxu0 0.0
    %1365 = vmatpush1.msra.mxu0 0.0
    %1366 = vmatprep.subr.mxu0 0.0
    %1367 = vmatpush1.msra.mxu0 0.0
    %1368 = vmatprep.subr.mxu0 0.0
    %1369 = vmatpush1.msra.mxu0 0.0
    %1370 = vmatprep.subr.mxu0 0.0
    %1371 = vmatpush1.msra.mxu0 0.0
    %1372 = vmatprep.subr.mxu0 0.0
    %1373 = vmatpush1.msra.mxu0 0.0
    %1374 = vmatprep.subr.mxu0 0.0
    %1375 = vmatpush1.msra.mxu0 0.0
    %1376 = vmatprep.subr.mxu0 0.0
    %1377 = vmatpush1.msra.mxu0 0.0
    %1378 = vmatprep.subr.mxu0 0.0
    %1379 = vmatpush1.msra.mxu0 0.0
    %1380 = vmatprep.subr.mxu0 0.0
    %1381 = vmatpush1.msra.mxu0 0.0
    %1382 = vmatprep.subr.mxu0 0.0
    %1383 = vmatpush1.msra.mxu0 0.0
    %1384 = vmatprep.subr.mxu0 0.0
    %1385 = vmatpush1.msra.mxu0 0.0
    %1386 = vmatprep.subr.mxu0 0.0
    %1387 = vmatpush1.msra.mxu0 0.0
    %1388 = vmatprep.subr.mxu0 0.0
    %1389 = vmatpush1.msra.mxu0 0.0
    %1390 = vmatprep.subr.mxu0 0.0
    %1391 = vmatpush1.msra.mxu0 0.0
    %1392 = vmatprep.subr.mxu0 0.0
    %1393 = vmatpush1.msra.mxu0 0.0
    %1394 = vmatprep.subr.mxu0 0.0
    %1395 = vmatpush1.msra.mxu0 0.0
    %1396 = vmatprep.subr.mxu0 0.0
    %1397 = vmatpush1.msra.mxu0 0.0
    %1398 = vmatprep.subr.mxu0 0.0
    %1399 = vmatpush1.msra.mxu0 0.0
    %1400 = vmatprep.subr.mxu0 0.0
    %1401 = vmatpush1.msra.mxu0 0.0
    %1402 = vmatprep.subr.mxu0 0.0
    %1403 = vmatpush1.msra.mxu0 0.0
    %1404 = vmatprep.subr.mxu0 0.0
    %1405 = vmatpush1.msra.mxu0 0.0
    %1406 = vmatprep.subr.mxu0 0.0
    %1407 = vmatpush1.msra.mxu0 0.0
    %1408 = vmatprep.subr.mxu0 0.0
    %1409 = vmatpush1.msra.mxu0 0.0
    %1410 = vmatprep.mubr.f32.mxu0 0.0
    %1411 = vmatmul.mubr.f32.gmra.mrb[0].mxu0 %v1341
    %v1412 = vpop.f32.mrb[0].mxu0
    %v1413 = vadd.f32 0.0, %v1412
    %v1414 = vpop.f32.mrb[0].mxu0
    %1415 = vmatprep.mubr.f32.mxu0 0.0
    %1416 = vmatmul.mubr.f32.gmra.mrb[0].mxu0 %v1344
    %v1417 = vpop.f32.mrb[0].mxu0
    %v1418 = vadd.f32 0.0, %v1417
    %v1419 = vpop.f32.mrb[0].mxu0
    %1420 = vdwg.mxu0
    %v1423 = vcombine.high %v1413, %v1413
    %v1425 = vunpack.c.l.s4 1966171168
    %v1426 = vunpack.c.0.s8 %v1425
    %v1427 = vlaneseq
    %v1428 = vshrl.u32 %v1427, 7
    %v1429 = vsub.s32 %v1426, %v1428
    %v1430 = vrot.slane %v1413, %v1429
    %v1432 = vunpack.c.l.s4 1966171168
    %v1433 = vunpack.c.0.s8 %v1432
    %v1434 = vlaneseq
    %v1435 = vshrl.u32 %v1434, 7
    %v1436 = vsub.s32 %v1433, %v1435
    %v1437 = vrot.slane %v1423, %v1436
    %v1438 = vcombine.high %v1430, %v1430
    %v1439 = vcombine.high %v1437, %v1437
    %v1441 = vunpack.c.l.s4 1966171168
    %v1442 = vunpack.c.0.s8 %v1441
    %v1443 = vlaneseq
    %v1444 = vshrl.u32 %v1443, 7
    %v1445 = vsub.s32 %v1442, %v1444
    %v1446 = vrot.slane %v1430, %v1445
    %v1448 = vunpack.c.l.s4 1966171168
    %v1449 = vunpack.c.0.s8 %v1448
    %v1450 = vlaneseq
    %v1451 = vshrl.u32 %v1450, 7
    %v1452 = vsub.s32 %v1449, %v1451
    %v1453 = vrot.slane %v1437, %v1452
    %v1455 = vunpack.c.l.s4 1966171168
    %v1456 = vunpack.c.0.s8 %v1455
    %v1457 = vlaneseq
    %v1458 = vshrl.u32 %v1457, 7
    %v1459 = vsub.s32 %v1456, %v1458
    %v1460 = vrot.slane %v1438, %v1459
    %v1462 = vunpack.c.l.s4 1966171168
    %v1463 = vunpack.c.0.s8 %v1462
    %v1464 = vlaneseq
    %v1465 = vshrl.u32 %v1464, 7
    %v1466 = vsub.s32 %v1463, %v1465
    %v1467 = vrot.slane %v1439, %v1466
    %v1468 = vcombine.high %v1446, %v1446
    %v1469 = vcombine.high %v1453, %v1453
    %v1470 = vcombine.high %v1460, %v1460
    %v1471 = vcombine.high %v1467, %v1467
    %v1472 = vcombine.high %v1418, %v1418
    %v1474 = vunpack.c.l.s4 1966171168
    %v1475 = vunpack.c.0.s8 %v1474
    %v1476 = vlaneseq
    %v1477 = vshrl.u32 %v1476, 7
    %v1478 = vsub.s32 %v1475, %v1477
    %v1479 = vrot.slane %v1418, %v1478
    %v1481 = vunpack.c.l.s4 1966171168
    %v1482 = vunpack.c.0.s8 %v1481
    %v1483 = vlaneseq
    %v1484 = vshrl.u32 %v1483, 7
    %v1485 = vsub.s32 %v1482, %v1484
    %v1486 = vrot.slane %v1472, %v1485
    %v1487 = vcombine.high %v1479, %v1479
    %v1488 = vcombine.high %v1486, %v1486
    %v1490 = vunpack.c.l.s4 1966171168
    %v1491 = vunpack.c.0.s8 %v1490
    %v1492 = vlaneseq
    %v1493 = vshrl.u32 %v1492, 7
    %v1494 = vsub.s32 %v1491, %v1493
    %v1495 = vrot.slane %v1479, %v1494
    %v1497 = vunpack.c.l.s4 1966171168
    %v1498 = vunpack.c.0.s8 %v1497
    %v1499 = vlaneseq
    %v1500 = vshrl.u32 %v1499, 7
    %v1501 = vsub.s32 %v1498, %v1500
    %v1502 = vrot.slane %v1486, %v1501
    %v1504 = vunpack.c.l.s4 1966171168
    %v1505 = vunpack.c.0.s8 %v1504
    %v1506 = vlaneseq
    %v1507 = vshrl.u32 %v1506, 7
    %v1508 = vsub.s32 %v1505, %v1507
    %v1509 = vrot.slane %v1487, %v1508
    %v1511 = vunpack.c.l.s4 1966171168
    %v1512 = vunpack.c.0.s8 %v1511
    %v1513 = vlaneseq
    %v1514 = vshrl.u32 %v1513, 7
    %v1515 = vsub.s32 %v1512, %v1514
    %v1516 = vrot.slane %v1488, %v1515
    %v1517 = vcombine.high %v1495, %v1495
    %v1518 = vcombine.high %v1502, %v1502
    %v1519 = vcombine.high %v1509, %v1509
    %v1520 = vcombine.high %v1516, %v1516
    %v1521 = vlaneseq
    %v1522 = vshrl.u32 %v1521, 7
    %v1523 = vsub.s32 0, %v1522
    %v1524 = vrot.slane %v1446, %v1523
    %v1525 = vlaneseq
    %v1526 = vshrl.u32 %v1525, 7
    %v1527 = vsub.s32 0, %v1526
    %v1528 = vrot.slane %v1460, %v1527
    %v1529 = vlaneseq
    %v1530 = vshrl.u32 %v1529, 7
    %v1531 = vsub.s32 0, %v1530
    %v1532 = vrot.slane %v1468, %v1531
    %v1533 = vlaneseq
    %v1534 = vshrl.u32 %v1533, 7
    %v1535 = vsub.s32 0, %v1534
    %v1536 = vrot.slane %v1470, %v1535
    %v1537 = vlaneseq
    %v1538 = vshrl.u32 %v1537, 7
    %v1539 = vsub.s32 0, %v1538
    %v1540 = vrot.slane %v1453, %v1539
    %v1541 = vlaneseq
    %v1542 = vshrl.u32 %v1541, 7
    %v1543 = vsub.s32 0, %v1542
    %v1544 = vrot.slane %v1467, %v1543
    %v1545 = vlaneseq
    %v1546 = vshrl.u32 %v1545, 7
    %v1547 = vsub.s32 0, %v1546
    %v1548 = vrot.slane %v1469, %v1547
    %v1549 = vlaneseq
    %v1550 = vshrl.u32 %v1549, 7
    %v1551 = vsub.s32 0, %v1550
    %v1552 = vrot.slane %v1471, %v1551
    %v1553 = vlaneseq
    %v1554 = vshrl.u32 %v1553, 7
    %v1555 = vsub.s32 0, %v1554
    %v1556 = vrot.slane %v1495, %v1555
    %v1557 = vlaneseq
    %v1558 = vshrl.u32 %v1557, 7
    %v1559 = vsub.s32 0, %v1558
    %v1560 = vrot.slane %v1509, %v1559
    %v1561 = vlaneseq
    %v1562 = vshrl.u32 %v1561, 7
    %v1563 = vsub.s32 0, %v1562
    %v1564 = vrot.slane %v1517, %v1563
    %v1565 = vlaneseq
    %v1566 = vshrl.u32 %v1565, 7
    %v1567 = vsub.s32 0, %v1566
    %v1568 = vrot.slane %v1519, %v1567
    %v1569 = vlaneseq
    %v1570 = vshrl.u32 %v1569, 7
    %v1571 = vsub.s32 0, %v1570
    %v1572 = vrot.slane %v1502, %v1571
    %v1573 = vlaneseq
    %v1574 = vshrl.u32 %v1573, 7
    %v1575 = vsub.s32 0, %v1574
    %v1576 = vrot.slane %v1516, %v1575
    %v1577 = vlaneseq
    %v1578 = vshrl.u32 %v1577, 7
    %v1579 = vsub.s32 0, %v1578
    %v1580 = vrot.slane %v1518, %v1579
    %v1581 = vlaneseq
    %v1582 = vshrl.u32 %v1581, 7
    %v1583 = vsub.s32 0, %v1582
    %v1584 = vrot.slane %v1520, %v1583
    %v1601 = vpack.c.bf16 %v1528, %v1524
    %v1602 = vpack.c.bf16 %v1536, %v1532
    %v1603 = vpack.c.bf16 %v1544, %v1540
    %v1604 = vpack.c.bf16 %v1552, %v1548
    %v1605 = vpack.c.bf16 %v1560, %v1556
    %v1606 = vpack.c.bf16 %v1568, %v1564
    %v1607 = vpack.c.bf16 %v1576, %v1572
    %v1608 = vpack.c.bf16 %v1584, %v1580
    %v1609 = vmul.bf16 %v1601, %v810
    %v1610 = vmul.bf16 %v1602, %v811
    %v1611 = vmul.bf16 %v1603, %v812
    %v1612 = vmul.bf16 %v1604, %v813
    %v1613 = vmul.bf16 %v1605, %v814
    %v1614 = vmul.bf16 %v1606, %v815
    %v1615 = vmul.bf16 %v1607, %v816
    %v1616 = vmul.bf16 %v1608, %v817
    %v1617 = vpack.c.bf16 %v191, %v188
    %v1618 = vpack.c.bf16 %v199, %v196
    %1619 = vmatprep.subr.bf16.mxu0 0
    %1620 = vmatpush1.bf16.msra.mxu0 %v1609
    %1621 = vmatprep.subr.bf16.mxu0 0
    %1622 = vmatpush1.bf16.msra.mxu0 %v1610
    %1623 = vmatprep.subr.bf16.mxu0 0
    %1624 = vmatpush1.bf16.msra.mxu0 %v1611
    %1625 = vmatprep.subr.bf16.mxu0 0
    %1626 = vmatpush1.bf16.msra.mxu0 %v1612
    %1627 = vmatprep.subr.bf16.mxu0 0
    %1628 = vmatpush1.bf16.msra.mxu0 %v1613
    %1629 = vmatprep.subr.bf16.mxu0 0
    %1630 = vmatpush1.bf16.msra.mxu0 %v1614
    %1631 = vmatprep.subr.bf16.mxu0 0
    %1632 = vmatpush1.bf16.msra.mxu0 %v1615
    %1633 = vmatprep.subr.bf16.mxu0 0
    %1634 = vmatpush1.bf16.msra.mxu0 %v1616
    %1635 = vmatprep.subr.bf16.mxu0 0
    %1636 = vmatpush1.bf16.msra.mxu0 0
    %1637 = vmatprep.subr.bf16.mxu0 0
    %1638 = vmatpush1.bf16.msra.mxu0 0
    %1639 = vmatprep.subr.bf16.mxu0 0
    %1640 = vmatpush1.bf16.msra.mxu0 0
    %1641 = vmatprep.subr.bf16.mxu0 0
    %1642 = vmatpush1.bf16.msra.mxu0 0
    %1643 = vmatprep.subr.bf16.mxu0 0
    %1644 = vmatpush1.bf16.msra.mxu0 0
    %1645 = vmatprep.subr.bf16.mxu0 0
    %1646 = vmatpush1.bf16.msra.mxu0 0
    %1647 = vmatprep.subr.bf16.mxu0 0
    %1648 = vmatpush1.bf16.msra.mxu0 0
    %1649 = vmatprep.subr.bf16.mxu0 0
    %1650 = vmatpush1.bf16.msra.mxu0 0
    %1651 = vmatprep.mubr.bf16.mxu0 0
    %1652 = vmatmul.mubr.bf16.gmra.mrb[0].mxu0 %v1617
    %v1653 = vpop.f32.mrb[0].mxu0
    %v1654 = vadd.f32 0.0, %v1653
    %v1655 = vpop.f32.mrb[0].mxu0
    %v1656 = vpop.f32.mrb[0].mxu0
    %v1657 = vadd.f32 0.0, %v1656
    %v1658 = vpop.f32.mrb[0].mxu0
    %1659 = vmatprep.mubr.bf16.mxu0 0
    %1660 = vmatmul.mubr.bf16.gmra.mrb[0].mxu0 %v1618
    %v1661 = vpop.f32.mrb[0].mxu0
    %v1662 = vadd.f32 0.0, %v1661
    %v1663 = vpop.f32.mrb[0].mxu0
    %v1664 = vpop.f32.mrb[0].mxu0
    %v1665 = vadd.f32 0.0, %v1664
    %v1666 = vpop.f32.mrb[0].mxu0
    %1667 = vdwg.mxu0
    %v1668 = vpack.c.bf16 %v1657, %v1654
    %v1669 = vpack.c.bf16 %v1665, %v1662
    %v1670 = vld [vmem:[%s8] sm:$0xf]
    %v1671 = vld [vmem:[%s8 + $0x4] sm:$0xf]
    %v1672 = vld [vmem:[%s8 + $0x8] sm:$0xf]
    %v1673 = vld [vmem:[%s8 + $0xc] sm:$0xf]
    %v1674 = vld [vmem:[%s9] sm:$0xff]
    %v1675 = vld [vmem:[%s9 + $0x8] sm:$0xff]
    %v1676 = vld [vmem:[%s9 + $0x10] sm:$0xff]
    %v1677 = vld [vmem:[%s9 + $0x18] sm:$0xff]
    %1679 = vset.pattern.permute.xlu0 0
    %1680 = vperm.xlu0 %1679, %v1674
    %v1681 = vpop.permute.xlu0 %1680
    %1684 = vset.pattern.permute.xlu0 0
    %1685 = vperm.xlu0 %1684, %v1675
    %v1686 = vpop.permute.xlu0 %1685
    %1689 = vset.pattern.permute.xlu0 0
    %1690 = vperm.xlu0 %1689, %v1676
    %v1691 = vpop.permute.xlu0 %1690
    %1694 = vset.pattern.permute.xlu0 0
    %1695 = vperm.xlu0 %1694, %v1677
    %v1696 = vpop.permute.xlu0 %1695
    %v1702 = vunpack.c.l.b16 %v1670
    %v1703 = vunpack.c.l.b16 %v1671
    %v1704 = vunpack.c.l.b16 %v1672
    %v1705 = vunpack.c.l.b16 %v1673
    %v1706 = vpack.c.b16 %v1703, %v1702
    %v1707 = vpack.c.b16 %v1705, %v1704
    %v1709 = vsel %vm934, %v1706, 0
    %v1712 = vsel %vm934, %v1707, 0
    %1714 = vmatprep.subr.bf16.mxu0 0
    %1715 = vmatpush1.bf16.msra.mxu0 %v1668
    %1716 = vmatprep.subr.bf16.mxu0 0
    %1717 = vmatpush1.bf16.msra.mxu0 %v1669
    %1718 = vmatprep.subr.bf16.mxu0 0
    %1719 = vmatpush1.bf16.msra.mxu0 0
    %1720 = vmatprep.subr.bf16.mxu0 0
    %1721 = vmatpush1.bf16.msra.mxu0 0
    %1722 = vmatprep.subr.bf16.mxu0 0
    %1723 = vmatpush1.bf16.msra.mxu0 0
    %1724 = vmatprep.subr.bf16.mxu0 0
    %1725 = vmatpush1.bf16.msra.mxu0 0
    %1726 = vmatprep.subr.bf16.mxu0 0
    %1727 = vmatpush1.bf16.msra.mxu0 0
    %1728 = vmatprep.subr.bf16.mxu0 0
    %1729 = vmatpush1.bf16.msra.mxu0 0
    %1730 = vmatprep.subr.bf16.mxu0 0
    %1731 = vmatpush1.bf16.msra.mxu0 0
    %1732 = vmatprep.subr.bf16.mxu0 0
    %1733 = vmatpush1.bf16.msra.mxu0 0
    %1734 = vmatprep.subr.bf16.mxu0 0
    %1735 = vmatpush1.bf16.msra.mxu0 0
    %1736 = vmatprep.subr.bf16.mxu0 0
    %1737 = vmatpush1.bf16.msra.mxu0 0
    %1738 = vmatprep.subr.bf16.mxu0 0
    %1739 = vmatpush1.bf16.msra.mxu0 0
    %1740 = vmatprep.subr.bf16.mxu0 0
    %1741 = vmatpush1.bf16.msra.mxu0 0
    %1742 = vmatprep.subr.bf16.mxu0 0
    %1743 = vmatpush1.bf16.msra.mxu0 0
    %1744 = vmatprep.subr.bf16.mxu0 0
    %1745 = vmatpush1.bf16.msra.mxu0 0
    %1746 = vmatprep.mubr.bf16.mxu0 0
    %1747 = vmatmul.mubr.bf16.gmra.mrb[0].mxu0 %v1709
    %v1748 = vpop.f32.mrb[0].mxu0
    %v1749 = vadd.f32 %v1681, %v1748
    %v1750 = vpop.f32.mrb[0].mxu0
    %v1751 = vpop.f32.mrb[0].mxu0
    %v1752 = vadd.f32 %v1686, %v1751
    %v1753 = vpop.f32.mrb[0].mxu0
    %1754 = vmatprep.mubr.bf16.mxu0 0
    %1755 = vmatmul.mubr.bf16.gmra.mrb[0].mxu0 %v1712
    %v1756 = vpop.f32.mrb[0].mxu0
    %v1757 = vadd.f32 %v1691, %v1756
    %v1758 = vpop.f32.mrb[0].mxu0
    %v1759 = vpop.f32.mrb[0].mxu0
    %v1760 = vadd.f32 %v1696, %v1759
    %v1761 = vpop.f32.mrb[0].mxu0
    %1762 = vdwg.mxu0
    %v1763 = vld [vmem:[%s10] sm:$0xff]
    %v1764 = vld [vmem:[%s10 + $0x8] sm:$0xff]
    %v1765 = vld [vmem:[%s10 + $0x10] sm:$0xff]
    %v1766 = vld [vmem:[%s10 + $0x18] sm:$0xff]
    %v1767 = vmul.f32 %v1749, %v1763
    %v1768 = vmul.f32 %v1752, %v1764
    %v1769 = vmul.f32 %v1757, %v1765
    %v1770 = vmul.f32 %v1760, %v1766
    %v1771 = vld [vmem:[%s0] sm:$0xff]
    %v1772 = vld [vmem:[%s0 + $0x8] sm:$0xff]
    %v1773 = vld [vmem:[%s0 + $0x10] sm:$0xff]
    %v1774 = vld [vmem:[%s0 + $0x18] sm:$0xff]
    %v1775 = vadd.f32 %v1767, %v1771
    %v1776 = vadd.f32 %v1768, %v1772
    %v1777 = vadd.f32 %v1769, %v1773
    %v1778 = vadd.f32 %v1770, %v1774
    %1779 = vst [vmem:[%s11] sm:$0xff] %v1775
    %1780 = vst [vmem:[%s11 + $0x8] sm:$0xff] %v1776
    %1781 = vst [vmem:[%s11 + $0x10] sm:$0xff] %v1777
    %1782 = vst [vmem:[%s11 + $0x18] sm:$0xff] %v1778
    %v1783 = vsel %vm818, %v416, 0.0
    %v1784 = vsel %vm818, %v421, 0.0
    %v1785 = vadd.f32 %v1783, %v1784
    %v1786 = vsel %vm818, %v426, 0.0
    %v1787 = vadd.f32 %v1785, %v1786
    %v1788 = vsel %vm818, %v431, 0.0
    %v1789 = vadd.f32 %v1787, %v1788
    %v1790 = vrot.slane %v1789, 4
    %v1791 = vadd.f32 %v1789, %v1790
    %v1792 = vrot.slane %v1791, 2
    %v1793 = vadd.f32 %v1791, %v1792
    %v1794 = vrot.slane %v1793, 1
    %v1795 = vadd.f32 %v1793, %v1794
    %1796 = vxpose.xlu0.b32.start [1/16] %v1795, 128
    %1797 = vxpose.xlu0.b32.cont [2/16] 0.0, 128
    %1798 = vxpose.xlu0.b32.cont [3/16] 0.0, 128
    %1799 = vxpose.xlu0.b32.cont [4/16] 0.0, 128
    %1800 = vxpose.xlu0.b32.cont [5/16] 0.0, 128
    %1801 = vxpose.xlu0.b32.cont [6/16] 0.0, 128
    %1802 = vxpose.xlu0.b32.cont [7/16] 0.0, 128
    %1803 = vxpose.xlu0.b32.cont [8/16] 0.0, 128
    %1804 = vxpose.xlu0.b32.cont [9/16] 0.0, 128
    %1805 = vxpose.xlu0.b32.cont [10/16] 0.0, 128
    %1806 = vxpose.xlu0.b32.cont [11/16] 0.0, 128
    %1807 = vxpose.xlu0.b32.cont [12/16] 0.0, 128
    %1808 = vxpose.xlu0.b32.cont [13/16] 0.0, 128
    %1809 = vxpose.xlu0.b32.cont [14/16] 0.0, 128
    %1810 = vxpose.xlu0.b32.cont [15/16] 0.0, 128
    %1811 = vxpose.xlu0.b32.end [16/16] 0.0, 128
    %v1812 = vpop.trf.xlu0
    %v1813 = vpop.trf.xlu0
    %v1814 = vpop.trf.xlu0
    %v1815 = vpop.trf.xlu0
    %v1816 = vpop.trf.xlu0
    %v1817 = vpop.trf.xlu0
    %v1818 = vpop.trf.xlu0
    %v1819 = vpop.trf.xlu0
    %v1820 = vpop.trf.xlu0
    %v1821 = vpop.trf.xlu0
    %v1822 = vpop.trf.xlu0
    %v1823 = vpop.trf.xlu0
    %v1824 = vpop.trf.xlu0
    %v1825 = vpop.trf.xlu0
    %v1826 = vpop.trf.xlu0
    %v1827 = vpop.trf.xlu0
    %v1828 = vld [vmem:[%s3] sm:$0xff]
    %v1829 = vld [vmem:[%s3 + $0x8] sm:$0xff]
    %1831 = vset.pattern.permute.xlu0 0
    %1832 = vperm.xlu0 %1831, %v1812
    %v1833 = vpop.permute.xlu0 %1832
    %1836 = vset.pattern.permute.xlu0 0
    %1837 = vperm.xlu0 %1836, %v1813
    %v1838 = vpop.permute.xlu0 %1837
    %v1840 = vmul.f32 %v1833, %v1828
    %v1841 = vmul.f32 %v1838, %v1829
    %v1842 = vmax.f32 %v1840, 0.0
    %v1843 = vmax.f32 %v1841, 0.0
    %v1844 = vsel %vm818, %v1842, -inf
    %1845 = vmax.xlane.f32.xlu0 %v1844
    %v1846 = vpop.xlane.xlu0 %1845
    %v1847 = vsel %vm818, %v1843, -inf
    %1848 = vmax.xlane.f32.xlu0 %v1847
    %v1849 = vpop.xlane.xlu0 %1848
    %v1850 = vsub.f32 %v1842, %v1846
    %v1851 = vsub.f32 %v1843, %v1849
    %v1852 = vmul.f32 %v1850, 1.442695
    %v1853 = vpow.pop %v1852
    %v1854 = vmul.f32 %v1851, 1.442695
    %v1855 = vpow.pop %v1854
    %v1856 = vsel %vm818, %v1853, 0.0
    %1857 = vadd.xlane.f32.xlu0 %v1856
    %v1858 = vpop.xlane.xlu0 %1857
    %v1859 = vsel %vm818, %v1855, 0.0
    %1860 = vadd.xlane.f32.xlu0 %v1859
    %v1861 = vpop.xlane.xlu0 %1860
    %v1862 = vrcp.pop %v1858
    %v1863 = vmul.f32 %v1853, %v1862
    %v1864 = vrcp.pop %v1861
    %v1865 = vmul.f32 %v1855, %v1864
    %1866 = vxpose.xlu0.b32.start [1/16] %v521, 128
    %1867 = vxpose.xlu0.b32.cont [2/16] %v526, 128
    %1868 = vxpose.xlu0.b32.cont [3/16] %v531, 128
    %1869 = vxpose.xlu0.b32.cont [4/16] %v536, 128
    %1870 = vxpose.xlu0.b32.cont [5/16] 0.0, 128
    %1871 = vxpose.xlu0.b32.cont [6/16] 0.0, 128
    %1872 = vxpose.xlu0.b32.cont [7/16] 0.0, 128
    %1873 = vxpose.xlu0.b32.cont [8/16] 0.0, 128
    %1874 = vxpose.xlu0.b32.cont [9/16] 0.0, 128
    %1875 = vxpose.xlu0.b32.cont [10/16] 0.0, 128
    %1876 = vxpose.xlu0.b32.cont [11/16] 0.0, 128
    %1877 = vxpose.xlu0.b32.cont [12/16] 0.0, 128
    %1878 = vxpose.xlu0.b32.cont [13/16] 0.0, 128
    %1879 = vxpose.xlu0.b32.cont [14/16] 0.0, 128
    %1880 = vxpose.xlu0.b32.cont [15/16] 0.0, 128
    %1881 = vxpose.xlu0.b32.end [16/16] 0.0, 128
    %v1882 = vpop.trf.xlu0
    %v1883 = vpop.trf.xlu0
    %v1884 = vpop.trf.xlu0
    %v1885 = vpop.trf.xlu0
    %v1886 = vpop.trf.xlu0
    %v1887 = vpop.trf.xlu0
    %v1888 = vpop.trf.xlu0
    %v1889 = vpop.trf.xlu0
    %v1890 = vpop.trf.xlu0
    %v1891 = vpop.trf.xlu0
    %v1892 = vpop.trf.xlu0
    %v1893 = vpop.trf.xlu0
    %v1894 = vpop.trf.xlu0
    %v1895 = vpop.trf.xlu0
    %v1896 = vpop.trf.xlu0
    %v1897 = vpop.trf.xlu0
    %v1899 = vsel %vm934, %v1882, 0
    %v1902 = vsel %vm934, %v1883, 0
    %1904 = vmatprep.subr.mxu0 0.0
    %1905 = vmatpush1.msra.mxu0 %v521
    %1906 = vmatprep.subr.mxu0 0.0
    %1907 = vmatpush1.msra.mxu0 %v526
    %1908 = vmatprep.subr.mxu0 0.0
    %1909 = vmatpush1.msra.mxu0 %v531
    %1910 = vmatprep.subr.mxu0 0.0
    %1911 = vmatpush1.msra.mxu0 %v536
    %1912 = vmatprep.subr.mxu0 0.0
    %1913 = vmatpush1.msra.mxu0 0.0
    %1914 = vmatprep.subr.mxu0 0.0
    %1915 = vmatpush1.msra.mxu0 0.0
    %1916 = vmatprep.subr.mxu0 0.0
    %1917 = vmatpush1.msra.mxu0 0.0
    %1918 = vmatprep.subr.mxu0 0.0
    %1919 = vmatpush1.msra.mxu0 0.0
    %1920 = vmatprep.subr.mxu0 0.0
    %1921 = vmatpush1.msra.mxu0 0.0
    %1922 = vmatprep.subr.mxu0 0.0
    %1923 = vmatpush1.msra.mxu0 0.0
    %1924 = vmatprep.subr.mxu0 0.0
    %1925 = vmatpush1.msra.mxu0 0.0
    %1926 = vmatprep.subr.mxu0 0.0
    %1927 = vmatpush1.msra.mxu0 0.0
    %1928 = vmatprep.subr.mxu0 0.0
    %1929 = vmatpush1.msra.mxu0 0.0
    %1930 = vmatprep.subr.mxu0 0.0
    %1931 = vmatpush1.msra.mxu0 0.0
    %1932 = vmatprep.subr.mxu0 0.0
    %1933 = vmatpush1.msra.mxu0 0.0
    %1934 = vmatprep.subr.mxu0 0.0
    %1935 = vmatpush1.msra.mxu0 0.0
    %1936 = vmatprep.subr.mxu0 0.0
    %1937 = vmatpush1.msra.mxu0 0.0
    %1938 = vmatprep.subr.mxu0 0.0
    %1939 = vmatpush1.msra.mxu0 0.0
    %1940 = vmatprep.subr.mxu0 0.0
    %1941 = vmatpush1.msra.mxu0 0.0
    %1942 = vmatprep.subr.mxu0 0.0
    %1943 = vmatpush1.msra.mxu0 0.0
    %1944 = vmatprep.subr.mxu0 0.0
    %1945 = vmatpush1.msra.mxu0 0.0
    %1946 = vmatprep.subr.mxu0 0.0
    %1947 = vmatpush1.msra.mxu0 0.0
    %1948 = vmatprep.subr.mxu0 0.0
    %1949 = vmatpush1.msra.mxu0 0.0
    %1950 = vmatprep.subr.mxu0 0.0
    %1951 = vmatpush1.msra.mxu0 0.0
    %1952 = vmatprep.subr.mxu0 0.0
    %1953 = vmatpush1.msra.mxu0 0.0
    %1954 = vmatprep.subr.mxu0 0.0
    %1955 = vmatpush1.msra.mxu0 0.0
    %1956 = vmatprep.subr.mxu0 0.0
    %1957 = vmatpush1.msra.mxu0 0.0
    %1958 = vmatprep.subr.mxu0 0.0
    %1959 = vmatpush1.msra.mxu0 0.0
    %1960 = vmatprep.subr.mxu0 0.0
    %1961 = vmatpush1.msra.mxu0 0.0
    %1962 = vmatprep.subr.mxu0 0.0
    %1963 = vmatpush1.msra.mxu0 0.0
    %1964 = vmatprep.subr.mxu0 0.0
    %1965 = vmatpush1.msra.mxu0 0.0
    %1966 = vmatprep.subr.mxu0 0.0
    %1967 = vmatpush1.msra.mxu0 0.0
    %1968 = vmatprep.mubr.f32.mxu0 0.0
    %1969 = vmatmul.mubr.f32.gmra.mrb[0].mxu0 %v1899
    %v1970 = vpop.f32.mrb[0].mxu0
    %v1971 = vadd.f32 0.0, %v1970
    %v1972 = vpop.f32.mrb[0].mxu0
    %1973 = vmatprep.mubr.f32.mxu0 0.0
    %1974 = vmatmul.mubr.f32.gmra.mrb[0].mxu0 %v1902
    %v1975 = vpop.f32.mrb[0].mxu0
    %v1976 = vadd.f32 0.0, %v1975
    %v1977 = vpop.f32.mrb[0].mxu0
    %1978 = vdwg.mxu0
    %v1979 = vmul.f32 %v1971, 0.17677669
    %v1980 = vmul.f32 %v1976, 0.17677669
    %v1981 = vmax.f32 %v1979, 0.0
    %v1982 = vmax.f32 %v1980, 0.0
    %v1983 = vsel %vm818, %v1981, -inf
    %1984 = vmax.xlane.f32.xlu0 %v1983
    %v1985 = vpop.xlane.xlu0 %1984
    %v1986 = vsel %vm818, %v1982, -inf
    %1987 = vmax.xlane.f32.xlu0 %v1986
    %v1988 = vpop.xlane.xlu0 %1987
    %v1989 = vsub.f32 %v1981, %v1985
    %v1990 = vsub.f32 %v1982, %v1988
    %v1991 = vmul.f32 %v1989, 1.442695
    %v1992 = vpow.pop %v1991
    %v1993 = vmul.f32 %v1990, 1.442695
    %v1994 = vpow.pop %v1993
    %v1995 = vsel %vm818, %v1992, 0.0
    %1996 = vadd.xlane.f32.xlu0 %v1995
    %v1997 = vpop.xlane.xlu0 %1996
    %v1998 = vsel %vm818, %v1994, 0.0
    %1999 = vadd.xlane.f32.xlu0 %v1998
    %v2000 = vpop.xlane.xlu0 %1999
    %v2001 = vrcp.pop %v1997
    %v2002 = vmul.f32 %v1992, %v2001
    %v2003 = vrcp.pop %v2000
    %v2004 = vmul.f32 %v1994, %v2003
    %s2005 = sld [smem:[#allocation2]]
    %v2006 = vstv %s2005
    %v2007 = vmul.f32 %v2006, %v1863
    %v2008 = vmul.f32 %v2006, %v1865
    %s2009 = sld [smem:[#allocation2 + $0x1]]
    %v2010 = vstv %s2009
    %v2011 = vmul.f32 %v2010, %v2002
    %v2012 = vmul.f32 %v2010, %v2004
    %v2013 = vadd.f32 %v2007, %v2011
    %v2014 = vadd.f32 %v2008, %v2012
    %s2015 = sld [smem:[#allocation2 + $0x2]]
    %v2016 = vstv %s2015
    %v2017 = vadd.f32 %v2013, %v2016
    %v2018 = vadd.f32 %v2014, %v2016
    %v2019 = vsel %vm818, %v2017, -inf
    %2020 = vmax.xlane.f32.xlu0 %v2019
    %v2021 = vpop.xlane.xlu0 %2020
    %v2022 = vsel %vm818, %v2018, -inf
    %2023 = vmax.xlane.f32.xlu0 %v2022
    %v2024 = vpop.xlane.xlu0 %2023
    %v2025 = vsub.f32 %v2017, %v2021
    %v2026 = vsub.f32 %v2018, %v2024
    %v2027 = vmul.f32 %v2025, 1.442695
    %v2028 = vpow.pop %v2027
    %v2029 = vmul.f32 %v2026, 1.442695
    %v2030 = vpow.pop %v2029
    %v2031 = vsel %vm818, %v2028, 0.0
    %2032 = vadd.xlane.f32.xlu0 %v2031
    %v2033 = vpop.xlane.xlu0 %2032
    %v2034 = vsel %vm818, %v2030, 0.0
    %2035 = vadd.xlane.f32.xlu0 %v2034
    %v2036 = vpop.xlane.xlu0 %2035
    %v2037 = vrcp.pop %v2033
    %v2038 = vmul.f32 %v2028, %v2037
    %v2039 = vrcp.pop %v2036
    %v2040 = vmul.f32 %v2030, %v2039
    %2042 = vset.pattern.permute.xlu0 0
    %2043 = vperm.xlu0 %2042, %v2038
    %v2044 = vpop.permute.xlu0 %2043
    %2047 = vset.pattern.permute.xlu0 0
    %2048 = vperm.xlu0 %2047, %v2040
    %v2049 = vpop.permute.xlu0 %2048
    %vm2051 = vcmp.gt.f32.partialorder %v2044, %v2038
    %vm2052 = vcmp.gt.f32.partialorder %v2049, %v2040
    %v2053 = vsel %vm2051, 1, 0
    %v2054 = vsel %vm2052, 1, 0
    %v2055 = vcvt.s32.f32 %v2053
    %v2056 = vcvt.s32.f32 %v2054
    %2057 = vset.pattern.permute.xlu0 1
    %2058 = vperm.xlu0 %2057, %v2038
    %v2059 = vpop.permute.xlu0 %2058
    %2061 = vset.pattern.permute.xlu0 1
    %2062 = vperm.xlu0 %2061, %v2040
    %v2063 = vpop.permute.xlu0 %2062
    %vm2065 = vcmp.gt.f32.partialorder %v2059, %v2038
    %vm2066 = vcmp.gt.f32.partialorder %v2063, %v2040
    %v2067 = vsel %vm2065, 1, 0
    %v2068 = vsel %vm2066, 1, 0
    %v2069 = vcvt.s32.f32 %v2067
    %v2070 = vcvt.s32.f32 %v2068
    %v2071 = vadd.f32 %v2055, %v2069
    %v2072 = vadd.f32 %v2056, %v2070
    %2073 = vset.pattern.permute.xlu0 2
    %2074 = vperm.xlu0 %2073, %v2038
    %v2075 = vpop.permute.xlu0 %2074
    %2077 = vset.pattern.permute.xlu0 2
    %2078 = vperm.xlu0 %2077, %v2040
    %v2079 = vpop.permute.xlu0 %2078
    %vm2081 = vcmp.gt.f32.partialorder %v2075, %v2038
    %vm2082 = vcmp.gt.f32.partialorder %v2079, %v2040
    %v2083 = vsel %vm2081, 1, 0
    %v2084 = vsel %vm2082, 1, 0
    %v2085 = vcvt.s32.f32 %v2083
    %v2086 = vcvt.s32.f32 %v2084
    %v2087 = vadd.f32 %v2071, %v2085
    %v2088 = vadd.f32 %v2072, %v2086
    %2089 = vset.pattern.permute.xlu0 3
    %2090 = vperm.xlu0 %2089, %v2038
    %v2091 = vpop.permute.xlu0 %2090
    %2093 = vset.pattern.permute.xlu0 3
    %2094 = vperm.xlu0 %2093, %v2040
    %v2095 = vpop.permute.xlu0 %2094
    %vm2097 = vcmp.gt.f32.partialorder %v2091, %v2038
    %vm2098 = vcmp.gt.f32.partialorder %v2095, %v2040
    %v2099 = vsel %vm2097, 1, 0
    %v2100 = vsel %vm2098, 1, 0
    %v2101 = vcvt.s32.f32 %v2099
    %v2102 = vcvt.s32.f32 %v2100
    %v2103 = vadd.f32 %v2087, %v2101
    %v2104 = vadd.f32 %v2088, %v2102
    %2105 = vset.pattern.permute.xlu0 4
    %2106 = vperm.xlu0 %2105, %v2038
    %v2107 = vpop.permute.xlu0 %2106
    %2109 = vset.pattern.permute.xlu0 4
    %2110 = vperm.xlu0 %2109, %v2040
    %v2111 = vpop.permute.xlu0 %2110
    %vm2113 = vcmp.gt.f32.partialorder %v2107, %v2038
    %vm2114 = vcmp.gt.f32.partialorder %v2111, %v2040
    %v2115 = vsel %vm2113, 1, 0
    %v2116 = vsel %vm2114, 1, 0
    %v2117 = vcvt.s32.f32 %v2115
    %v2118 = vcvt.s32.f32 %v2116
    %2119 = vset.pattern.permute.xlu0 5
    %2120 = vperm.xlu0 %2119, %v2038
    %v2121 = vpop.permute.xlu0 %2120
    %2123 = vset.pattern.permute.xlu0 5
    %2124 = vperm.xlu0 %2123, %v2040
    %v2125 = vpop.permute.xlu0 %2124
    %vm2127 = vcmp.gt.f32.partialorder %v2121, %v2038
    %vm2128 = vcmp.gt.f32.partialorder %v2125, %v2040
    %v2129 = vsel %vm2127, 1, 0
    %v2130 = vsel %vm2128, 1, 0
    %v2131 = vcvt.s32.f32 %v2129
    %v2132 = vcvt.s32.f32 %v2130
    %v2133 = vadd.f32 %v2117, %v2131
    %v2134 = vadd.f32 %v2118, %v2132
    %2135 = vset.pattern.permute.xlu0 6
    %2136 = vperm.xlu0 %2135, %v2038
    %v2137 = vpop.permute.xlu0 %2136
    %2139 = vset.pattern.permute.xlu0 6
    %2140 = vperm.xlu0 %2139, %v2040
    %v2141 = vpop.permute.xlu0 %2140
    %vm2143 = vcmp.gt.f32.partialorder %v2137, %v2038
    %vm2144 = vcmp.gt.f32.partialorder %v2141, %v2040
    %v2145 = vsel %vm2143, 1, 0
    %v2146 = vsel %vm2144, 1, 0
    %v2147 = vcvt.s32.f32 %v2145
    %v2148 = vcvt.s32.f32 %v2146
    %v2149 = vadd.f32 %v2133, %v2147
    %v2150 = vadd.f32 %v2134, %v2148
    %2151 = vset.pattern.permute.xlu0 7
    %2152 = vperm.xlu0 %2151, %v2038
    %v2153 = vpop.permute.xlu0 %2152
    %2155 = vset.pattern.permute.xlu0 7
    %2156 = vperm.xlu0 %2155, %v2040
    %v2157 = vpop.permute.xlu0 %2156
    %vm2159 = vcmp.gt.f32.partialorder %v2153, %v2038
    %vm2160 = vcmp.gt.f32.partialorder %v2157, %v2040
    %v2161 = vsel %vm2159, 1, 0
    %v2162 = vsel %vm2160, 1, 0
    %v2163 = vcvt.s32.f32 %v2161
    %v2164 = vcvt.s32.f32 %v2162
    %v2165 = vadd.f32 %v2149, %v2163
    %v2166 = vadd.f32 %v2150, %v2164
    %2167 = vset.pattern.permute.xlu0 8
    %2168 = vperm.xlu0 %2167, %v2038
    %v2169 = vpop.permute.xlu0 %2168
    %2171 = vset.pattern.permute.xlu0 8
    %2172 = vperm.xlu0 %2171, %v2040
    %v2173 = vpop.permute.xlu0 %2172
    %vm2175 = vcmp.gt.f32.partialorder %v2169, %v2038
    %vm2176 = vcmp.gt.f32.partialorder %v2173, %v2040
    %v2177 = vsel %vm2175, 1, 0
    %v2178 = vsel %vm2176, 1, 0
    %v2179 = vcvt.s32.f32 %v2177
    %v2180 = vcvt.s32.f32 %v2178
    %2181 = vset.pattern.permute.xlu0 9
    %2182 = vperm.xlu0 %2181, %v2038
    %v2183 = vpop.permute.xlu0 %2182
    %2185 = vset.pattern.permute.xlu0 9
    %2186 = vperm.xlu0 %2185, %v2040
    %v2187 = vpop.permute.xlu0 %2186
    %vm2189 = vcmp.gt.f32.partialorder %v2183, %v2038
    %vm2190 = vcmp.gt.f32.partialorder %v2187, %v2040
    %v2191 = vsel %vm2189, 1, 0
    %v2192 = vsel %vm2190, 1, 0
    %v2193 = vcvt.s32.f32 %v2191
    %v2194 = vcvt.s32.f32 %v2192
    %v2195 = vadd.f32 %v2179, %v2193
    %v2196 = vadd.f32 %v2180, %v2194
    %2197 = vset.pattern.permute.xlu0 10
    %2198 = vperm.xlu0 %2197, %v2038
    %v2199 = vpop.permute.xlu0 %2198
    %2201 = vset.pattern.permute.xlu0 10
    %2202 = vperm.xlu0 %2201, %v2040
    %v2203 = vpop.permute.xlu0 %2202
    %vm2205 = vcmp.gt.f32.partialorder %v2199, %v2038
    %vm2206 = vcmp.gt.f32.partialorder %v2203, %v2040
    %v2207 = vsel %vm2205, 1, 0
    %v2208 = vsel %vm2206, 1, 0
    %v2209 = vcvt.s32.f32 %v2207
    %v2210 = vcvt.s32.f32 %v2208
    %v2211 = vadd.f32 %v2195, %v2209
    %v2212 = vadd.f32 %v2196, %v2210
    %2213 = vset.pattern.permute.xlu0 11
    %2214 = vperm.xlu0 %2213, %v2038
    %v2215 = vpop.permute.xlu0 %2214
    %2217 = vset.pattern.permute.xlu0 11
    %2218 = vperm.xlu0 %2217, %v2040
    %v2219 = vpop.permute.xlu0 %2218
    %vm2221 = vcmp.gt.f32.partialorder %v2215, %v2038
    %vm2222 = vcmp.gt.f32.partialorder %v2219, %v2040
    %v2223 = vsel %vm2221, 1, 0
    %v2224 = vsel %vm2222, 1, 0
    %v2225 = vcvt.s32.f32 %v2223
    %v2226 = vcvt.s32.f32 %v2224
    %v2227 = vadd.f32 %v2211, %v2225
    %v2228 = vadd.f32 %v2212, %v2226
    %2229 = vset.pattern.permute.xlu0 12
    %2230 = vperm.xlu0 %2229, %v2038
    %v2231 = vpop.permute.xlu0 %2230
    %2233 = vset.pattern.permute.xlu0 12
    %2234 = vperm.xlu0 %2233, %v2040
    %v2235 = vpop.permute.xlu0 %2234
    %vm2237 = vcmp.gt.f32.partialorder %v2231, %v2038
    %vm2238 = vcmp.gt.f32.partialorder %v2235, %v2040
    %v2239 = vsel %vm2237, 1, 0
    %v2240 = vsel %vm2238, 1, 0
    %v2241 = vcvt.s32.f32 %v2239
    %v2242 = vcvt.s32.f32 %v2240
    %2243 = vset.pattern.permute.xlu0 13
    %2244 = vperm.xlu0 %2243, %v2038
    %v2245 = vpop.permute.xlu0 %2244
    %2247 = vset.pattern.permute.xlu0 13
    %2248 = vperm.xlu0 %2247, %v2040
    %v2249 = vpop.permute.xlu0 %2248
    %vm2251 = vcmp.gt.f32.partialorder %v2245, %v2038
    %vm2252 = vcmp.gt.f32.partialorder %v2249, %v2040
    %v2253 = vsel %vm2251, 1, 0
    %v2254 = vsel %vm2252, 1, 0
    %v2255 = vcvt.s32.f32 %v2253
    %v2256 = vcvt.s32.f32 %v2254
    %v2257 = vadd.f32 %v2241, %v2255
    %v2258 = vadd.f32 %v2242, %v2256
    %2259 = vset.pattern.permute.xlu0 14
    %2260 = vperm.xlu0 %2259, %v2038
    %v2261 = vpop.permute.xlu0 %2260
    %2263 = vset.pattern.permute.xlu0 14
    %2264 = vperm.xlu0 %2263, %v2040
    %v2265 = vpop.permute.xlu0 %2264
    %vm2267 = vcmp.gt.f32.partialorder %v2261, %v2038
    %vm2268 = vcmp.gt.f32.partialorder %v2265, %v2040
    %v2269 = vsel %vm2267, 1, 0
    %v2270 = vsel %vm2268, 1, 0
    %v2271 = vcvt.s32.f32 %v2269
    %v2272 = vcvt.s32.f32 %v2270
    %v2273 = vadd.f32 %v2257, %v2271
    %v2274 = vadd.f32 %v2258, %v2272
    %2275 = vset.pattern.permute.xlu0 15
    %2276 = vperm.xlu0 %2275, %v2038
    %v2277 = vpop.permute.xlu0 %2276
    %2279 = vset.pattern.permute.xlu0 15
    %2280 = vperm.xlu0 %2279, %v2040
    %v2281 = vpop.permute.xlu0 %2280
    %vm2283 = vcmp.gt.f32.partialorder %v2277, %v2038
    %vm2284 = vcmp.gt.f32.partialorder %v2281, %v2040
    %v2285 = vsel %vm2283, 1, 0
    %v2286 = vsel %vm2284, 1, 0
    %v2287 = vcvt.s32.f32 %v2285
    %v2288 = vcvt.s32.f32 %v2286
    %v2289 = vadd.f32 %v2273, %v2287
    %v2290 = vadd.f32 %v2274, %v2288
    %v2291 = vadd.f32 %v2103, %v2165
    %v2292 = vadd.f32 %v2104, %v2166
    %v2293 = vadd.f32 %v2227, %v2289
    %v2294 = vadd.f32 %v2228, %v2290
    %v2295 = vadd.f32 %v2291, %v2293
    %v2296 = vadd.f32 %v2292, %v2294
    %vm2297 = vcmp.lt.f32.partialorder %v2295, 12.0
    %vm2298 = vcmp.lt.f32.partialorder %v2296, 12.0
    %v2299 = vsel %vm2297, %v2038, 0.0
    %v2300 = vsel %vm2298, %v2040, 0.0
    %v2301 = vld [vmem:[%s6] sm:$0xff]
    %v2302 = vld [vmem:[%s6 + $0x8] sm:$0xff]
    %v2304 = vsel %vm818, %v2299, 0
    %v2307 = vsel %vm818, %v2300, 0
    %2309 = vmatprep.subr.mxu0 0.0
    %2310 = vmatpush1.msra.mxu0 %v2301
    %2311 = vmatprep.subr.mxu0 0.0
    %2312 = vmatpush1.msra.mxu0 %v2302
    %2313 = vmatprep.subr.mxu0 0.0
    %2314 = vmatpush1.msra.mxu0 0.0
    %2315 = vmatprep.subr.mxu0 0.0
    %2316 = vmatpush1.msra.mxu0 0.0
    %2317 = vmatprep.subr.mxu0 0.0
    %2318 = vmatpush1.msra.mxu0 0.0
    %2319 = vmatprep.subr.mxu0 0.0
    %2320 = vmatpush1.msra.mxu0 0.0
    %2321 = vmatprep.subr.mxu0 0.0
    %2322 = vmatpush1.msra.mxu0 0.0
    %2323 = vmatprep.subr.mxu0 0.0
    %2324 = vmatpush1.msra.mxu0 0.0
    %2325 = vmatprep.subr.mxu0 0.0
    %2326 = vmatpush1.msra.mxu0 0.0
    %2327 = vmatprep.subr.mxu0 0.0
    %2328 = vmatpush1.msra.mxu0 0.0
    %2329 = vmatprep.subr.mxu0 0.0
    %2330 = vmatpush1.msra.mxu0 0.0
    %2331 = vmatprep.subr.mxu0 0.0
    %2332 = vmatpush1.msra.mxu0 0.0
    %2333 = vmatprep.subr.mxu0 0.0
    %2334 = vmatpush1.msra.mxu0 0.0
    %2335 = vmatprep.subr.mxu0 0.0
    %2336 = vmatpush1.msra.mxu0 0.0
    %2337 = vmatprep.subr.mxu0 0.0
    %2338 = vmatpush1.msra.mxu0 0.0
    %2339 = vmatprep.subr.mxu0 0.0
    %2340 = vmatpush1.msra.mxu0 0.0
    %2341 = vmatprep.subr.mxu0 0.0
    %2342 = vmatpush1.msra.mxu0 0.0
    %2343 = vmatprep.subr.mxu0 0.0
    %2344 = vmatpush1.msra.mxu0 0.0
    %2345 = vmatprep.subr.mxu0 0.0
    %2346 = vmatpush1.msra.mxu0 0.0
    %2347 = vmatprep.subr.mxu0 0.0
    %2348 = vmatpush1.msra.mxu0 0.0
    %2349 = vmatprep.subr.mxu0 0.0
    %2350 = vmatpush1.msra.mxu0 0.0
    %2351 = vmatprep.subr.mxu0 0.0
    %2352 = vmatpush1.msra.mxu0 0.0
    %2353 = vmatprep.subr.mxu0 0.0
    %2354 = vmatpush1.msra.mxu0 0.0
    %2355 = vmatprep.subr.mxu0 0.0
    %2356 = vmatpush1.msra.mxu0 0.0
    %2357 = vmatprep.subr.mxu0 0.0
    %2358 = vmatpush1.msra.mxu0 0.0
    %2359 = vmatprep.subr.mxu0 0.0
    %2360 = vmatpush1.msra.mxu0 0.0
    %2361 = vmatprep.subr.mxu0 0.0
    %2362 = vmatpush1.msra.mxu0 0.0
    %2363 = vmatprep.subr.mxu0 0.0
    %2364 = vmatpush1.msra.mxu0 0.0
    %2365 = vmatprep.subr.mxu0 0.0
    %2366 = vmatpush1.msra.mxu0 0.0
    %2367 = vmatprep.subr.mxu0 0.0
    %2368 = vmatpush1.msra.mxu0 0.0
    %2369 = vmatprep.subr.mxu0 0.0
    %2370 = vmatpush1.msra.mxu0 0.0
    %2371 = vmatprep.subr.mxu0 0.0
    %2372 = vmatpush1.msra.mxu0 0.0
    %2373 = vmatprep.mubr.f32.mxu0 0.0
    %2374 = vmatmul.mubr.f32.gmra.mrb[0].mxu0 %v2304
    %v2375 = vpop.f32.mrb[0].mxu0
    %v2376 = vadd.f32 0.0, %v2375
    %v2377 = vpop.f32.mrb[0].mxu0
    %2378 = vmatprep.mubr.f32.mxu0 0.0
    %2379 = vmatmul.mubr.f32.gmra.mrb[0].mxu0 %v2307
    %v2380 = vpop.f32.mrb[0].mxu0
    %v2381 = vadd.f32 0.0, %v2380
    %v2382 = vpop.f32.mrb[0].mxu0
    %2383 = vdwg.mxu0
    %v2386 = vcombine.high %v2376, %v2376
    %v2388 = vunpack.c.l.s4 1966171168
    %v2389 = vunpack.c.0.s8 %v2388
    %v2390 = vlaneseq
    %v2391 = vshrl.u32 %v2390, 7
    %v2392 = vsub.s32 %v2389, %v2391
    %v2393 = vrot.slane %v2376, %v2392
    %v2395 = vunpack.c.l.s4 1966171168
    %v2396 = vunpack.c.0.s8 %v2395
    %v2397 = vlaneseq
    %v2398 = vshrl.u32 %v2397, 7
    %v2399 = vsub.s32 %v2396, %v2398
    %v2400 = vrot.slane %v2386, %v2399
    %v2401 = vcombine.high %v2393, %v2393
    %v2402 = vcombine.high %v2400, %v2400
    %v2404 = vunpack.c.l.s4 1966171168
    %v2405 = vunpack.c.0.s8 %v2404
    %v2406 = vlaneseq
    %v2407 = vshrl.u32 %v2406, 7
    %v2408 = vsub.s32 %v2405, %v2407
    %v2409 = vrot.slane %v2393, %v2408
    %v2411 = vunpack.c.l.s4 1966171168
    %v2412 = vunpack.c.0.s8 %v2411
    %v2413 = vlaneseq
    %v2414 = vshrl.u32 %v2413, 7
    %v2415 = vsub.s32 %v2412, %v2414
    %v2416 = vrot.slane %v2400, %v2415
    %v2418 = vunpack.c.l.s4 1966171168
    %v2419 = vunpack.c.0.s8 %v2418
    %v2420 = vlaneseq
    %v2421 = vshrl.u32 %v2420, 7
    %v2422 = vsub.s32 %v2419, %v2421
    %v2423 = vrot.slane %v2401, %v2422
    %v2425 = vunpack.c.l.s4 1966171168
    %v2426 = vunpack.c.0.s8 %v2425
    %v2427 = vlaneseq
    %v2428 = vshrl.u32 %v2427, 7
    %v2429 = vsub.s32 %v2426, %v2428
    %v2430 = vrot.slane %v2402, %v2429
    %v2431 = vcombine.high %v2409, %v2409
    %v2432 = vcombine.high %v2416, %v2416
    %v2433 = vcombine.high %v2423, %v2423
    %v2434 = vcombine.high %v2430, %v2430
    %v2435 = vcombine.high %v2381, %v2381
    %v2437 = vunpack.c.l.s4 1966171168
    %v2438 = vunpack.c.0.s8 %v2437
    %v2439 = vlaneseq
    %v2440 = vshrl.u32 %v2439, 7
    %v2441 = vsub.s32 %v2438, %v2440
    %v2442 = vrot.slane %v2381, %v2441
    %v2444 = vunpack.c.l.s4 1966171168
    %v2445 = vunpack.c.0.s8 %v2444
    %v2446 = vlaneseq
    %v2447 = vshrl.u32 %v2446, 7
    %v2448 = vsub.s32 %v2445, %v2447
    %v2449 = vrot.slane %v2435, %v2448
    %v2450 = vcombine.high %v2442, %v2442
    %v2451 = vcombine.high %v2449, %v2449
    %v2453 = vunpack.c.l.s4 1966171168
    %v2454 = vunpack.c.0.s8 %v2453
    %v2455 = vlaneseq
    %v2456 = vshrl.u32 %v2455, 7
    %v2457 = vsub.s32 %v2454, %v2456
    %v2458 = vrot.slane %v2442, %v2457
    %v2460 = vunpack.c.l.s4 1966171168
    %v2461 = vunpack.c.0.s8 %v2460
    %v2462 = vlaneseq
    %v2463 = vshrl.u32 %v2462, 7
    %v2464 = vsub.s32 %v2461, %v2463
    %v2465 = vrot.slane %v2449, %v2464
    %v2467 = vunpack.c.l.s4 1966171168
    %v2468 = vunpack.c.0.s8 %v2467
    %v2469 = vlaneseq
    %v2470 = vshrl.u32 %v2469, 7
    %v2471 = vsub.s32 %v2468, %v2470
    %v2472 = vrot.slane %v2450, %v2471
    %v2474 = vunpack.c.l.s4 1966171168
    %v2475 = vunpack.c.0.s8 %v2474
    %v2476 = vlaneseq
    %v2477 = vshrl.u32 %v2476, 7
    %v2478 = vsub.s32 %v2475, %v2477
    %v2479 = vrot.slane %v2451, %v2478
    %v2480 = vcombine.high %v2458, %v2458
    %v2481 = vcombine.high %v2465, %v2465
    %v2482 = vcombine.high %v2472, %v2472
    %v2483 = vcombine.high %v2479, %v2479
    %v2484 = vlaneseq
    %v2485 = vshrl.u32 %v2484, 7
    %v2486 = vsub.s32 0, %v2485
    %v2487 = vrot.slane %v2409, %v2486
    %v2488 = vlaneseq
    %v2489 = vshrl.u32 %v2488, 7
    %v2490 = vsub.s32 0, %v2489
    %v2491 = vrot.slane %v2423, %v2490
    %v2492 = vlaneseq
    %v2493 = vshrl.u32 %v2492, 7
    %v2494 = vsub.s32 0, %v2493
    %v2495 = vrot.slane %v2431, %v2494
    %v2496 = vlaneseq
    %v2497 = vshrl.u32 %v2496, 7
    %v2498 = vsub.s32 0, %v2497
    %v2499 = vrot.slane %v2433, %v2498
    %v2500 = vlaneseq
    %v2501 = vshrl.u32 %v2500, 7
    %v2502 = vsub.s32 0, %v2501
    %v2503 = vrot.slane %v2416, %v2502
    %v2504 = vlaneseq
    %v2505 = vshrl.u32 %v2504, 7
    %v2506 = vsub.s32 0, %v2505
    %v2507 = vrot.slane %v2430, %v2506
    %v2508 = vlaneseq
    %v2509 = vshrl.u32 %v2508, 7
    %v2510 = vsub.s32 0, %v2509
    %v2511 = vrot.slane %v2432, %v2510
    %v2512 = vlaneseq
    %v2513 = vshrl.u32 %v2512, 7
    %v2514 = vsub.s32 0, %v2513
    %v2515 = vrot.slane %v2434, %v2514
    %v2516 = vlaneseq
    %v2517 = vshrl.u32 %v2516, 7
    %v2518 = vsub.s32 0, %v2517
    %v2519 = vrot.slane %v2458, %v2518
    %v2520 = vlaneseq
    %v2521 = vshrl.u32 %v2520, 7
    %v2522 = vsub.s32 0, %v2521
    %v2523 = vrot.slane %v2472, %v2522
    %v2524 = vlaneseq
    %v2525 = vshrl.u32 %v2524, 7
    %v2526 = vsub.s32 0, %v2525
    %v2527 = vrot.slane %v2480, %v2526
    %v2528 = vlaneseq
    %v2529 = vshrl.u32 %v2528, 7
    %v2530 = vsub.s32 0, %v2529
    %v2531 = vrot.slane %v2482, %v2530
    %v2532 = vlaneseq
    %v2533 = vshrl.u32 %v2532, 7
    %v2534 = vsub.s32 0, %v2533
    %v2535 = vrot.slane %v2465, %v2534
    %v2536 = vlaneseq
    %v2537 = vshrl.u32 %v2536, 7
    %v2538 = vsub.s32 0, %v2537
    %v2539 = vrot.slane %v2479, %v2538
    %v2540 = vlaneseq
    %v2541 = vshrl.u32 %v2540, 7
    %v2542 = vsub.s32 0, %v2541
    %v2543 = vrot.slane %v2481, %v2542
    %v2544 = vlaneseq
    %v2545 = vshrl.u32 %v2544, 7
    %v2546 = vsub.s32 0, %v2545
    %v2547 = vrot.slane %v2483, %v2546
    %v2564 = vpack.c.bf16 %v2491, %v2487
    %v2565 = vpack.c.bf16 %v2499, %v2495
    %v2566 = vpack.c.bf16 %v2507, %v2503
    %v2567 = vpack.c.bf16 %v2515, %v2511
    %v2568 = vpack.c.bf16 %v2523, %v2519
    %v2569 = vpack.c.bf16 %v2531, %v2527
    %v2570 = vpack.c.bf16 %v2539, %v2535
    %v2571 = vpack.c.bf16 %v2547, %v2543
    %v2572 = vmul.bf16 %v2564, %v810
    %v2573 = vmul.bf16 %v2565, %v811
    %v2574 = vmul.bf16 %v2566, %v812
    %v2575 = vmul.bf16 %v2567, %v813
    %v2576 = vmul.bf16 %v2568, %v814
    %v2577 = vmul.bf16 %v2569, %v815
    %v2578 = vmul.bf16 %v2570, %v816
    %v2579 = vmul.bf16 %v2571, %v817
    %v2580 = vpack.c.bf16 %v207, %v204
    %v2581 = vpack.c.bf16 %v215, %v212
    %2582 = vmatprep.subr.bf16.mxu0 0
    %2583 = vmatpush1.bf16.msra.mxu0 %v2572
    %2584 = vmatprep.subr.bf16.mxu0 0
    %2585 = vmatpush1.bf16.msra.mxu0 %v2573
    %2586 = vmatprep.subr.bf16.mxu0 0
    %2587 = vmatpush1.bf16.msra.mxu0 %v2574
    %2588 = vmatprep.subr.bf16.mxu0 0
    %2589 = vmatpush1.bf16.msra.mxu0 %v2575
    %2590 = vmatprep.subr.bf16.mxu0 0
    %2591 = vmatpush1.bf16.msra.mxu0 %v2576
    %2592 = vmatprep.subr.bf16.mxu0 0
    %2593 = vmatpush1.bf16.msra.mxu0 %v2577
    %2594 = vmatprep.subr.bf16.mxu0 0
    %2595 = vmatpush1.bf16.msra.mxu0 %v2578
    %2596 = vmatprep.subr.bf16.mxu0 0
    %2597 = vmatpush1.bf16.msra.mxu0 %v2579
    %2598 = vmatprep.subr.bf16.mxu0 0
    %2599 = vmatpush1.bf16.msra.mxu0 0
    %2600 = vmatprep.subr.bf16.mxu0 0
    %2601 = vmatpush1.bf16.msra.mxu0 0
    %2602 = vmatprep.subr.bf16.mxu0 0
    %2603 = vmatpush1.bf16.msra.mxu0 0
    %2604 = vmatprep.subr.bf16.mxu0 0
    %2605 = vmatpush1.bf16.msra.mxu0 0
    %2606 = vmatprep.subr.bf16.mxu0 0
    %2607 = vmatpush1.bf16.msra.mxu0 0
    %2608 = vmatprep.subr.bf16.mxu0 0
    %2609 = vmatpush1.bf16.msra.mxu0 0
    %2610 = vmatprep.subr.bf16.mxu0 0
    %2611 = vmatpush1.bf16.msra.mxu0 0
    %2612 = vmatprep.subr.bf16.mxu0 0
    %2613 = vmatpush1.bf16.msra.mxu0 0
    %2614 = vmatprep.mubr.bf16.mxu0 0
    %2615 = vmatmul.mubr.bf16.gmra.mrb[0].mxu0 %v2580
    %v2616 = vpop.f32.mrb[0].mxu0
    %v2617 = vadd.f32 0.0, %v2616
    %v2618 = vpop.f32.mrb[0].mxu0
    %v2619 = vpop.f32.mrb[0].mxu0
    %v2620 = vadd.f32 0.0, %v2619
    %v2621 = vpop.f32.mrb[0].mxu0
    %2622 = vmatprep.mubr.bf16.mxu0 0
    %2623 = vmatmul.mubr.bf16.gmra.mrb[0].mxu0 %v2581
    %v2624 = vpop.f32.mrb[0].mxu0
    %v2625 = vadd.f32 0.0, %v2624
    %v2626 = vpop.f32.mrb[0].mxu0
    %v2627 = vpop.f32.mrb[0].mxu0
    %v2628 = vadd.f32 0.0, %v2627
    %v2629 = vpop.f32.mrb[0].mxu0
    %2630 = vdwg.mxu0
    %v2631 = vpack.c.bf16 %v2620, %v2617
    %v2632 = vpack.c.bf16 %v2628, %v2625
    %v2633 = vld [vmem:[%s8] sm:$0xf]
    %v2634 = vld [vmem:[%s8 + $0x4] sm:$0xf]
    %v2635 = vld [vmem:[%s8 + $0x8] sm:$0xf]
    %v2636 = vld [vmem:[%s8 + $0xc] sm:$0xf]
    %v2637 = vld [vmem:[%s9] sm:$0xff]
    %v2638 = vld [vmem:[%s9 + $0x8] sm:$0xff]
    %v2639 = vld [vmem:[%s9 + $0x10] sm:$0xff]
    %v2640 = vld [vmem:[%s9 + $0x18] sm:$0xff]
    %2642 = vset.pattern.permute.xlu0 0
    %2643 = vperm.xlu0 %2642, %v2637
    %v2644 = vpop.permute.xlu0 %2643
    %2647 = vset.pattern.permute.xlu0 0
    %2648 = vperm.xlu0 %2647, %v2638
    %v2649 = vpop.permute.xlu0 %2648
    %2652 = vset.pattern.permute.xlu0 0
    %2653 = vperm.xlu0 %2652, %v2639
    %v2654 = vpop.permute.xlu0 %2653
    %2657 = vset.pattern.permute.xlu0 0
    %2658 = vperm.xlu0 %2657, %v2640
    %v2659 = vpop.permute.xlu0 %2658
    %v2665 = vunpack.c.l.b16 %v2633
    %v2666 = vunpack.c.l.b16 %v2634
    %v2667 = vunpack.c.l.b16 %v2635
    %v2668 = vunpack.c.l.b16 %v2636
    %v2669 = vpack.c.b16 %v2666, %v2665
    %v2670 = vpack.c.b16 %v2668, %v2667
    %v2672 = vsel %vm934, %v2669, 0
    %v2675 = vsel %vm934, %v2670, 0
    %2677 = vmatprep.subr.bf16.mxu0 0
    %2678 = vmatpush1.bf16.msra.mxu0 %v2631
    %2679 = vmatprep.subr.bf16.mxu0 0
    %2680 = vmatpush1.bf16.msra.mxu0 %v2632
    %2681 = vmatprep.subr.bf16.mxu0 0
    %2682 = vmatpush1.bf16.msra.mxu0 0
    %2683 = vmatprep.subr.bf16.mxu0 0
    %2684 = vmatpush1.bf16.msra.mxu0 0
    %2685 = vmatprep.subr.bf16.mxu0 0
    %2686 = vmatpush1.bf16.msra.mxu0 0
    %2687 = vmatprep.subr.bf16.mxu0 0
    %2688 = vmatpush1.bf16.msra.mxu0 0
    %2689 = vmatprep.subr.bf16.mxu0 0
    %2690 = vmatpush1.bf16.msra.mxu0 0
    %2691 = vmatprep.subr.bf16.mxu0 0
    %2692 = vmatpush1.bf16.msra.mxu0 0
    %2693 = vmatprep.subr.bf16.mxu0 0
    %2694 = vmatpush1.bf16.msra.mxu0 0
    %2695 = vmatprep.subr.bf16.mxu0 0
    %2696 = vmatpush1.bf16.msra.mxu0 0
    %2697 = vmatprep.subr.bf16.mxu0 0
    %2698 = vmatpush1.bf16.msra.mxu0 0
    %2699 = vmatprep.subr.bf16.mxu0 0
    %2700 = vmatpush1.bf16.msra.mxu0 0
    %2701 = vmatprep.subr.bf16.mxu0 0
    %2702 = vmatpush1.bf16.msra.mxu0 0
    %2703 = vmatprep.subr.bf16.mxu0 0
    %2704 = vmatpush1.bf16.msra.mxu0 0
    %2705 = vmatprep.subr.bf16.mxu0 0
    %2706 = vmatpush1.bf16.msra.mxu0 0
    %2707 = vmatprep.subr.bf16.mxu0 0
    %2708 = vmatpush1.bf16.msra.mxu0 0
    %2709 = vmatprep.mubr.bf16.mxu0 0
    %2710 = vmatmul.mubr.bf16.gmra.mrb[0].mxu0 %v2672
    %v2711 = vpop.f32.mrb[0].mxu0
    %v2712 = vadd.f32 %v2644, %v2711
    %v2713 = vpop.f32.mrb[0].mxu0
    %v2714 = vpop.f32.mrb[0].mxu0
    %v2715 = vadd.f32 %v2649, %v2714
    %v2716 = vpop.f32.mrb[0].mxu0
    %2717 = vmatprep.mubr.bf16.mxu0 0
    %2718 = vmatmul.mubr.bf16.gmra.mrb[0].mxu0 %v2675
    %v2719 = vpop.f32.mrb[0].mxu0
    %v2720 = vadd.f32 %v2654, %v2719
    %v2721 = vpop.f32.mrb[0].mxu0
    %v2722 = vpop.f32.mrb[0].mxu0
    %v2723 = vadd.f32 %v2659, %v2722
    %v2724 = vpop.f32.mrb[0].mxu0
    %2725 = vdwg.mxu0
    %v2726 = vld [vmem:[%s10] sm:$0xff]
    %v2727 = vld [vmem:[%s10 + $0x8] sm:$0xff]
    %v2728 = vld [vmem:[%s10 + $0x10] sm:$0xff]
    %v2729 = vld [vmem:[%s10 + $0x18] sm:$0xff]
    %v2730 = vmul.f32 %v2712, %v2726
    %v2731 = vmul.f32 %v2715, %v2727
    %v2732 = vmul.f32 %v2720, %v2728
    %v2733 = vmul.f32 %v2723, %v2729
    %v2734 = vld [vmem:[%s0 + $0x20] sm:$0xff]
    %v2735 = vld [vmem:[%s0 + $0x28] sm:$0xff]
    %v2736 = vld [vmem:[%s0 + $0x30] sm:$0xff]
    %v2737 = vld [vmem:[%s0 + $0x38] sm:$0xff]
    %v2738 = vadd.f32 %v2730, %v2734
    %v2739 = vadd.f32 %v2731, %v2735
    %v2740 = vadd.f32 %v2732, %v2736
    %v2741 = vadd.f32 %v2733, %v2737
    %2742 = vst [vmem:[%s11 + $0x20] sm:$0xff] %v2738
    %2743 = vst [vmem:[%s11 + $0x28] sm:$0xff] %v2739
    %2744 = vst [vmem:[%s11 + $0x30] sm:$0xff] %v2740
    %2745 = vst [vmem:[%s11 + $0x38] sm:$0xff] %v2741
    // Predicated region
    $region50: #{dggc_forward.1} parent=1 // pred_check
      _
    $region51: #{dggc_forward.1} parent=1 // pred_check_branch
      %2747 = sbr.rel (0) target = $region53
    $region52: #{dggc_forward.1} parent=1 // pred_region
      _
    $region53: #{dggc_forward.1} parent=1 // pred_fallthru
      _
    // Predicated region
    $region54: #{dggc_forward.1} parent=1 // pred_check
      _
    $region55: #{dggc_forward.1} parent=1 // pred_check_branch
      %2749 = sbr.rel (0) target = $region57
    $region56: #{dggc_forward.1} parent=1 // pred_region
      _
    $region57: #{dggc_forward.1} parent=1 // pred_fallthru
      _
    %2750 = vsyncpa [#allocation3], 1

</llo_original>
